<compile_context>
chip_gen: v7x
topology: tpu7x:2x2x1
jax: 0.10.0
libtpu: 0.0.40
codegen_flags: <defaults>
</compile_context>

<pallas_src>
import jax
import jax.numpy as jnp
from jax import lax
from jax.experimental import pallas as pl
from jax.experimental.pallas import tpu as pltpu

INPUT_DIM = 256        # BERT hidden size feeding the GRU (nn.GRU(256, 50))
HIDDEN = 50            # GRU hidden size per direction
NUM_CLASSES = 3        # Linear(100, 3)
HID_PAD = 128          # per-gate lane-aligned padded hidden size
OUT_PAD = 128          # lane-dense output width (real classes in cols 0:3)
G = 3 * HID_PAD        # 384 lanes per direction (gate order [r | z | n])


def make_bigru_head_kernel(S, B):
    """S: sequence length (grid size).  B: padded batch (multiple of 16)."""
    HP = HID_PAD

    def kernel(x_ref, wih_ref, bi_ref, whh_ref, bhn_ref, wfc_ref, bfc_ref,
               out_ref, gi_ref):
        """x_ref:  (B, 256) f32     timestep t of the time-major input (streamed).
           wih_ref:(256, 768) bf16  [fwd r|z|n | bwd r|z|n], HIDDEN real lanes/gate.
           bi_ref: (1, 768)  f32    b_ih (all gates) + b_hh (r,z gates), zero-padded.
           whh_ref:(256, 768) bf16  block-diag: rows 0:128 -> fwd cols 0:384,
                                                rows 128:256 -> bwd cols 384:768.
           bhn_ref:(1, 256)  f32    [b_hn fwd | b_hn bwd] (n-gate hidden bias).
           wfc_ref:(256, 128) bf16  rows 0:50 = W_fc.T[:50], rows 128:178 = W_fc.T[50:].
           bfc_ref:(1, 128)  f32
           out_ref:(B, 128)  f32    logits in cols 0:3.
           gi_ref: (S*B, 768) bf16  VMEM scratch, persists across grid steps."""
        t = pl.program_id(0)

        # ---- Phase 1 (every grid step, overlapped with the next x-block DMA) ----
        gi_t = jnp.dot(x_ref[...].astype(jnp.bfloat16), wih_ref[...],
                       preferred_element_type=jnp.float32) + bi_ref[...]
        gi_ref[pl.ds(pl.multiple_of(t * B, B), B), :] = gi_t.astype(jnp.bfloat16)

        # ---- Phase 2 + 3 (last grid step): serial recurrence + Linear head ----
        @pl.when(t == S - 1)
        def _():
            whh = whh_ref[...]
            bhn_f = bhn_ref[:, 0:HP]          # (1, 128); broadcasts free in the add
            bhn_b = bhn_ref[:, HP:2 * HP]
            h0 = jnp.zeros((B, 2 * HP), jnp.float32)   # [h_fwd | h_bwd], pads stay 0

            def step(k, h):
                # One fused MXU op for both directions (block-diagonal whh).
                gh = jnp.dot(h.astype(jnp.bfloat16), whh,
                             preferred_element_type=jnp.float32)        # (B, 768)
                row_f = pl.multiple_of(k * B, B)
                row_b = pl.multiple_of((S - 1 - k) * B, B)
                gi_f = gi_ref[pl.ds(row_f, B), 0:G].astype(jnp.float32)   # (B, 384)
                gi_b = gi_ref[pl.ds(row_b, B), G:2 * G].astype(jnp.float32)

                # Forward direction (gates lane-aligned at 128-lane blocks).
                r_f = jax.nn.sigmoid(gi_f[:, 0:HP] + gh[:, 0:HP])
                z_f = jax.nn.sigmoid(gi_f[:, HP:2 * HP] + gh[:, HP:2 * HP])
                n_f = jnp.tanh(gi_f[:, 2 * HP:3 * HP]
                               + r_f * (gh[:, 2 * HP:3 * HP] + bhn_f))
                h_f = (1.0 - z_f) * n_f + z_f * h[:, 0:HP]

                # Backward direction.
                r_b = jax.nn.sigmoid(gi_b[:, 0:HP] + gh[:, G:G + HP])
                z_b = jax.nn.sigmoid(gi_b[:, HP:2 * HP] + gh[:, G + HP:G + 2 * HP])
                n_b = jnp.tanh(gi_b[:, 2 * HP:3 * HP]
                               + r_b * (gh[:, G + 2 * HP:G + 3 * HP] + bhn_b))
                h_b = (1.0 - z_b) * n_b + z_b * h[:, HP:2 * HP]

                return jnp.concatenate([h_f, h_b], axis=1)   # 128-lane aligned blocks

            unroll = True if S <= 16 else 8
            h_final = lax.fori_loop(0, S, step, h0, unroll=unroll)

            # Linear(100, 3) with padded split weight; lane-dense output.
            out_ref[...] = jnp.dot(h_final.astype(jnp.bfloat16), wfc_ref[...],
                                   preferred_element_type=jnp.float32) + bfc_ref[...]

    return kernel


# --------------------------------------------------------------------------
# Parameter packing: PyTorch-layout params -> lane-aligned fused kernel weights
# --------------------------------------------------------------------------
def pack_params(p):
    H, HP = HIDDEN, HID_PAD

    def pack_wih(w):          # torch weight_ih (3H, D), rows [r|z|n]
        out = jnp.zeros((INPUT_DIM, 3 * HP), jnp.float32)
        for g in range(3):
            out = out.at[:, g * HP:g * HP + H].set(w[g * H:(g + 1) * H, :].T)
        return out

    def pack_whh(w):          # torch weight_hh (3H, H)
        out = jnp.zeros((HP, 3 * HP), jnp.float32)
        for g in range(3):
            out = out.at[:H, g * HP:g * HP + H].set(w[g * H:(g + 1) * H, :].T)
        return out

    def pack_bias(b, gates):  # (3H,) -> (3*HP,) with selected gates populated
        out = jnp.zeros((3 * HP,), jnp.float32)
        for g in gates:
            out = out.at[g * HP:g * HP + H].set(b[g * H:(g + 1) * H])
        return out

    def pack_hn(b):           # n-gate hidden bias (3H,) -> (HP,)
        return jnp.zeros((HP,), jnp.float32).at[:H].set(b[2 * H:3 * H])

    # Fused input weight for both directions: (256, 768).
    wih_all = jnp.concatenate([pack_wih(p["w_ih_f"]), pack_wih(p["w_ih_b"])], axis=1)

    # Folded input-side bias: b_ih (all gates) + b_hh (r, z only); b_hn stays separate.
    bi_f = pack_bias(p["b_ih_f"], (0, 1, 2)) + pack_bias(p["b_hh_f"], (0, 1))
    bi_b = pack_bias(p["b_ih_b"], (0, 1, 2)) + pack_bias(p["b_hh_b"], (0, 1))
    bi_all = jnp.concatenate([bi_f, bi_b])[None, :]

    # Block-diagonal hidden weight: one MXU op per timestep for both directions.
    whh_all = jnp.zeros((2 * HP, 6 * HP), jnp.float32)
    whh_all = whh_all.at[0:HP, 0:3 * HP].set(pack_whh(p["w_hh_f"]))
    whh_all = whh_all.at[HP:2 * HP, 3 * HP:6 * HP].set(pack_whh(p["w_hh_b"]))

    # n-gate hidden bias only (must stay inside r * (...)): (1, 256).
    bhn_all = jnp.concatenate([pack_hn(p["b_hh_f"]), pack_hn(p["b_hh_b"])])[None, :]

    # Linear(100, 3): out = [h_f | h_b] @ W.T + b, laid out on the padded h.
    wt = p["w_fc"].T                                  # (100, 3)
    wfc = jnp.zeros((2 * HP, OUT_PAD), jnp.float32)
    wfc = wfc.at[0:H, 0:NUM_CLASSES].set(wt[0:H])
    wfc = wfc.at[HP:HP + H, 0:NUM_CLASSES].set(wt[H:2 * H])
    bfc = jnp.zeros((1, OUT_PAD), jnp.float32).at[0, 0:NUM_CLASSES].set(p["b_fc"])

    return {
        "wih": wih_all.astype(jnp.bfloat16),
        "bi": bi_all,
        "whh": whh_all.astype(jnp.bfloat16),
        "bhn": bhn_all,
        "wfc": wfc.astype(jnp.bfloat16),
        "bfc": bfc,
    }


def _vmem_budget_bytes():
    """Generation-aware VMEM budget: ~75% of physical capacity
    (≈96 MiB on v5e/v6e, ≈48 MiB on v7x); safe fallback if the query fails."""
    cap = 0
    try:
        cap = int(getattr(pltpu.get_tpu_info(), "vmem_capacity_bytes", 0))
    except Exception:
        cap = 0
    if cap <= 0:
        cap = 64 * 1024 * 1024
    return int(cap * 3 // 4)


def sentiment_head(x_bsd, raw_params):
    """x_bsd: (B, S, 256) float32 — BERT last_hidden_state output[0] (batch_first)."""
    B, S, D = x_bsd.shape
    assert D == INPUT_DIM
    kp = pack_params(raw_params)

    B_pad = ((B + 15) // 16) * 16          # bf16 native (16, 128) sublane tile
    # Time-major padded layout: the transpose fuses into the (required) pad copy,
    # and the bf16 cast happens in-kernel, so x makes exactly one HBM round trip
    # before the kernel streams it one timestep at a time.
    x_tm = jnp.zeros((S, B_pad, D), jnp.float32).at[:, :B, :].set(
        jnp.transpose(x_bsd, (1, 0, 2)))

    args = (x_tm, kp["wih"], kp["bi"], kp["whh"], kp["bhn"], kp["wfc"], kp["bfc"])
    kernel = make_bigru_head_kernel(S, B_pad)

    out = pl.pallas_call(
        kernel,
        out_shape=jax.ShapeDtypeStruct((B_pad, OUT_PAD), jnp.float32),
        grid=(S,),
        in_specs=[
            # Streamed per-timestep input block (auto double-buffered by Pallas).
            pl.BlockSpec((None, B_pad, D), lambda t: (t, 0, 0)),
            # Weights/biases: constant block index -> DMA'd once, stay resident.
            pl.BlockSpec((D, 2 * G), lambda t: (0, 0)),
            pl.BlockSpec((1, 2 * G), lambda t: (0, 0)),
            pl.BlockSpec((2 * HID_PAD, 2 * G), lambda t: (0, 0)),
            pl.BlockSpec((1, 2 * HID_PAD), lambda t: (0, 0)),
            pl.BlockSpec((2 * HID_PAD, OUT_PAD), lambda t: (0, 0)),
            pl.BlockSpec((1, OUT_PAD), lambda t: (0, 0)),
        ],
        out_specs=pl.BlockSpec((B_pad, OUT_PAD), lambda t: (0, 0)),
        scratch_shapes=[pltpu.VMEM((S * B_pad, 2 * G), jnp.bfloat16)],
        compiler_params=pltpu.CompilerParams(
            dimension_semantics=("arbitrary",),
            vmem_limit_bytes=_vmem_budget_bytes()),
    )(*args)
    return out[:B, :NUM_CLASSES]


# --------------------------------------------------------------------------
# Synthetic parameters (PyTorch layout + init ranges) and pure-JAX reference
# --------------------------------------------------------------------------
def init_params(key):
    ks = jax.random.split(key, 10)
    bg = 1.0 / jnp.sqrt(jnp.float32(HIDDEN))
    bf = 1.0 / jnp.sqrt(jnp.float32(2 * HIDDEN))

    def u(k, shape, bound):
        return jax.random.uniform(k, shape, jnp.float32, -bound, bound)

    return {
        "w_ih_f": u(ks[0], (3 * HIDDEN, INPUT_DIM), bg),
        "w_hh_f": u(ks[1], (3 * HIDDEN, HIDDEN), bg),
        "b_ih_f": u(ks[2], (3 * HIDDEN,), bg),
        "b_hh_f": u(ks[3], (3 * HIDDEN,), bg),
        "w_ih_b": u(ks[4], (3 * HIDDEN, INPUT_DIM), bg),
        "w_hh_b": u(ks[5], (3 * HIDDEN, HIDDEN), bg),
        "b_ih_b": u(ks[6], (3 * HIDDEN,), bg),
        "b_hh_b": u(ks[7], (3 * HIDDEN,), bg),
        "w_fc": u(ks[8], (NUM_CLASSES, 2 * HIDDEN), bf),
        "b_fc": u(ks[9], (NUM_CLASSES,), bf),
    }


def reference_head(x_bsd, p):
    """Pure-JAX f32 reference matching PyTorch GRU + Linear semantics."""
    B, S, D = x_bsd.shape
    H = HIDDEN

    def cell(x_t, h, w_ih, w_hh, b_ih, b_hh):
        gi = x_t @ w_ih.T + b_ih
        gh = h @ w_hh.T + b_hh
        r = jax.nn.sigmoid(gi[:, :H] + gh[:, :H])
        z = jax.nn.sigmoid(gi[:, H:2 * H] + gh[:, H:2 * H])
        n = jnp.tanh(gi[:, 2 * H:] + r * gh[:, 2 * H:])
        return (1.0 - z) * n + z * h

    h_f = jnp.zeros((B, H), jnp.float32)
    h_b = jnp.zeros((B, H), jnp.float32)
    for t in range(S):
        h_f = cell(x_bsd[:, t, :], h_f, p["w_ih_f"], p["w_hh_f"], p["b_ih_f"], p["b_hh_f"])
        h_b = cell(x_bsd[:, S - 1 - t, :], h_b, p["w_ih_b"], p["w_hh_b"], p["b_ih_b"], p["b_hh_b"])
    final = jnp.concatenate([h_f, h_b], axis=1)
    return final @ p["w_fc"].T + p["b_fc"]


if __name__ == "__main__":
    key = jax.random.PRNGKey(0)
    k_x, k_p = jax.random.split(key)

    B, S = 2, 8  # small batch / sequence length
    # Synthetic stand-in for the BERT last_hidden_state output[0]: (B, S, 256)
    x = jax.random.normal(k_x, (B, S, INPUT_DIM), dtype=jnp.float32)
    params = init_params(k_p)

    out = jax.block_until_ready(sentiment_head(x, params))
    assert out.shape == (B, NUM_CLASSES)

    ref = jax.block_until_ready(reference_head(x, params))
    # bf16 MXU matmuls + bf16 gi storage with f32 accumulation -> relaxed tolerance.
    assert jnp.allclose(out, ref, rtol=5e-2, atol=5e-2), (out, ref)

    print("KERNEL_OK")
</pallas_src>

<mosaic_0001>
module attributes {stable_mosaic.version = 11 : i64} {
  func.func @kernel(%arg0: i32, %arg1: memref<1x16x256xf32, #tpu.memory_space<vmem>>, %arg2: memref<256x768xbf16, #tpu.memory_space<vmem>>, %arg3: memref<1x768xf32, #tpu.memory_space<vmem>>, %arg4: memref<256x768xbf16, #tpu.memory_space<vmem>>, %arg5: memref<1x256xf32, #tpu.memory_space<vmem>>, %arg6: memref<256x128xbf16, #tpu.memory_space<vmem>>, %arg7: memref<1x128xf32, #tpu.memory_space<vmem>>, %arg8: memref<16x128xf32, #tpu.memory_space<vmem>>, %arg9: memref<128x768xbf16, #tpu.memory_space<vmem>>) attributes {dimension_semantics = [#tpu.dimension_semantics<arbitrary>], iteration_bounds = array<i64: 8>, scalar_prefetch = 0 : i64, scratch_operands = 1 : i64, tpu.core_type = #tpu.core_type<tc>, window_params = [{transform_indices = @transform_0, window_bounds = array<i64: 1, 16, 256>}, {pipeline_mode = #tpu.pipeline_mode<synchronous>, transform_indices = @transform_1, window_bounds = array<i64: 256, 768>}, {pipeline_mode = #tpu.pipeline_mode<synchronous>, transform_indices = @transform_2, window_bounds = array<i64: 1, 768>}, {pipeline_mode = #tpu.pipeline_mode<synchronous>, transform_indices = @transform_3, window_bounds = array<i64: 256, 768>}, {pipeline_mode = #tpu.pipeline_mode<synchronous>, transform_indices = @transform_4, window_bounds = array<i64: 1, 256>}, {pipeline_mode = #tpu.pipeline_mode<synchronous>, transform_indices = @transform_5, window_bounds = array<i64: 256, 128>}, {pipeline_mode = #tpu.pipeline_mode<synchronous>, transform_indices = @transform_6, window_bounds = array<i64: 1, 128>}, {pipeline_mode = #tpu.pipeline_mode<synchronous>, transform_indices = @transform_7, window_bounds = array<i64: 16, 128>}]} {
    %c0 = arith.constant 0 : index
    %c0_0 = arith.constant 0 : index
    %c0_1 = arith.constant 0 : index
    %0 = vector.load %arg1[%c0, %c0_0, %c0_1] : memref<1x16x256xf32, #tpu.memory_space<vmem>>, vector<1x16x256xf32>
    %1 = vector.shape_cast %0 : vector<1x16x256xf32> to vector<16x256xf32>
    %2 = arith.truncf %1 : vector<16x256xf32> to vector<16x256xbf16>
    %c0_2 = arith.constant 0 : index
    %c0_3 = arith.constant 0 : index
    %3 = vector.load %arg2[%c0_2, %c0_3] : memref<256x768xbf16, #tpu.memory_space<vmem>>, vector<256x768xbf16>
    %cst = arith.constant dense<0.000000e+00> : vector<16x768xf32>
    %4 = tpu.matmul %2, %3, %cst {dimension_numbers = #tpu.dot_dimension_numbers<[1], [0], [0], [1], [0, 0, 1, 1], [], []>} : vector<16x256xbf16>, vector<256x768xbf16>, vector<16x768xf32> -> vector<16x768xf32>
    %c0_4 = arith.constant 0 : index
    %c0_5 = arith.constant 0 : index
    %5 = vector.load %arg3[%c0_4, %c0_5] : memref<1x768xf32, #tpu.memory_space<vmem>>, vector<1x768xf32>
    %6 = vector.broadcast %5 : vector<1x768xf32> to vector<16x768xf32>
    %7 = arith.addf %4, %6 : vector<16x768xf32>
    %8 = arith.truncf %7 : vector<16x768xf32> to vector<16x768xbf16>
    %c16_i32 = arith.constant 16 : i32
    %9 = arith.muli %arg0, %c16_i32 : i32
    %10 = tpu.assume_multiple %9, 16 : i32
    %11 = arith.index_cast %10 : i32 to index
    %c0_6 = arith.constant 0 : index
    %12 = vector.load %arg9[%11, %c0_6] : memref<128x768xbf16, #tpu.memory_space<vmem>>, vector<16x768xbf16>
    tpu.vector_store %arg9[%11, %c0_6], %8 {strides = array<i32>} : memref<128x768xbf16, #tpu.memory_space<vmem>>, vector<16x768xbf16>,
    %c7_i32 = arith.constant 7 : i32
    %13 = arith.cmpi eq, %arg0, %c7_i32 : i32
    %14 = arith.extui %13 : i1 to i32
    %c0_i32 = arith.constant 0 : i32
    %15 = arith.cmpi ne, %14, %c0_i32 : i32
    scf.if %15 {
      %c0_7 = arith.constant 0 : index
      %c0_8 = arith.constant 0 : index
      %16 = vector.load %arg4[%c0_7, %c0_8] : memref<256x768xbf16, #tpu.memory_space<vmem>>, vector<256x768xbf16>
      %c0_9 = arith.constant 0 : index
      %c0_10 = arith.constant 0 : index
      %17 = vector.load %arg5[%c0_9, %c0_10] : memref<1x256xf32, #tpu.memory_space<vmem>>, vector<1x128xf32>
      %c0_11 = arith.constant 0 : index
      %c128 = arith.constant 128 : index
      %18 = vector.load %arg5[%c0_11, %c128] : memref<1x256xf32, #tpu.memory_space<vmem>>, vector<1x128xf32>
      %cst_12 = arith.constant 0.000000e+00 : f32
      %19 = vector.broadcast %cst_12 : f32 to vector<16x256xf32>
      %c0_i32_13 = arith.constant 0 : i32
      %20 = arith.truncf %19 : vector<16x256xf32> to vector<16x256xbf16>
      %cst_14 = arith.constant dense<0.000000e+00> : vector<16x768xf32>
      %21 = tpu.matmul %20, %16, %cst_14 {dimension_numbers = #tpu.dot_dimension_numbers<[1], [0], [0], [1], [0, 0, 1, 1], [], []>} : vector<16x256xbf16>, vector<256x768xbf16>, vector<16x768xf32> -> vector<16x768xf32>
      %c16_i32_15 = arith.constant 16 : i32
      %22 = arith.muli %c0_i32_13, %c16_i32_15 : i32
      %23 = tpu.assume_multiple %22, 16 : i32
      %c7_i32_16 = arith.constant 7 : i32
      %24 = arith.subi %c7_i32_16, %c0_i32_13 : i32
      %c16_i32_17 = arith.constant 16 : i32
      %25 = arith.muli %24, %c16_i32_17 : i32
      %26 = tpu.assume_multiple %25, 16 : i32
      %27 = arith.index_cast %23 : i32 to index
      %c0_18 = arith.constant 0 : index
      %28 = vector.load %arg9[%27, %c0_18] : memref<128x768xbf16, #tpu.memory_space<vmem>>, vector<16x384xbf16>
      %29 = arith.extf %28 : vector<16x384xbf16> to vector<16x384xf32>
      %30 = arith.index_cast %26 : i32 to index
      %c384 = arith.constant 384 : index
      %31 = vector.load %arg9[%30, %c384] : memref<128x768xbf16, #tpu.memory_space<vmem>>, vector<16x384xbf16>
      %32 = arith.extf %31 : vector<16x384xbf16> to vector<16x384xf32>
      %33 = vector.extract_strided_slice %29 {offsets = [0, 0], sizes = [16, 128], strides = [1, 1]} : vector<16x384xf32> to vector<16x128xf32>
      %34 = vector.extract_strided_slice %21 {offsets = [0, 0], sizes = [16, 128], strides = [1, 1]} : vector<16x768xf32> to vector<16x128xf32>
      %35 = arith.addf %33, %34 : vector<16x128xf32>
      %36 = arith.negf %35 : vector<16x128xf32>
      %37 = math.exp %36 : vector<16x128xf32>
      %cst_19 = arith.constant 1.000000e+00 : f32
      %38 = vector.broadcast %cst_19 : f32 to vector<16x128xf32>
      %39 = arith.addf %38, %37 : vector<16x128xf32>
      %40 = arith.divf %38, %39 : vector<16x128xf32>
      %41 = vector.extract_strided_slice %29 {offsets = [0, 128], sizes = [16, 128], strides = [1, 1]} : vector<16x384xf32> to vector<16x128xf32>
      %42 = vector.extract_strided_slice %21 {offsets = [0, 128], sizes = [16, 128], strides = [1, 1]} : vector<16x768xf32> to vector<16x128xf32>
      %43 = arith.addf %41, %42 : vector<16x128xf32>
      %44 = arith.negf %43 : vector<16x128xf32>
      %45 = math.exp %44 : vector<16x128xf32>
      %cst_20 = arith.constant 1.000000e+00 : f32
      %46 = vector.broadcast %cst_20 : f32 to vector<16x128xf32>
      %47 = arith.addf %46, %45 : vector<16x128xf32>
      %48 = arith.divf %46, %47 : vector<16x128xf32>
      %49 = vector.extract_strided_slice %29 {offsets = [0, 256], sizes = [16, 128], strides = [1, 1]} : vector<16x384xf32> to vector<16x128xf32>
      %50 = vector.extract_strided_slice %21 {offsets = [0, 256], sizes = [16, 128], strides = [1, 1]} : vector<16x768xf32> to vector<16x128xf32>
      %51 = vector.broadcast %17 : vector<1x128xf32> to vector<16x128xf32>
      %52 = arith.addf %50, %51 : vector<16x128xf32>
      %53 = arith.mulf %40, %52 : vector<16x128xf32>
      %54 = arith.addf %49, %53 : vector<16x128xf32>
      %55 = math.tanh %54 : vector<16x128xf32>
      %cst_21 = arith.constant 1.000000e+00 : f32
      %56 = vector.broadcast %cst_21 : f32 to vector<16x128xf32>
      %57 = arith.subf %56, %48 : vector<16x128xf32>
      %58 = arith.mulf %57, %55 : vector<16x128xf32>
      %59 = vector.extract_strided_slice %19 {offsets = [0, 0], sizes = [16, 128], strides = [1, 1]} : vector<16x256xf32> to vector<16x128xf32>
      %60 = arith.mulf %48, %59 : vector<16x128xf32>
      %61 = arith.addf %58, %60 : vector<16x128xf32>
      %62 = vector.extract_strided_slice %32 {offsets = [0, 0], sizes = [16, 128], strides = [1, 1]} : vector<16x384xf32> to vector<16x128xf32>
      %63 = vector.extract_strided_slice %21 {offsets = [0, 384], sizes = [16, 128], strides = [1, 1]} : vector<16x768xf32> to vector<16x128xf32>
      %64 = arith.addf %62, %63 : vector<16x128xf32>
      %65 = arith.negf %64 : vector<16x128xf32>
      %66 = math.exp %65 : vector<16x128xf32>
      %cst_22 = arith.constant 1.000000e+00 : f32
      %67 = vector.broadcast %cst_22 : f32 to vector<16x128xf32>
      %68 = arith.addf %67, %66 : vector<16x128xf32>
      %69 = arith.divf %67, %68 : vector<16x128xf32>
      %70 = vector.extract_strided_slice %32 {offsets = [0, 128], sizes = [16, 128], strides = [1, 1]} : vector<16x384xf32> to vector<16x128xf32>
      %71 = vector.extract_strided_slice %21 {offsets = [0, 512], sizes = [16, 128], strides = [1, 1]} : vector<16x768xf32> to vector<16x128xf32>
      %72 = arith.addf %70, %71 : vector<16x128xf32>
      %73 = arith.negf %72 : vector<16x128xf32>
      %74 = math.exp %73 : vector<16x128xf32>
      %cst_23 = arith.constant 1.000000e+00 : f32
      %75 = vector.broadcast %cst_23 : f32 to vector<16x128xf32>
      %76 = arith.addf %75, %74 : vector<16x128xf32>
      %77 = arith.divf %75, %76 : vector<16x128xf32>
      %78 = vector.extract_strided_slice %32 {offsets = [0, 256], sizes = [16, 128], strides = [1, 1]} : vector<16x384xf32> to vector<16x128xf32>
      %79 = vector.extract_strided_slice %21 {offsets = [0, 640], sizes = [16, 128], strides = [1, 1]} : vector<16x768xf32> to vector<16x128xf32>
      %80 = vector.broadcast %18 : vector<1x128xf32> to vector<16x128xf32>
      %81 = arith.addf %79, %80 : vector<16x128xf32>
      %82 = arith.mulf %69, %81 : vector<16x128xf32>
      %83 = arith.addf %78, %82 : vector<16x128xf32>
      %84 = math.tanh %83 : vector<16x128xf32>
      %cst_24 = arith.constant 1.000000e+00 : f32
      %85 = vector.broadcast %cst_24 : f32 to vector<16x128xf32>
      %86 = arith.subf %85, %77 : vector<16x128xf32>
      %87 = arith.mulf %86, %84 : vector<16x128xf32>
      %88 = vector.extract_strided_slice %19 {offsets = [0, 128], sizes = [16, 128], strides = [1, 1]} : vector<16x256xf32> to vector<16x128xf32>
      %89 = arith.mulf %77, %88 : vector<16x128xf32>
      %90 = arith.addf %87, %89 : vector<16x128xf32>
      %91 = tpu.concatenate %61, %90 in 1 : vector<16x128xf32>, vector<16x128xf32> -> vector<16x256xf32>
      %c1_i32 = arith.constant 1 : i32
      %92 = arith.truncf %91 : vector<16x256xf32> to vector<16x256xbf16>
      %cst_25 = arith.constant dense<0.000000e+00> : vector<16x768xf32>
      %93 = tpu.matmul %92, %16, %cst_25 {dimension_numbers = #tpu.dot_dimension_numbers<[1], [0], [0], [1], [0, 0, 1, 1], [], []>} : vector<16x256xbf16>, vector<256x768xbf16>, vector<16x768xf32> -> vector<16x768xf32>
      %c16_i32_26 = arith.constant 16 : i32
      %94 = arith.muli %c1_i32, %c16_i32_26 : i32
      %95 = tpu.assume_multiple %94, 16 : i32
      %c7_i32_27 = arith.constant 7 : i32
      %96 = arith.subi %c7_i32_27, %c1_i32 : i32
      %c16_i32_28 = arith.constant 16 : i32
      %97 = arith.muli %96, %c16_i32_28 : i32
      %98 = tpu.assume_multiple %97, 16 : i32
      %99 = arith.index_cast %95 : i32 to index
      %c0_29 = arith.constant 0 : index
      %100 = vector.load %arg9[%99, %c0_29] : memref<128x768xbf16, #tpu.memory_space<vmem>>, vector<16x384xbf16>
      %101 = arith.extf %100 : vector<16x384xbf16> to vector<16x384xf32>
      %102 = arith.index_cast %98 : i32 to index
      %c384_30 = arith.constant 384 : index
      %103 = vector.load %arg9[%102, %c384_30] : memref<128x768xbf16, #tpu.memory_space<vmem>>, vector<16x384xbf16>
      %104 = arith.extf %103 : vector<16x384xbf16> to vector<16x384xf32>
      %105 = vector.extract_strided_slice %101 {offsets = [0, 0], sizes = [16, 128], strides = [1, 1]} : vector<16x384xf32> to vector<16x128xf32>
      %106 = vector.extract_strided_slice %93 {offsets = [0, 0], sizes = [16, 128], strides = [1, 1]} : vector<16x768xf32> to vector<16x128xf32>
      %107 = arith.addf %105, %106 : vector<16x128xf32>
      %108 = arith.negf %107 : vector<16x128xf32>
      %109 = math.exp %108 : vector<16x128xf32>
      %cst_31 = arith.constant 1.000000e+00 : f32
      %110 = vector.broadcast %cst_31 : f32 to vector<16x128xf32>
      %111 = arith.addf %110, %109 : vector<16x128xf32>
      %112 = arith.divf %110, %111 : vector<16x128xf32>
      %113 = vector.extract_strided_slice %101 {offsets = [0, 128], sizes = [16, 128], strides = [1, 1]} : vector<16x384xf32> to vector<16x128xf32>
      %114 = vector.extract_strided_slice %93 {offsets = [0, 128], sizes = [16, 128], strides = [1, 1]} : vector<16x768xf32> to vector<16x128xf32>
      %115 = arith.addf %113, %114 : vector<16x128xf32>
      %116 = arith.negf %115 : vector<16x128xf32>
      %117 = math.exp %116 : vector<16x128xf32>
      %cst_32 = arith.constant 1.000000e+00 : f32
      %118 = vector.broadcast %cst_32 : f32 to vector<16x128xf32>
      %119 = arith.addf %118, %117 : vector<16x128xf32>
      %120 = arith.divf %118, %119 : vector<16x128xf32>
      %121 = vector.extract_strided_slice %101 {offsets = [0, 256], sizes = [16, 128], strides = [1, 1]} : vector<16x384xf32> to vector<16x128xf32>
      %122 = vector.extract_strided_slice %93 {offsets = [0, 256], sizes = [16, 128], strides = [1, 1]} : vector<16x768xf32> to vector<16x128xf32>
      %123 = vector.broadcast %17 : vector<1x128xf32> to vector<16x128xf32>
      %124 = arith.addf %122, %123 : vector<16x128xf32>
      %125 = arith.mulf %112, %124 : vector<16x128xf32>
      %126 = arith.addf %121, %125 : vector<16x128xf32>
      %127 = math.tanh %126 : vector<16x128xf32>
      %cst_33 = arith.constant 1.000000e+00 : f32
      %128 = vector.broadcast %cst_33 : f32 to vector<16x128xf32>
      %129 = arith.subf %128, %120 : vector<16x128xf32>
      %130 = arith.mulf %129, %127 : vector<16x128xf32>
      %131 = vector.extract_strided_slice %91 {offsets = [0, 0], sizes = [16, 128], strides = [1, 1]} : vector<16x256xf32> to vector<16x128xf32>
      %132 = arith.mulf %120, %131 : vector<16x128xf32>
      %133 = arith.addf %130, %132 : vector<16x128xf32>
      %134 = vector.extract_strided_slice %104 {offsets = [0, 0], sizes = [16, 128], strides = [1, 1]} : vector<16x384xf32> to vector<16x128xf32>
      %135 = vector.extract_strided_slice %93 {offsets = [0, 384], sizes = [16, 128], strides = [1, 1]} : vector<16x768xf32> to vector<16x128xf32>
      %136 = arith.addf %134, %135 : vector<16x128xf32>
      %137 = arith.negf %136 : vector<16x128xf32>
      %138 = math.exp %137 : vector<16x128xf32>
      %cst_34 = arith.constant 1.000000e+00 : f32
      %139 = vector.broadcast %cst_34 : f32 to vector<16x128xf32>
      %140 = arith.addf %139, %138 : vector<16x128xf32>
      %141 = arith.divf %139, %140 : vector<16x128xf32>
      %142 = vector.extract_strided_slice %104 {offsets = [0, 128], sizes = [16, 128], strides = [1, 1]} : vector<16x384xf32> to vector<16x128xf32>
      %143 = vector.extract_strided_slice %93 {offsets = [0, 512], sizes = [16, 128], strides = [1, 1]} : vector<16x768xf32> to vector<16x128xf32>
      %144 = arith.addf %142, %143 : vector<16x128xf32>
      %145 = arith.negf %144 : vector<16x128xf32>
      %146 = math.exp %145 : vector<16x128xf32>
      %cst_35 = arith.constant 1.000000e+00 : f32
      %147 = vector.broadcast %cst_35 : f32 to vector<16x128xf32>
      %148 = arith.addf %147, %146 : vector<16x128xf32>
      %149 = arith.divf %147, %148 : vector<16x128xf32>
      %150 = vector.extract_strided_slice %104 {offsets = [0, 256], sizes = [16, 128], strides = [1, 1]} : vector<16x384xf32> to vector<16x128xf32>
      %151 = vector.extract_strided_slice %93 {offsets = [0, 640], sizes = [16, 128], strides = [1, 1]} : vector<16x768xf32> to vector<16x128xf32>
      %152 = vector.broadcast %18 : vector<1x128xf32> to vector<16x128xf32>
      %153 = arith.addf %151, %152 : vector<16x128xf32>
      %154 = arith.mulf %141, %153 : vector<16x128xf32>
      %155 = arith.addf %150, %154 : vector<16x128xf32>
      %156 = math.tanh %155 : vector<16x128xf32>
      %cst_36 = arith.constant 1.000000e+00 : f32
      %157 = vector.broadcast %cst_36 : f32 to vector<16x128xf32>
      %158 = arith.subf %157, %149 : vector<16x128xf32>
      %159 = arith.mulf %158, %156 : vector<16x128xf32>
      %160 = vector.extract_strided_slice %91 {offsets = [0, 128], sizes = [16, 128], strides = [1, 1]} : vector<16x256xf32> to vector<16x128xf32>
      %161 = arith.mulf %149, %160 : vector<16x128xf32>
      %162 = arith.addf %159, %161 : vector<16x128xf32>
      %163 = tpu.concatenate %133, %162 in 1 : vector<16x128xf32>, vector<16x128xf32> -> vector<16x256xf32>
      %c2_i32 = arith.constant 2 : i32
      %164 = arith.truncf %163 : vector<16x256xf32> to vector<16x256xbf16>
      %cst_37 = arith.constant dense<0.000000e+00> : vector<16x768xf32>
      %165 = tpu.matmul %164, %16, %cst_37 {dimension_numbers = #tpu.dot_dimension_numbers<[1], [0], [0], [1], [0, 0, 1, 1], [], []>} : vector<16x256xbf16>, vector<256x768xbf16>, vector<16x768xf32> -> vector<16x768xf32>
      %c16_i32_38 = arith.constant 16 : i32
      %166 = arith.muli %c2_i32, %c16_i32_38 : i32
      %167 = tpu.assume_multiple %166, 16 : i32
      %c7_i32_39 = arith.constant 7 : i32
      %168 = arith.subi %c7_i32_39, %c2_i32 : i32
      %c16_i32_40 = arith.constant 16 : i32
      %169 = arith.muli %168, %c16_i32_40 : i32
      %170 = tpu.assume_multiple %169, 16 : i32
      %171 = arith.index_cast %167 : i32 to index
      %c0_41 = arith.constant 0 : index
      %172 = vector.load %arg9[%171, %c0_41] : memref<128x768xbf16, #tpu.memory_space<vmem>>, vector<16x384xbf16>
      %173 = arith.extf %172 : vector<16x384xbf16> to vector<16x384xf32>
      %174 = arith.index_cast %170 : i32 to index
      %c384_42 = arith.constant 384 : index
      %175 = vector.load %arg9[%174, %c384_42] : memref<128x768xbf16, #tpu.memory_space<vmem>>, vector<16x384xbf16>
      %176 = arith.extf %175 : vector<16x384xbf16> to vector<16x384xf32>
      %177 = vector.extract_strided_slice %173 {offsets = [0, 0], sizes = [16, 128], strides = [1, 1]} : vector<16x384xf32> to vector<16x128xf32>
      %178 = vector.extract_strided_slice %165 {offsets = [0, 0], sizes = [16, 128], strides = [1, 1]} : vector<16x768xf32> to vector<16x128xf32>
      %179 = arith.addf %177, %178 : vector<16x128xf32>
      %180 = arith.negf %179 : vector<16x128xf32>
      %181 = math.exp %180 : vector<16x128xf32>
      %cst_43 = arith.constant 1.000000e+00 : f32
      %182 = vector.broadcast %cst_43 : f32 to vector<16x128xf32>
      %183 = arith.addf %182, %181 : vector<16x128xf32>
      %184 = arith.divf %182, %183 : vector<16x128xf32>
      %185 = vector.extract_strided_slice %173 {offsets = [0, 128], sizes = [16, 128], strides = [1, 1]} : vector<16x384xf32> to vector<16x128xf32>
      %186 = vector.extract_strided_slice %165 {offsets = [0, 128], sizes = [16, 128], strides = [1, 1]} : vector<16x768xf32> to vector<16x128xf32>
      %187 = arith.addf %185, %186 : vector<16x128xf32>
      %188 = arith.negf %187 : vector<16x128xf32>
      %189 = math.exp %188 : vector<16x128xf32>
      %cst_44 = arith.constant 1.000000e+00 : f32
      %190 = vector.broadcast %cst_44 : f32 to vector<16x128xf32>
      %191 = arith.addf %190, %189 : vector<16x128xf32>
      %192 = arith.divf %190, %191 : vector<16x128xf32>
      %193 = vector.extract_strided_slice %173 {offsets = [0, 256], sizes = [16, 128], strides = [1, 1]} : vector<16x384xf32> to vector<16x128xf32>
      %194 = vector.extract_strided_slice %165 {offsets = [0, 256], sizes = [16, 128], strides = [1, 1]} : vector<16x768xf32> to vector<16x128xf32>
      %195 = vector.broadcast %17 : vector<1x128xf32> to vector<16x128xf32>
      %196 = arith.addf %194, %195 : vector<16x128xf32>
      %197 = arith.mulf %184, %196 : vector<16x128xf32>
      %198 = arith.addf %193, %197 : vector<16x128xf32>
      %199 = math.tanh %198 : vector<16x128xf32>
      %cst_45 = arith.constant 1.000000e+00 : f32
      %200 = vector.broadcast %cst_45 : f32 to vector<16x128xf32>
      %201 = arith.subf %200, %192 : vector<16x128xf32>
      %202 = arith.mulf %201, %199 : vector<16x128xf32>
      %203 = vector.extract_strided_slice %163 {offsets = [0, 0], sizes = [16, 128], strides = [1, 1]} : vector<16x256xf32> to vector<16x128xf32>
      %204 = arith.mulf %192, %203 : vector<16x128xf32>
      %205 = arith.addf %202, %204 : vector<16x128xf32>
      %206 = vector.extract_strided_slice %176 {offsets = [0, 0], sizes = [16, 128], strides = [1, 1]} : vector<16x384xf32> to vector<16x128xf32>
      %207 = vector.extract_strided_slice %165 {offsets = [0, 384], sizes = [16, 128], strides = [1, 1]} : vector<16x768xf32> to vector<16x128xf32>
      %208 = arith.addf %206, %207 : vector<16x128xf32>
      %209 = arith.negf %208 : vector<16x128xf32>
      %210 = math.exp %209 : vector<16x128xf32>
      %cst_46 = arith.constant 1.000000e+00 : f32
      %211 = vector.broadcast %cst_46 : f32 to vector<16x128xf32>
      %212 = arith.addf %211, %210 : vector<16x128xf32>
      %213 = arith.divf %211, %212 : vector<16x128xf32>
      %214 = vector.extract_strided_slice %176 {offsets = [0, 128], sizes = [16, 128], strides = [1, 1]} : vector<16x384xf32> to vector<16x128xf32>
      %215 = vector.extract_strided_slice %165 {offsets = [0, 512], sizes = [16, 128], strides = [1, 1]} : vector<16x768xf32> to vector<16x128xf32>
      %216 = arith.addf %214, %215 : vector<16x128xf32>
      %217 = arith.negf %216 : vector<16x128xf32>
      %218 = math.exp %217 : vector<16x128xf32>
      %cst_47 = arith.constant 1.000000e+00 : f32
      %219 = vector.broadcast %cst_47 : f32 to vector<16x128xf32>
      %220 = arith.addf %219, %218 : vector<16x128xf32>
      %221 = arith.divf %219, %220 : vector<16x128xf32>
      %222 = vector.extract_strided_slice %176 {offsets = [0, 256], sizes = [16, 128], strides = [1, 1]} : vector<16x384xf32> to vector<16x128xf32>
      %223 = vector.extract_strided_slice %165 {offsets = [0, 640], sizes = [16, 128], strides = [1, 1]} : vector<16x768xf32> to vector<16x128xf32>
      %224 = vector.broadcast %18 : vector<1x128xf32> to vector<16x128xf32>
      %225 = arith.addf %223, %224 : vector<16x128xf32>
      %226 = arith.mulf %213, %225 : vector<16x128xf32>
      %227 = arith.addf %222, %226 : vector<16x128xf32>
      %228 = math.tanh %227 : vector<16x128xf32>
      %cst_48 = arith.constant 1.000000e+00 : f32
      %229 = vector.broadcast %cst_48 : f32 to vector<16x128xf32>
      %230 = arith.subf %229, %221 : vector<16x128xf32>
      %231 = arith.mulf %230, %228 : vector<16x128xf32>
      %232 = vector.extract_strided_slice %163 {offsets = [0, 128], sizes = [16, 128], strides = [1, 1]} : vector<16x256xf32> to vector<16x128xf32>
      %233 = arith.mulf %221, %232 : vector<16x128xf32>
      %234 = arith.addf %231, %233 : vector<16x128xf32>
      %235 = tpu.concatenate %205, %234 in 1 : vector<16x128xf32>, vector<16x128xf32> -> vector<16x256xf32>
      %c3_i32 = arith.constant 3 : i32
      %236 = arith.truncf %235 : vector<16x256xf32> to vector<16x256xbf16>
      %cst_49 = arith.constant dense<0.000000e+00> : vector<16x768xf32>
      %237 = tpu.matmul %236, %16, %cst_49 {dimension_numbers = #tpu.dot_dimension_numbers<[1], [0], [0], [1], [0, 0, 1, 1], [], []>} : vector<16x256xbf16>, vector<256x768xbf16>, vector<16x768xf32> -> vector<16x768xf32>
      %c16_i32_50 = arith.constant 16 : i32
      %238 = arith.muli %c3_i32, %c16_i32_50 : i32
      %239 = tpu.assume_multiple %238, 16 : i32
      %c7_i32_51 = arith.constant 7 : i32
      %240 = arith.subi %c7_i32_51, %c3_i32 : i32
      %c16_i32_52 = arith.constant 16 : i32
      %241 = arith.muli %240, %c16_i32_52 : i32
      %242 = tpu.assume_multiple %241, 16 : i32
      %243 = arith.index_cast %239 : i32 to index
      %c0_53 = arith.constant 0 : index
      %244 = vector.load %arg9[%243, %c0_53] : memref<128x768xbf16, #tpu.memory_space<vmem>>, vector<16x384xbf16>
      %245 = arith.extf %244 : vector<16x384xbf16> to vector<16x384xf32>
      %246 = arith.index_cast %242 : i32 to index
      %c384_54 = arith.constant 384 : index
      %247 = vector.load %arg9[%246, %c384_54] : memref<128x768xbf16, #tpu.memory_space<vmem>>, vector<16x384xbf16>
      %248 = arith.extf %247 : vector<16x384xbf16> to vector<16x384xf32>
      %249 = vector.extract_strided_slice %245 {offsets = [0, 0], sizes = [16, 128], strides = [1, 1]} : vector<16x384xf32> to vector<16x128xf32>
      %250 = vector.extract_strided_slice %237 {offsets = [0, 0], sizes = [16, 128], strides = [1, 1]} : vector<16x768xf32> to vector<16x128xf32>
      %251 = arith.addf %249, %250 : vector<16x128xf32>
      %252 = arith.negf %251 : vector<16x128xf32>
      %253 = math.exp %252 : vector<16x128xf32>
      %cst_55 = arith.constant 1.000000e+00 : f32
      %254 = vector.broadcast %cst_55 : f32 to vector<16x128xf32>
      %255 = arith.addf %254, %253 : vector<16x128xf32>
      %256 = arith.divf %254, %255 : vector<16x128xf32>
      %257 = vector.extract_strided_slice %245 {offsets = [0, 128], sizes = [16, 128], strides = [1, 1]} : vector<16x384xf32> to vector<16x128xf32>
      %258 = vector.extract_strided_slice %237 {offsets = [0, 128], sizes = [16, 128], strides = [1, 1]} : vector<16x768xf32> to vector<16x128xf32>
      %259 = arith.addf %257, %258 : vector<16x128xf32>
      %260 = arith.negf %259 : vector<16x128xf32>
      %261 = math.exp %260 : vector<16x128xf32>
      %cst_56 = arith.constant 1.000000e+00 : f32
      %262 = vector.broadcast %cst_56 : f32 to vector<16x128xf32>
      %263 = arith.addf %262, %261 : vector<16x128xf32>
      %264 = arith.divf %262, %263 : vector<16x128xf32>
      %265 = vector.extract_strided_slice %245 {offsets = [0, 256], sizes = [16, 128], strides = [1, 1]} : vector<16x384xf32> to vector<16x128xf32>
      %266 = vector.extract_strided_slice %237 {offsets = [0, 256], sizes = [16, 128], strides = [1, 1]} : vector<16x768xf32> to vector<16x128xf32>
      %267 = vector.broadcast %17 : vector<1x128xf32> to vector<16x128xf32>
      %268 = arith.addf %266, %267 : vector<16x128xf32>
      %269 = arith.mulf %256, %268 : vector<16x128xf32>
      %270 = arith.addf %265, %269 : vector<16x128xf32>
      %271 = math.tanh %270 : vector<16x128xf32>
      %cst_57 = arith.constant 1.000000e+00 : f32
      %272 = vector.broadcast %cst_57 : f32 to vector<16x128xf32>
      %273 = arith.subf %272, %264 : vector<16x128xf32>
      %274 = arith.mulf %273, %271 : vector<16x128xf32>
      %275 = vector.extract_strided_slice %235 {offsets = [0, 0], sizes = [16, 128], strides = [1, 1]} : vector<16x256xf32> to vector<16x128xf32>
      %276 = arith.mulf %264, %275 : vector<16x128xf32>
      %277 = arith.addf %274, %276 : vector<16x128xf32>
      %278 = vector.extract_strided_slice %248 {offsets = [0, 0], sizes = [16, 128], strides = [1, 1]} : vector<16x384xf32> to vector<16x128xf32>
      %279 = vector.extract_strided_slice %237 {offsets = [0, 384], sizes = [16, 128], strides = [1, 1]} : vector<16x768xf32> to vector<16x128xf32>
      %280 = arith.addf %278, %279 : vector<16x128xf32>
      %281 = arith.negf %280 : vector<16x128xf32>
      %282 = math.exp %281 : vector<16x128xf32>
      %cst_58 = arith.constant 1.000000e+00 : f32
      %283 = vector.broadcast %cst_58 : f32 to vector<16x128xf32>
      %284 = arith.addf %283, %282 : vector<16x128xf32>
      %285 = arith.divf %283, %284 : vector<16x128xf32>
      %286 = vector.extract_strided_slice %248 {offsets = [0, 128], sizes = [16, 128], strides = [1, 1]} : vector<16x384xf32> to vector<16x128xf32>
      %287 = vector.extract_strided_slice %237 {offsets = [0, 512], sizes = [16, 128], strides = [1, 1]} : vector<16x768xf32> to vector<16x128xf32>
      %288 = arith.addf %286, %287 : vector<16x128xf32>
      %289 = arith.negf %288 : vector<16x128xf32>
      %290 = math.exp %289 : vector<16x128xf32>
      %cst_59 = arith.constant 1.000000e+00 : f32
      %291 = vector.broadcast %cst_59 : f32 to vector<16x128xf32>
      %292 = arith.addf %291, %290 : vector<16x128xf32>
      %293 = arith.divf %291, %292 : vector<16x128xf32>
      %294 = vector.extract_strided_slice %248 {offsets = [0, 256], sizes = [16, 128], strides = [1, 1]} : vector<16x384xf32> to vector<16x128xf32>
      %295 = vector.extract_strided_slice %237 {offsets = [0, 640], sizes = [16, 128], strides = [1, 1]} : vector<16x768xf32> to vector<16x128xf32>
      %296 = vector.broadcast %18 : vector<1x128xf32> to vector<16x128xf32>
      %297 = arith.addf %295, %296 : vector<16x128xf32>
      %298 = arith.mulf %285, %297 : vector<16x128xf32>
      %299 = arith.addf %294, %298 : vector<16x128xf32>
      %300 = math.tanh %299 : vector<16x128xf32>
      %cst_60 = arith.constant 1.000000e+00 : f32
      %301 = vector.broadcast %cst_60 : f32 to vector<16x128xf32>
      %302 = arith.subf %301, %293 : vector<16x128xf32>
      %303 = arith.mulf %302, %300 : vector<16x128xf32>
      %304 = vector.extract_strided_slice %235 {offsets = [0, 128], sizes = [16, 128], strides = [1, 1]} : vector<16x256xf32> to vector<16x128xf32>
      %305 = arith.mulf %293, %304 : vector<16x128xf32>
      %306 = arith.addf %303, %305 : vector<16x128xf32>
      %307 = tpu.concatenate %277, %306 in 1 : vector<16x128xf32>, vector<16x128xf32> -> vector<16x256xf32>
      %c4_i32 = arith.constant 4 : i32
      %308 = arith.truncf %307 : vector<16x256xf32> to vector<16x256xbf16>
      %cst_61 = arith.constant dense<0.000000e+00> : vector<16x768xf32>
      %309 = tpu.matmul %308, %16, %cst_61 {dimension_numbers = #tpu.dot_dimension_numbers<[1], [0], [0], [1], [0, 0, 1, 1], [], []>} : vector<16x256xbf16>, vector<256x768xbf16>, vector<16x768xf32> -> vector<16x768xf32>
      %c16_i32_62 = arith.constant 16 : i32
      %310 = arith.muli %c4_i32, %c16_i32_62 : i32
      %311 = tpu.assume_multiple %310, 16 : i32
      %c7_i32_63 = arith.constant 7 : i32
      %312 = arith.subi %c7_i32_63, %c4_i32 : i32
      %c16_i32_64 = arith.constant 16 : i32
      %313 = arith.muli %312, %c16_i32_64 : i32
      %314 = tpu.assume_multiple %313, 16 : i32
      %315 = arith.index_cast %311 : i32 to index
      %c0_65 = arith.constant 0 : index
      %316 = vector.load %arg9[%315, %c0_65] : memref<128x768xbf16, #tpu.memory_space<vmem>>, vector<16x384xbf16>
      %317 = arith.extf %316 : vector<16x384xbf16> to vector<16x384xf32>
      %318 = arith.index_cast %314 : i32 to index
      %c384_66 = arith.constant 384 : index
      %319 = vector.load %arg9[%318, %c384_66] : memref<128x768xbf16, #tpu.memory_space<vmem>>, vector<16x384xbf16>
      %320 = arith.extf %319 : vector<16x384xbf16> to vector<16x384xf32>
      %321 = vector.extract_strided_slice %317 {offsets = [0, 0], sizes = [16, 128], strides = [1, 1]} : vector<16x384xf32> to vector<16x128xf32>
      %322 = vector.extract_strided_slice %309 {offsets = [0, 0], sizes = [16, 128], strides = [1, 1]} : vector<16x768xf32> to vector<16x128xf32>
      %323 = arith.addf %321, %322 : vector<16x128xf32>
      %324 = arith.negf %323 : vector<16x128xf32>
      %325 = math.exp %324 : vector<16x128xf32>
      %cst_67 = arith.constant 1.000000e+00 : f32
      %326 = vector.broadcast %cst_67 : f32 to vector<16x128xf32>
      %327 = arith.addf %326, %325 : vector<16x128xf32>
      %328 = arith.divf %326, %327 : vector<16x128xf32>
      %329 = vector.extract_strided_slice %317 {offsets = [0, 128], sizes = [16, 128], strides = [1, 1]} : vector<16x384xf32> to vector<16x128xf32>
      %330 = vector.extract_strided_slice %309 {offsets = [0, 128], sizes = [16, 128], strides = [1, 1]} : vector<16x768xf32> to vector<16x128xf32>
      %331 = arith.addf %329, %330 : vector<16x128xf32>
      %332 = arith.negf %331 : vector<16x128xf32>
      %333 = math.exp %332 : vector<16x128xf32>
      %cst_68 = arith.constant 1.000000e+00 : f32
      %334 = vector.broadcast %cst_68 : f32 to vector<16x128xf32>
      %335 = arith.addf %334, %333 : vector<16x128xf32>
      %336 = arith.divf %334, %335 : vector<16x128xf32>
      %337 = vector.extract_strided_slice %317 {offsets = [0, 256], sizes = [16, 128], strides = [1, 1]} : vector<16x384xf32> to vector<16x128xf32>
      %338 = vector.extract_strided_slice %309 {offsets = [0, 256], sizes = [16, 128], strides = [1, 1]} : vector<16x768xf32> to vector<16x128xf32>
      %339 = vector.broadcast %17 : vector<1x128xf32> to vector<16x128xf32>
      %340 = arith.addf %338, %339 : vector<16x128xf32>
      %341 = arith.mulf %328, %340 : vector<16x128xf32>
      %342 = arith.addf %337, %341 : vector<16x128xf32>
      %343 = math.tanh %342 : vector<16x128xf32>
      %cst_69 = arith.constant 1.000000e+00 : f32
      %344 = vector.broadcast %cst_69 : f32 to vector<16x128xf32>
      %345 = arith.subf %344, %336 : vector<16x128xf32>
      %346 = arith.mulf %345, %343 : vector<16x128xf32>
      %347 = vector.extract_strided_slice %307 {offsets = [0, 0], sizes = [16, 128], strides = [1, 1]} : vector<16x256xf32> to vector<16x128xf32>
      %348 = arith.mulf %336, %347 : vector<16x128xf32>
      %349 = arith.addf %346, %348 : vector<16x128xf32>
      %350 = vector.extract_strided_slice %320 {offsets = [0, 0], sizes = [16, 128], strides = [1, 1]} : vector<16x384xf32> to vector<16x128xf32>
      %351 = vector.extract_strided_slice %309 {offsets = [0, 384], sizes = [16, 128], strides = [1, 1]} : vector<16x768xf32> to vector<16x128xf32>
      %352 = arith.addf %350, %351 : vector<16x128xf32>
      %353 = arith.negf %352 : vector<16x128xf32>
      %354 = math.exp %353 : vector<16x128xf32>
      %cst_70 = arith.constant 1.000000e+00 : f32
      %355 = vector.broadcast %cst_70 : f32 to vector<16x128xf32>
      %356 = arith.addf %355, %354 : vector<16x128xf32>
      %357 = arith.divf %355, %356 : vector<16x128xf32>
      %358 = vector.extract_strided_slice %320 {offsets = [0, 128], sizes = [16, 128], strides = [1, 1]} : vector<16x384xf32> to vector<16x128xf32>
      %359 = vector.extract_strided_slice %309 {offsets = [0, 512], sizes = [16, 128], strides = [1, 1]} : vector<16x768xf32> to vector<16x128xf32>
      %360 = arith.addf %358, %359 : vector<16x128xf32>
      %361 = arith.negf %360 : vector<16x128xf32>
      %362 = math.exp %361 : vector<16x128xf32>
      %cst_71 = arith.constant 1.000000e+00 : f32
      %363 = vector.broadcast %cst_71 : f32 to vector<16x128xf32>
      %364 = arith.addf %363, %362 : vector<16x128xf32>
      %365 = arith.divf %363, %364 : vector<16x128xf32>
      %366 = vector.extract_strided_slice %320 {offsets = [0, 256], sizes = [16, 128], strides = [1, 1]} : vector<16x384xf32> to vector<16x128xf32>
      %367 = vector.extract_strided_slice %309 {offsets = [0, 640], sizes = [16, 128], strides = [1, 1]} : vector<16x768xf32> to vector<16x128xf32>
      %368 = vector.broadcast %18 : vector<1x128xf32> to vector<16x128xf32>
      %369 = arith.addf %367, %368 : vector<16x128xf32>
      %370 = arith.mulf %357, %369 : vector<16x128xf32>
      %371 = arith.addf %366, %370 : vector<16x128xf32>
      %372 = math.tanh %371 : vector<16x128xf32>
      %cst_72 = arith.constant 1.000000e+00 : f32
      %373 = vector.broadcast %cst_72 : f32 to vector<16x128xf32>
      %374 = arith.subf %373, %365 : vector<16x128xf32>
      %375 = arith.mulf %374, %372 : vector<16x128xf32>
      %376 = vector.extract_strided_slice %307 {offsets = [0, 128], sizes = [16, 128], strides = [1, 1]} : vector<16x256xf32> to vector<16x128xf32>
      %377 = arith.mulf %365, %376 : vector<16x128xf32>
      %378 = arith.addf %375, %377 : vector<16x128xf32>
      %379 = tpu.concatenate %349, %378 in 1 : vector<16x128xf32>, vector<16x128xf32> -> vector<16x256xf32>
      %c5_i32 = arith.constant 5 : i32
      %380 = arith.truncf %379 : vector<16x256xf32> to vector<16x256xbf16>
      %cst_73 = arith.constant dense<0.000000e+00> : vector<16x768xf32>
      %381 = tpu.matmul %380, %16, %cst_73 {dimension_numbers = #tpu.dot_dimension_numbers<[1], [0], [0], [1], [0, 0, 1, 1], [], []>} : vector<16x256xbf16>, vector<256x768xbf16>, vector<16x768xf32> -> vector<16x768xf32>
      %c16_i32_74 = arith.constant 16 : i32
      %382 = arith.muli %c5_i32, %c16_i32_74 : i32
      %383 = tpu.assume_multiple %382, 16 : i32
      %c7_i32_75 = arith.constant 7 : i32
      %384 = arith.subi %c7_i32_75, %c5_i32 : i32
      %c16_i32_76 = arith.constant 16 : i32
      %385 = arith.muli %384, %c16_i32_76 : i32
      %386 = tpu.assume_multiple %385, 16 : i32
      %387 = arith.index_cast %383 : i32 to index
      %c0_77 = arith.constant 0 : index
      %388 = vector.load %arg9[%387, %c0_77] : memref<128x768xbf16, #tpu.memory_space<vmem>>, vector<16x384xbf16>
      %389 = arith.extf %388 : vector<16x384xbf16> to vector<16x384xf32>
      %390 = arith.index_cast %386 : i32 to index
      %c384_78 = arith.constant 384 : index
      %391 = vector.load %arg9[%390, %c384_78] : memref<128x768xbf16, #tpu.memory_space<vmem>>, vector<16x384xbf16>
      %392 = arith.extf %391 : vector<16x384xbf16> to vector<16x384xf32>
      %393 = vector.extract_strided_slice %389 {offsets = [0, 0], sizes = [16, 128], strides = [1, 1]} : vector<16x384xf32> to vector<16x128xf32>
      %394 = vector.extract_strided_slice %381 {offsets = [0, 0], sizes = [16, 128], strides = [1, 1]} : vector<16x768xf32> to vector<16x128xf32>
      %395 = arith.addf %393, %394 : vector<16x128xf32>
      %396 = arith.negf %395 : vector<16x128xf32>
      %397 = math.exp %396 : vector<16x128xf32>
      %cst_79 = arith.constant 1.000000e+00 : f32
      %398 = vector.broadcast %cst_79 : f32 to vector<16x128xf32>
      %399 = arith.addf %398, %397 : vector<16x128xf32>
      %400 = arith.divf %398, %399 : vector<16x128xf32>
      %401 = vector.extract_strided_slice %389 {offsets = [0, 128], sizes = [16, 128], strides = [1, 1]} : vector<16x384xf32> to vector<16x128xf32>
      %402 = vector.extract_strided_slice %381 {offsets = [0, 128], sizes = [16, 128], strides = [1, 1]} : vector<16x768xf32> to vector<16x128xf32>
      %403 = arith.addf %401, %402 : vector<16x128xf32>
      %404 = arith.negf %403 : vector<16x128xf32>
      %405 = math.exp %404 : vector<16x128xf32>
      %cst_80 = arith.constant 1.000000e+00 : f32
      %406 = vector.broadcast %cst_80 : f32 to vector<16x128xf32>
      %407 = arith.addf %406, %405 : vector<16x128xf32>
      %408 = arith.divf %406, %407 : vector<16x128xf32>
      %409 = vector.extract_strided_slice %389 {offsets = [0, 256], sizes = [16, 128], strides = [1, 1]} : vector<16x384xf32> to vector<16x128xf32>
      %410 = vector.extract_strided_slice %381 {offsets = [0, 256], sizes = [16, 128], strides = [1, 1]} : vector<16x768xf32> to vector<16x128xf32>
      %411 = vector.broadcast %17 : vector<1x128xf32> to vector<16x128xf32>
      %412 = arith.addf %410, %411 : vector<16x128xf32>
      %413 = arith.mulf %400, %412 : vector<16x128xf32>
      %414 = arith.addf %409, %413 : vector<16x128xf32>
      %415 = math.tanh %414 : vector<16x128xf32>
      %cst_81 = arith.constant 1.000000e+00 : f32
      %416 = vector.broadcast %cst_81 : f32 to vector<16x128xf32>
      %417 = arith.subf %416, %408 : vector<16x128xf32>
      %418 = arith.mulf %417, %415 : vector<16x128xf32>
      %419 = vector.extract_strided_slice %379 {offsets = [0, 0], sizes = [16, 128], strides = [1, 1]} : vector<16x256xf32> to vector<16x128xf32>
      %420 = arith.mulf %408, %419 : vector<16x128xf32>
      %421 = arith.addf %418, %420 : vector<16x128xf32>
      %422 = vector.extract_strided_slice %392 {offsets = [0, 0], sizes = [16, 128], strides = [1, 1]} : vector<16x384xf32> to vector<16x128xf32>
      %423 = vector.extract_strided_slice %381 {offsets = [0, 384], sizes = [16, 128], strides = [1, 1]} : vector<16x768xf32> to vector<16x128xf32>
      %424 = arith.addf %422, %423 : vector<16x128xf32>
      %425 = arith.negf %424 : vector<16x128xf32>
      %426 = math.exp %425 : vector<16x128xf32>
      %cst_82 = arith.constant 1.000000e+00 : f32
      %427 = vector.broadcast %cst_82 : f32 to vector<16x128xf32>
      %428 = arith.addf %427, %426 : vector<16x128xf32>
      %429 = arith.divf %427, %428 : vector<16x128xf32>
      %430 = vector.extract_strided_slice %392 {offsets = [0, 128], sizes = [16, 128], strides = [1, 1]} : vector<16x384xf32> to vector<16x128xf32>
      %431 = vector.extract_strided_slice %381 {offsets = [0, 512], sizes = [16, 128], strides = [1, 1]} : vector<16x768xf32> to vector<16x128xf32>
      %432 = arith.addf %430, %431 : vector<16x128xf32>
      %433 = arith.negf %432 : vector<16x128xf32>
      %434 = math.exp %433 : vector<16x128xf32>
      %cst_83 = arith.constant 1.000000e+00 : f32
      %435 = vector.broadcast %cst_83 : f32 to vector<16x128xf32>
      %436 = arith.addf %435, %434 : vector<16x128xf32>
      %437 = arith.divf %435, %436 : vector<16x128xf32>
      %438 = vector.extract_strided_slice %392 {offsets = [0, 256], sizes = [16, 128], strides = [1, 1]} : vector<16x384xf32> to vector<16x128xf32>
      %439 = vector.extract_strided_slice %381 {offsets = [0, 640], sizes = [16, 128], strides = [1, 1]} : vector<16x768xf32> to vector<16x128xf32>
      %440 = vector.broadcast %18 : vector<1x128xf32> to vector<16x128xf32>
      %441 = arith.addf %439, %440 : vector<16x128xf32>
      %442 = arith.mulf %429, %441 : vector<16x128xf32>
      %443 = arith.addf %438, %442 : vector<16x128xf32>
      %444 = math.tanh %443 : vector<16x128xf32>
      %cst_84 = arith.constant 1.000000e+00 : f32
      %445 = vector.broadcast %cst_84 : f32 to vector<16x128xf32>
      %446 = arith.subf %445, %437 : vector<16x128xf32>
      %447 = arith.mulf %446, %444 : vector<16x128xf32>
      %448 = vector.extract_strided_slice %379 {offsets = [0, 128], sizes = [16, 128], strides = [1, 1]} : vector<16x256xf32> to vector<16x128xf32>
      %449 = arith.mulf %437, %448 : vector<16x128xf32>
      %450 = arith.addf %447, %449 : vector<16x128xf32>
      %451 = tpu.concatenate %421, %450 in 1 : vector<16x128xf32>, vector<16x128xf32> -> vector<16x256xf32>
      %c6_i32 = arith.constant 6 : i32
      %452 = arith.truncf %451 : vector<16x256xf32> to vector<16x256xbf16>
      %cst_85 = arith.constant dense<0.000000e+00> : vector<16x768xf32>
      %453 = tpu.matmul %452, %16, %cst_85 {dimension_numbers = #tpu.dot_dimension_numbers<[1], [0], [0], [1], [0, 0, 1, 1], [], []>} : vector<16x256xbf16>, vector<256x768xbf16>, vector<16x768xf32> -> vector<16x768xf32>
      %c16_i32_86 = arith.constant 16 : i32
      %454 = arith.muli %c6_i32, %c16_i32_86 : i32
      %455 = tpu.assume_multiple %454, 16 : i32
      %c7_i32_87 = arith.constant 7 : i32
      %456 = arith.subi %c7_i32_87, %c6_i32 : i32
      %c16_i32_88 = arith.constant 16 : i32
      %457 = arith.muli %456, %c16_i32_88 : i32
      %458 = tpu.assume_multiple %457, 16 : i32
      %459 = arith.index_cast %455 : i32 to index
      %c0_89 = arith.constant 0 : index
      %460 = vector.load %arg9[%459, %c0_89] : memref<128x768xbf16, #tpu.memory_space<vmem>>, vector<16x384xbf16>
      %461 = arith.extf %460 : vector<16x384xbf16> to vector<16x384xf32>
      %462 = arith.index_cast %458 : i32 to index
      %c384_90 = arith.constant 384 : index
      %463 = vector.load %arg9[%462, %c384_90] : memref<128x768xbf16, #tpu.memory_space<vmem>>, vector<16x384xbf16>
      %464 = arith.extf %463 : vector<16x384xbf16> to vector<16x384xf32>
      %465 = vector.extract_strided_slice %461 {offsets = [0, 0], sizes = [16, 128], strides = [1, 1]} : vector<16x384xf32> to vector<16x128xf32>
      %466 = vector.extract_strided_slice %453 {offsets = [0, 0], sizes = [16, 128], strides = [1, 1]} : vector<16x768xf32> to vector<16x128xf32>
      %467 = arith.addf %465, %466 : vector<16x128xf32>
      %468 = arith.negf %467 : vector<16x128xf32>
      %469 = math.exp %468 : vector<16x128xf32>
      %cst_91 = arith.constant 1.000000e+00 : f32
      %470 = vector.broadcast %cst_91 : f32 to vector<16x128xf32>
      %471 = arith.addf %470, %469 : vector<16x128xf32>
      %472 = arith.divf %470, %471 : vector<16x128xf32>
      %473 = vector.extract_strided_slice %461 {offsets = [0, 128], sizes = [16, 128], strides = [1, 1]} : vector<16x384xf32> to vector<16x128xf32>
      %474 = vector.extract_strided_slice %453 {offsets = [0, 128], sizes = [16, 128], strides = [1, 1]} : vector<16x768xf32> to vector<16x128xf32>
      %475 = arith.addf %473, %474 : vector<16x128xf32>
      %476 = arith.negf %475 : vector<16x128xf32>
      %477 = math.exp %476 : vector<16x128xf32>
      %cst_92 = arith.constant 1.000000e+00 : f32
      %478 = vector.broadcast %cst_92 : f32 to vector<16x128xf32>
      %479 = arith.addf %478, %477 : vector<16x128xf32>
      %480 = arith.divf %478, %479 : vector<16x128xf32>
      %481 = vector.extract_strided_slice %461 {offsets = [0, 256], sizes = [16, 128], strides = [1, 1]} : vector<16x384xf32> to vector<16x128xf32>
      %482 = vector.extract_strided_slice %453 {offsets = [0, 256], sizes = [16, 128], strides = [1, 1]} : vector<16x768xf32> to vector<16x128xf32>
      %483 = vector.broadcast %17 : vector<1x128xf32> to vector<16x128xf32>
      %484 = arith.addf %482, %483 : vector<16x128xf32>
      %485 = arith.mulf %472, %484 : vector<16x128xf32>
      %486 = arith.addf %481, %485 : vector<16x128xf32>
      %487 = math.tanh %486 : vector<16x128xf32>
      %cst_93 = arith.constant 1.000000e+00 : f32
      %488 = vector.broadcast %cst_93 : f32 to vector<16x128xf32>
      %489 = arith.subf %488, %480 : vector<16x128xf32>
      %490 = arith.mulf %489, %487 : vector<16x128xf32>
      %491 = vector.extract_strided_slice %451 {offsets = [0, 0], sizes = [16, 128], strides = [1, 1]} : vector<16x256xf32> to vector<16x128xf32>
      %492 = arith.mulf %480, %491 : vector<16x128xf32>
      %493 = arith.addf %490, %492 : vector<16x128xf32>
      %494 = vector.extract_strided_slice %464 {offsets = [0, 0], sizes = [16, 128], strides = [1, 1]} : vector<16x384xf32> to vector<16x128xf32>
      %495 = vector.extract_strided_slice %453 {offsets = [0, 384], sizes = [16, 128], strides = [1, 1]} : vector<16x768xf32> to vector<16x128xf32>
      %496 = arith.addf %494, %495 : vector<16x128xf32>
      %497 = arith.negf %496 : vector<16x128xf32>
      %498 = math.exp %497 : vector<16x128xf32>
      %cst_94 = arith.constant 1.000000e+00 : f32
      %499 = vector.broadcast %cst_94 : f32 to vector<16x128xf32>
      %500 = arith.addf %499, %498 : vector<16x128xf32>
      %501 = arith.divf %499, %500 : vector<16x128xf32>
      %502 = vector.extract_strided_slice %464 {offsets = [0, 128], sizes = [16, 128], strides = [1, 1]} : vector<16x384xf32> to vector<16x128xf32>
      %503 = vector.extract_strided_slice %453 {offsets = [0, 512], sizes = [16, 128], strides = [1, 1]} : vector<16x768xf32> to vector<16x128xf32>
      %504 = arith.addf %502, %503 : vector<16x128xf32>
      %505 = arith.negf %504 : vector<16x128xf32>
      %506 = math.exp %505 : vector<16x128xf32>
      %cst_95 = arith.constant 1.000000e+00 : f32
      %507 = vector.broadcast %cst_95 : f32 to vector<16x128xf32>
      %508 = arith.addf %507, %506 : vector<16x128xf32>
      %509 = arith.divf %507, %508 : vector<16x128xf32>
      %510 = vector.extract_strided_slice %464 {offsets = [0, 256], sizes = [16, 128], strides = [1, 1]} : vector<16x384xf32> to vector<16x128xf32>
      %511 = vector.extract_strided_slice %453 {offsets = [0, 640], sizes = [16, 128], strides = [1, 1]} : vector<16x768xf32> to vector<16x128xf32>
      %512 = vector.broadcast %18 : vector<1x128xf32> to vector<16x128xf32>
      %513 = arith.addf %511, %512 : vector<16x128xf32>
      %514 = arith.mulf %501, %513 : vector<16x128xf32>
      %515 = arith.addf %510, %514 : vector<16x128xf32>
      %516 = math.tanh %515 : vector<16x128xf32>
      %cst_96 = arith.constant 1.000000e+00 : f32
      %517 = vector.broadcast %cst_96 : f32 to vector<16x128xf32>
      %518 = arith.subf %517, %509 : vector<16x128xf32>
      %519 = arith.mulf %518, %516 : vector<16x128xf32>
      %520 = vector.extract_strided_slice %451 {offsets = [0, 128], sizes = [16, 128], strides = [1, 1]} : vector<16x256xf32> to vector<16x128xf32>
      %521 = arith.mulf %509, %520 : vector<16x128xf32>
      %522 = arith.addf %519, %521 : vector<16x128xf32>
      %523 = tpu.concatenate %493, %522 in 1 : vector<16x128xf32>, vector<16x128xf32> -> vector<16x256xf32>
      %c7_i32_97 = arith.constant 7 : i32
      %524 = arith.truncf %523 : vector<16x256xf32> to vector<16x256xbf16>
      %cst_98 = arith.constant dense<0.000000e+00> : vector<16x768xf32>
      %525 = tpu.matmul %524, %16, %cst_98 {dimension_numbers = #tpu.dot_dimension_numbers<[1], [0], [0], [1], [0, 0, 1, 1], [], []>} : vector<16x256xbf16>, vector<256x768xbf16>, vector<16x768xf32> -> vector<16x768xf32>
      %c16_i32_99 = arith.constant 16 : i32
      %526 = arith.muli %c7_i32_97, %c16_i32_99 : i32
      %527 = tpu.assume_multiple %526, 16 : i32
      %c7_i32_100 = arith.constant 7 : i32
      %528 = arith.subi %c7_i32_100, %c7_i32_97 : i32
      %c16_i32_101 = arith.constant 16 : i32
      %529 = arith.muli %528, %c16_i32_101 : i32
      %530 = tpu.assume_multiple %529, 16 : i32
      %531 = arith.index_cast %527 : i32 to index
      %c0_102 = arith.constant 0 : index
      %532 = vector.load %arg9[%531, %c0_102] : memref<128x768xbf16, #tpu.memory_space<vmem>>, vector<16x384xbf16>
      %533 = arith.extf %532 : vector<16x384xbf16> to vector<16x384xf32>
      %534 = arith.index_cast %530 : i32 to index
      %c384_103 = arith.constant 384 : index
      %535 = vector.load %arg9[%534, %c384_103] : memref<128x768xbf16, #tpu.memory_space<vmem>>, vector<16x384xbf16>
      %536 = arith.extf %535 : vector<16x384xbf16> to vector<16x384xf32>
      %537 = vector.extract_strided_slice %533 {offsets = [0, 0], sizes = [16, 128], strides = [1, 1]} : vector<16x384xf32> to vector<16x128xf32>
      %538 = vector.extract_strided_slice %525 {offsets = [0, 0], sizes = [16, 128], strides = [1, 1]} : vector<16x768xf32> to vector<16x128xf32>
      %539 = arith.addf %537, %538 : vector<16x128xf32>
      %540 = arith.negf %539 : vector<16x128xf32>
      %541 = math.exp %540 : vector<16x128xf32>
      %cst_104 = arith.constant 1.000000e+00 : f32
      %542 = vector.broadcast %cst_104 : f32 to vector<16x128xf32>
      %543 = arith.addf %542, %541 : vector<16x128xf32>
      %544 = arith.divf %542, %543 : vector<16x128xf32>
      %545 = vector.extract_strided_slice %533 {offsets = [0, 128], sizes = [16, 128], strides = [1, 1]} : vector<16x384xf32> to vector<16x128xf32>
      %546 = vector.extract_strided_slice %525 {offsets = [0, 128], sizes = [16, 128], strides = [1, 1]} : vector<16x768xf32> to vector<16x128xf32>
      %547 = arith.addf %545, %546 : vector<16x128xf32>
      %548 = arith.negf %547 : vector<16x128xf32>
      %549 = math.exp %548 : vector<16x128xf32>
      %cst_105 = arith.constant 1.000000e+00 : f32
      %550 = vector.broadcast %cst_105 : f32 to vector<16x128xf32>
      %551 = arith.addf %550, %549 : vector<16x128xf32>
      %552 = arith.divf %550, %551 : vector<16x128xf32>
      %553 = vector.extract_strided_slice %533 {offsets = [0, 256], sizes = [16, 128], strides = [1, 1]} : vector<16x384xf32> to vector<16x128xf32>
      %554 = vector.extract_strided_slice %525 {offsets = [0, 256], sizes = [16, 128], strides = [1, 1]} : vector<16x768xf32> to vector<16x128xf32>
      %555 = vector.broadcast %17 : vector<1x128xf32> to vector<16x128xf32>
      %556 = arith.addf %554, %555 : vector<16x128xf32>
      %557 = arith.mulf %544, %556 : vector<16x128xf32>
      %558 = arith.addf %553, %557 : vector<16x128xf32>
      %559 = math.tanh %558 : vector<16x128xf32>
      %cst_106 = arith.constant 1.000000e+00 : f32
      %560 = vector.broadcast %cst_106 : f32 to vector<16x128xf32>
      %561 = arith.subf %560, %552 : vector<16x128xf32>
      %562 = arith.mulf %561, %559 : vector<16x128xf32>
      %563 = vector.extract_strided_slice %523 {offsets = [0, 0], sizes = [16, 128], strides = [1, 1]} : vector<16x256xf32> to vector<16x128xf32>
      %564 = arith.mulf %552, %563 : vector<16x128xf32>
      %565 = arith.addf %562, %564 : vector<16x128xf32>
      %566 = vector.extract_strided_slice %536 {offsets = [0, 0], sizes = [16, 128], strides = [1, 1]} : vector<16x384xf32> to vector<16x128xf32>
      %567 = vector.extract_strided_slice %525 {offsets = [0, 384], sizes = [16, 128], strides = [1, 1]} : vector<16x768xf32> to vector<16x128xf32>
      %568 = arith.addf %566, %567 : vector<16x128xf32>
      %569 = arith.negf %568 : vector<16x128xf32>
      %570 = math.exp %569 : vector<16x128xf32>
      %cst_107 = arith.constant 1.000000e+00 : f32
      %571 = vector.broadcast %cst_107 : f32 to vector<16x128xf32>
      %572 = arith.addf %571, %570 : vector<16x128xf32>
      %573 = arith.divf %571, %572 : vector<16x128xf32>
      %574 = vector.extract_strided_slice %536 {offsets = [0, 128], sizes = [16, 128], strides = [1, 1]} : vector<16x384xf32> to vector<16x128xf32>
      %575 = vector.extract_strided_slice %525 {offsets = [0, 512], sizes = [16, 128], strides = [1, 1]} : vector<16x768xf32> to vector<16x128xf32>
      %576 = arith.addf %574, %575 : vector<16x128xf32>
      %577 = arith.negf %576 : vector<16x128xf32>
      %578 = math.exp %577 : vector<16x128xf32>
      %cst_108 = arith.constant 1.000000e+00 : f32
      %579 = vector.broadcast %cst_108 : f32 to vector<16x128xf32>
      %580 = arith.addf %579, %578 : vector<16x128xf32>
      %581 = arith.divf %579, %580 : vector<16x128xf32>
      %582 = vector.extract_strided_slice %536 {offsets = [0, 256], sizes = [16, 128], strides = [1, 1]} : vector<16x384xf32> to vector<16x128xf32>
      %583 = vector.extract_strided_slice %525 {offsets = [0, 640], sizes = [16, 128], strides = [1, 1]} : vector<16x768xf32> to vector<16x128xf32>
      %584 = vector.broadcast %18 : vector<1x128xf32> to vector<16x128xf32>
      %585 = arith.addf %583, %584 : vector<16x128xf32>
      %586 = arith.mulf %573, %585 : vector<16x128xf32>
      %587 = arith.addf %582, %586 : vector<16x128xf32>
      %588 = math.tanh %587 : vector<16x128xf32>
      %cst_109 = arith.constant 1.000000e+00 : f32
      %589 = vector.broadcast %cst_109 : f32 to vector<16x128xf32>
      %590 = arith.subf %589, %581 : vector<16x128xf32>
      %591 = arith.mulf %590, %588 : vector<16x128xf32>
      %592 = vector.extract_strided_slice %523 {offsets = [0, 128], sizes = [16, 128], strides = [1, 1]} : vector<16x256xf32> to vector<16x128xf32>
      %593 = arith.mulf %581, %592 : vector<16x128xf32>
      %594 = arith.addf %591, %593 : vector<16x128xf32>
      %595 = tpu.concatenate %565, %594 in 1 : vector<16x128xf32>, vector<16x128xf32> -> vector<16x256xf32>
      %c8_i32 = arith.constant 8 : i32
      %596 = arith.truncf %595 : vector<16x256xf32> to vector<16x256xbf16>
      %c0_110 = arith.constant 0 : index
      %c0_111 = arith.constant 0 : index
      %597 = vector.load %arg6[%c0_110, %c0_111] : memref<256x128xbf16, #tpu.memory_space<vmem>>, vector<256x128xbf16>
      %cst_112 = arith.constant dense<0.000000e+00> : vector<16x128xf32>
      %598 = tpu.matmul %596, %597, %cst_112 {dimension_numbers = #tpu.dot_dimension_numbers<[1], [0], [0], [1], [0, 0, 1, 1], [], []>} : vector<16x256xbf16>, vector<256x128xbf16>, vector<16x128xf32> -> vector<16x128xf32>
      %c0_113 = arith.constant 0 : index
      %c0_114 = arith.constant 0 : index
      %599 = vector.load %arg7[%c0_113, %c0_114] : memref<1x128xf32, #tpu.memory_space<vmem>>, vector<1x128xf32>
      %600 = vector.broadcast %599 : vector<1x128xf32> to vector<16x128xf32>
      %601 = arith.addf %598, %600 : vector<16x128xf32>
      %c0_115 = arith.constant 0 : index
      %c0_116 = arith.constant 0 : index
      %602 = vector.load %arg8[%c0_115, %c0_116] : memref<16x128xf32, #tpu.memory_space<vmem>>, vector<16x128xf32>
      tpu.vector_store %arg8[%c0_115, %c0_116], %601 {strides = array<i32>} : memref<16x128xf32, #tpu.memory_space<vmem>>, vector<16x128xf32>,
    } else {
    }
    return
  }
  func.func @transform_0(%arg0: i32) -> (i32, i32, i32) {
    %c0_i32 = arith.constant 0 : i32
    %c0_i32_0 = arith.constant 0 : i32
    %c0_i32_1 = arith.constant 0 : i32
    return %arg0, %c0_i32, %c0_i32_0 : i32, i32, i32
  }
  func.func @transform_1(%arg0: i32) -> (i32, i32) {
    %c0_i32 = arith.constant 0 : i32
    %c0_i32_0 = arith.constant 0 : i32
    %c0_i32_1 = arith.constant 0 : i32
    return %c0_i32, %c0_i32_0 : i32, i32
  }
  func.func @transform_2(%arg0: i32) -> (i32, i32) {
    %c0_i32 = arith.constant 0 : i32
    %c0_i32_0 = arith.constant 0 : i32
    %c0_i32_1 = arith.constant 0 : i32
    return %c0_i32, %c0_i32_0 : i32, i32
  }
  func.func @transform_3(%arg0: i32) -> (i32, i32) {
    %c0_i32 = arith.constant 0 : i32
    %c0_i32_0 = arith.constant 0 : i32
    %c0_i32_1 = arith.constant 0 : i32
    return %c0_i32, %c0_i32_0 : i32, i32
  }
  func.func @transform_4(%arg0: i32) -> (i32, i32) {
    %c0_i32 = arith.constant 0 : i32
    %c0_i32_0 = arith.constant 0 : i32
    %c0_i32_1 = arith.constant 0 : i32
    return %c0_i32, %c0_i32_0 : i32, i32
  }
  func.func @transform_5(%arg0: i32) -> (i32, i32) {
    %c0_i32 = arith.constant 0 : i32
    %c0_i32_0 = arith.constant 0 : i32
    %c0_i32_1 = arith.constant 0 : i32
    return %c0_i32, %c0_i32_0 : i32, i32
  }
  func.func @transform_6(%arg0: i32) -> (i32, i32) {
    %c0_i32 = arith.constant 0 : i32
    %c0_i32_0 = arith.constant 0 : i32
    %c0_i32_1 = arith.constant 0 : i32
    return %c0_i32, %c0_i32_0 : i32, i32
  }
  func.func @transform_7(%arg0: i32) -> (i32, i32) {
    %c0_i32 = arith.constant 0 : i32
    %c0_i32_0 = arith.constant 0 : i32
    %c0_i32_1 = arith.constant 0 : i32
    return %c0_i32, %c0_i32_0 : i32, i32
  }
}

</mosaic_0001>

<llo_original>
// kernel: tpu_custom_call.1
$region0: #{tpu_custom_call.1}
  #allocation0 [shape = 'u32[]', space=smem, size = 0x4, offset = 0x4, fixed_abs, tag = 'smem constant byte address 0x4 - core index']
  #allocation1 [shape = 'u32[144,128]{1,0:T(1,128)}', space=vmem, size = 0x12000, scoped, tag = 'internal scratch']
  #allocation2 [shape = 'bf16[128,768]{1,0:T(16,128)(2,1)}', space=vmem, size = 0x30000, scoped, tag = 'scratch operand']
  %s0 = inlined_call_operand.hbm [shape: f32[8,16,256], index: 0, kind: input, shape index: {}]
  %s1 = inlined_call_operand.hbm [shape: bf16[256,768], index: 1, kind: input, shape index: {}]
  %s2 = inlined_call_operand.vmem [shape: f32[1,768], index: 2, kind: input, shape index: {}]
  %s3 = inlined_call_operand.hbm [shape: bf16[256,768], index: 3, kind: input, shape index: {}]
  %s4 = inlined_call_operand.vmem [shape: f32[1,256], index: 4, kind: input, shape index: {}]
  %s5 = inlined_call_operand.hbm [shape: bf16[256,128], index: 5, kind: input, shape index: {}]
  %s6 = inlined_call_operand.vmem [shape: f32[1,128], index: 6, kind: input, shape index: {}]
  %s7 = inlined_call_operand.hbm [shape: f32[16,128], index: 7, kind: output, shape index: {}]
  %s8 = sld [smem:[#allocation0]]
  $region81: #{tpu_custom_call.1} parent=0
    _
  %s10 = ssub.s32 1, %s8
  %s11 = scalar_select 0, %s10, %s8
  $region1: #{tpu_custom_call.1} parent=0
    #allocation3 [shape = 'u8[32768]{0}', space=vmem, size = 0x8000, scoped, tag = 'input window, operand 0']
    #allocation4 [shape = 's32[2]{0}', space=sflag, size = 0x8, scoped, tag = 'scoped memory for tpu_custom_call.1']
    #allocation5 [shape = 's32[2]{0}', space=sflag, size = 0x8, scoped, tag = 'scoped memory for tpu_custom_call.1']
    #allocation6 [shape = 'u8[393216]{0}', space=vmem, size = 0x60000, scoped, tag = 'input window, operand 1, single buffered']
    #allocation7 [shape = 's32[1]{0}', space=sflag, size = 0x4, scoped, tag = 'scoped memory for tpu_custom_call.1']
    #allocation8 [shape = 'u8[393216]{0}', space=vmem, size = 0x60000, scoped, tag = 'input window, operand 3, single buffered']
    #allocation9 [shape = 'u8[65536]{0}', space=vmem, size = 0x10000, scoped, tag = 'input window, operand 5, single buffered']
    #allocation10 [shape = 's32[1]{0}', space=sflag, size = 0x4, scoped, tag = 'scoped memory for tpu_custom_call.1']
    #allocation11 [shape = 'u8[8192]{0}', space=vmem, size = 0x2000, scoped, tag = 'output window, operand 0, single buffered']
    %12 = vsyncpa [#allocation4], 0
    %s13 = scalar_lea.sflag [#allocation4], 1
    %14 = vsyncpa %s13, 0
    %15 = vsyncpa [#allocation7], 0
    %16 = vsyncpa [#allocation10], 0
    %17 = vsyncpa [#allocation5], 0
    loop: start=0, step=1, limit=10
    $region2: #{tpu_custom_call.1} parent=1 // loop_pre_header
      _
    $region3: #{tpu_custom_call.1} parent=1 // loop_header
      %s19 = sphi 0, %s23
      %p20 = scmp.ge.s32.totalorder %s19, 10
      %s29 = sphi 0, %s31
      %s32 = sphi 0, %s29
      %s33 = sphi 0, %s32
      %s49 = sphi 0, %s33
      %s53 = sphi 0, %s53
      %s55 = sphi 0, %s53
      %s56 = sphi 0, %s55
      %s70 = sphi 0, %s56
      %s74 = sphi 0, %s74
      %s76 = sphi 0, %s74
      %s77 = sphi 0, %s76
      %s91 = sphi 0, %s77
      %s95 = sphi 0, %s95
      %s97 = sphi 0, %s95
      %s98 = sphi 0, %s97
      %s112 = sphi 0, %s98
      %s116 = sphi 0, %s116
      %s118 = sphi 0, %s116
      %s119 = sphi 0, %s118
      %s133 = sphi 0, %s119
      %s137 = sphi 0, %s137
      %s139 = sphi 0, %s137
      %s140 = sphi 0, %s139
      %s154 = sphi 0, %s140
      %s158 = sphi 0, %s158
      %s160 = sphi 0, %s158
      %s161 = sphi 0, %s160
      %s175 = sphi 0, %s161
      %s179 = sphi 0, %s179
      %s181 = sphi 0, %s179
      %s182 = sphi 0, %s181
      %s196 = sphi 0, %s182
    $region4: #{tpu_custom_call.1} parent=1 // loop_header_branch
      %22 = sbr.rel (%p20) target = $region8
    $region5: #{tpu_custom_call.1} parent=1 // loop_body
      %s24 = ssub.s32 %s19, 1
      %s25 = ssub.s32 %s19, 2
      %s26 = sadd.s32 %s19, 1
      %s27 = ssub.s32 %s19, %s26
      %p28 = scmp.eq.s32.totalorder %s27, 0
      %s30 = sadd.s32 %s29, 1
      %s31 = scalar_select %p28, %s29, %s30
      %p34 = pneg %p28
      %p35 = scmp.eq.s32.totalorder %s19, 7
      %p36 = por %p34, %p35
      %p37 = scmp.ne.s32.totalorder %s29, %s32
      %p38 = scmp.eq.s32.totalorder %s19, 0
      %p39 = por %p37, %p38
      %p40 = scmp.ne.s32.totalorder %s29, %s32
      %p41 = scmp.eq.s32.totalorder %s24, 7
      %p42 = por %p40, %p41
      %p43 = scmp.ne.s32.totalorder %s32, %s33
      %p44 = scmp.eq.s32.totalorder %s24, 0
      %p45 = por %p43, %p44
      %p46 = scmp.ne.s32.totalorder %s32, %s33
      %p47 = scmp.eq.s32.totalorder %s25, 7
      %p48 = por %p46, %p47
      %p50 = scmp.ne.s32.totalorder %s33, %s49
      %p51 = scmp.eq.s32.totalorder %s25, 0
      %p52 = por %p50, %p51
      %s54 = sadd.s32 %s53, 1
      %p57 = scmp.eq.s32.totalorder %s19, 7
      %p58 = scmp.ne.s32.totalorder %s53, %s55
      %p59 = scmp.eq.s32.totalorder %s19, 0
      %p60 = por %p58, %p59
      %p61 = scmp.ne.s32.totalorder %s53, %s55
      %p62 = scmp.eq.s32.totalorder %s24, 7
      %p63 = por %p61, %p62
      %p64 = scmp.ne.s32.totalorder %s55, %s56
      %p65 = scmp.eq.s32.totalorder %s24, 0
      %p66 = por %p64, %p65
      %p67 = scmp.ne.s32.totalorder %s55, %s56
      %p68 = scmp.eq.s32.totalorder %s25, 7
      %p69 = por %p67, %p68
      %p71 = scmp.ne.s32.totalorder %s56, %s70
      %p72 = scmp.eq.s32.totalorder %s25, 0
      %p73 = por %p71, %p72
      %s75 = sadd.s32 %s74, 1
      %p78 = scmp.eq.s32.totalorder %s19, 7
      %p79 = scmp.ne.s32.totalorder %s74, %s76
      %p80 = scmp.eq.s32.totalorder %s19, 0
      %p81 = por %p79, %p80
      %p82 = scmp.ne.s32.totalorder %s74, %s76
      %p83 = scmp.eq.s32.totalorder %s24, 7
      %p84 = por %p82, %p83
      %p85 = scmp.ne.s32.totalorder %s76, %s77
      %p86 = scmp.eq.s32.totalorder %s24, 0
      %p87 = por %p85, %p86
      %p88 = scmp.ne.s32.totalorder %s76, %s77
      %p89 = scmp.eq.s32.totalorder %s25, 7
      %p90 = por %p88, %p89
      %p92 = scmp.ne.s32.totalorder %s77, %s91
      %p93 = scmp.eq.s32.totalorder %s25, 0
      %p94 = por %p92, %p93
      %s96 = sadd.s32 %s95, 1
      %p99 = scmp.eq.s32.totalorder %s19, 7
      %p100 = scmp.ne.s32.totalorder %s95, %s97
      %p101 = scmp.eq.s32.totalorder %s19, 0
      %p102 = por %p100, %p101
      %p103 = scmp.ne.s32.totalorder %s95, %s97
      %p104 = scmp.eq.s32.totalorder %s24, 7
      %p105 = por %p103, %p104
      %p106 = scmp.ne.s32.totalorder %s97, %s98
      %p107 = scmp.eq.s32.totalorder %s24, 0
      %p108 = por %p106, %p107
      %p109 = scmp.ne.s32.totalorder %s97, %s98
      %p110 = scmp.eq.s32.totalorder %s25, 7
      %p111 = por %p109, %p110
      %p113 = scmp.ne.s32.totalorder %s98, %s112
      %p114 = scmp.eq.s32.totalorder %s25, 0
      %p115 = por %p113, %p114
      %s117 = sadd.s32 %s116, 1
      %p120 = scmp.eq.s32.totalorder %s19, 7
      %p121 = scmp.ne.s32.totalorder %s116, %s118
      %p122 = scmp.eq.s32.totalorder %s19, 0
      %p123 = por %p121, %p122
      %p124 = scmp.ne.s32.totalorder %s116, %s118
      %p125 = scmp.eq.s32.totalorder %s24, 7
      %p126 = por %p124, %p125
      %p127 = scmp.ne.s32.totalorder %s118, %s119
      %p128 = scmp.eq.s32.totalorder %s24, 0
      %p129 = por %p127, %p128
      %p130 = scmp.ne.s32.totalorder %s118, %s119
      %p131 = scmp.eq.s32.totalorder %s25, 7
      %p132 = por %p130, %p131
      %p134 = scmp.ne.s32.totalorder %s119, %s133
      %p135 = scmp.eq.s32.totalorder %s25, 0
      %p136 = por %p134, %p135
      %s138 = sadd.s32 %s137, 1
      %p141 = scmp.eq.s32.totalorder %s19, 7
      %p142 = scmp.ne.s32.totalorder %s137, %s139
      %p143 = scmp.eq.s32.totalorder %s19, 0
      %p144 = por %p142, %p143
      %p145 = scmp.ne.s32.totalorder %s137, %s139
      %p146 = scmp.eq.s32.totalorder %s24, 7
      %p147 = por %p145, %p146
      %p148 = scmp.ne.s32.totalorder %s139, %s140
      %p149 = scmp.eq.s32.totalorder %s24, 0
      %p150 = por %p148, %p149
      %p151 = scmp.ne.s32.totalorder %s139, %s140
      %p152 = scmp.eq.s32.totalorder %s25, 7
      %p153 = por %p151, %p152
      %p155 = scmp.ne.s32.totalorder %s140, %s154
      %p156 = scmp.eq.s32.totalorder %s25, 0
      %p157 = por %p155, %p156
      %s159 = sadd.s32 %s158, 1
      %p162 = scmp.eq.s32.totalorder %s19, 7
      %p163 = scmp.ne.s32.totalorder %s158, %s160
      %p164 = scmp.eq.s32.totalorder %s19, 0
      %p165 = por %p163, %p164
      %p166 = scmp.ne.s32.totalorder %s158, %s160
      %p167 = scmp.eq.s32.totalorder %s24, 7
      %p168 = por %p166, %p167
      %p169 = scmp.ne.s32.totalorder %s160, %s161
      %p170 = scmp.eq.s32.totalorder %s24, 0
      %p171 = por %p169, %p170
      %p172 = scmp.ne.s32.totalorder %s160, %s161
      %p173 = scmp.eq.s32.totalorder %s25, 7
      %p174 = por %p172, %p173
      %p176 = scmp.ne.s32.totalorder %s161, %s175
      %p177 = scmp.eq.s32.totalorder %s25, 0
      %p178 = por %p176, %p177
      %s180 = sadd.s32 %s179, 1
      %p183 = scmp.eq.s32.totalorder %s19, 7
      %p184 = scmp.ne.s32.totalorder %s179, %s181
      %p185 = scmp.eq.s32.totalorder %s19, 0
      %p186 = por %p184, %p185
      %p187 = scmp.ne.s32.totalorder %s179, %s181
      %p188 = scmp.eq.s32.totalorder %s24, 7
      %p189 = por %p187, %p188
      %p190 = scmp.ne.s32.totalorder %s181, %s182
      %p191 = scmp.eq.s32.totalorder %s24, 0
      %p192 = por %p190, %p191
      %p193 = scmp.ne.s32.totalorder %s181, %s182
      %p194 = scmp.eq.s32.totalorder %s25, 7
      %p195 = por %p193, %p194
      %p197 = scmp.ne.s32.totalorder %s182, %s196
      %p198 = scmp.eq.s32.totalorder %s25, 0
      %p199 = por %p197, %p198
      %p200 = scmp.le.s32.totalorder 1, %s19
      %p201 = scmp.lt.s32.totalorder %s19, 9
      %p202 = pnand %p200, %p201
      %p203 = pneg %p202
      // Predicated region
      $region9: #{tpu_custom_call.1} parent=5 // pred_check
        _
      $region10: #{tpu_custom_call.1} parent=5 // pred_check_branch
        %205 = sbr.rel (%p202) target = $region12
      $region11: #{tpu_custom_call.1} parent=5 // pred_region
        %s206 = ssub.s32 %s19, 1
        // Predicated region
        $region13: #{tpu_custom_call.1} parent=11 // pred_check
          %p207 = pneg %p66
        $region14: #{tpu_custom_call.1} parent=11 // pred_check_branch
          %209 = sbr.rel (%p207) target = $region16
        $region15: #{tpu_custom_call.1} parent=11 // pred_region
          %s211 = ssub.s32 12288, 12288
          %212 = vsyncadd [#allocation7], %s211
          %s213 = sshll.u32 [#allocation6], 4
          %s214 = int_to_ptr.vmem [resolvable:$true] %s213
          %219 = dma.hbm_to_vmem [thread:$0]  %s1, 12288, %s214, [#allocation7], 384, 384, 24
        $region16: #{tpu_custom_call.1} parent=11 // pred_fallthru
          _
        // Predicated region
        $region17: #{tpu_custom_call.1} parent=11 // pred_check
          %p220 = pneg %p87
        $region18: #{tpu_custom_call.1} parent=11 // pred_check_branch
          %222 = sbr.rel (%p220) target = $region20
        $region19: #{tpu_custom_call.1} parent=11 // pred_region
          _
        $region20: #{tpu_custom_call.1} parent=11 // pred_fallthru
          _
        // Predicated region
        $region21: #{tpu_custom_call.1} parent=11 // pred_check
          %p223 = pneg %p108
        $region22: #{tpu_custom_call.1} parent=11 // pred_check_branch
          %225 = sbr.rel (%p223) target = $region24
        $region23: #{tpu_custom_call.1} parent=11 // pred_region
          %s227 = ssub.s32 12288, 12288
          %228 = vsyncadd [#allocation7], %s227
          %s229 = sshll.u32 [#allocation8], 4
          %s230 = int_to_ptr.vmem [resolvable:$true] %s229
          %235 = dma.hbm_to_vmem [thread:$0]  %s3, 12288, %s230, [#allocation7], 384, 384, 24
        $region24: #{tpu_custom_call.1} parent=11 // pred_fallthru
          _
        // Predicated region
        $region25: #{tpu_custom_call.1} parent=11 // pred_check
          %p236 = pneg %p129
        $region26: #{tpu_custom_call.1} parent=11 // pred_check_branch
          %238 = sbr.rel (%p236) target = $region28
        $region27: #{tpu_custom_call.1} parent=11 // pred_region
          _
        $region28: #{tpu_custom_call.1} parent=11 // pred_fallthru
          _
        // Predicated region
        $region29: #{tpu_custom_call.1} parent=11 // pred_check
          %p239 = pneg %p150
        $region30: #{tpu_custom_call.1} parent=11 // pred_check_branch
          %241 = sbr.rel (%p239) target = $region32
        $region31: #{tpu_custom_call.1} parent=11 // pred_region
          %s243 = ssub.s32 2048, 2048
          %244 = vsyncadd [#allocation10], %s243
          %s245 = sshll.u32 [#allocation9], 4
          %s246 = int_to_ptr.vmem [resolvable:$true] %s245
          %251 = dma.hbm_to_vmem [thread:$0]  %s5, 2048, %s246, [#allocation10], 64, 64, 4
        $region32: #{tpu_custom_call.1} parent=11 // pred_fallthru
          _
        // Predicated region
        $region33: #{tpu_custom_call.1} parent=11 // pred_check
          %p252 = pneg %p171
        $region34: #{tpu_custom_call.1} parent=11 // pred_check_branch
          %254 = sbr.rel (%p252) target = $region36
        $region35: #{tpu_custom_call.1} parent=11 // pred_region
          _
        $region36: #{tpu_custom_call.1} parent=11 // pred_fallthru
          _
      $region12: #{tpu_custom_call.1} parent=5 // pred_fallthru
        _
      %p255 = scmp.lt.s32.totalorder %s19, 8
      // Predicated region
      $region37: #{tpu_custom_call.1} parent=5 // pred_check
        %p256 = pneg %p255
      $region38: #{tpu_custom_call.1} parent=5 // pred_check_branch
        %258 = sbr.rel (%p256) target = $region40
      $region39: #{tpu_custom_call.1} parent=5 // pred_region
        // Predicated region
        $region41: #{tpu_custom_call.1} parent=39 // pred_check
          %p259 = pneg %p39
        $region42: #{tpu_custom_call.1} parent=39 // pred_check_branch
          %261 = sbr.rel (%p259) target = $region44
        $region43: #{tpu_custom_call.1} parent=39 // pred_region
          %s262 = sand.u32 %s29, 1
          %s263 = scalar_lea.sflag [#allocation4], %s262
          %s264 = sand.u32 %s29, 1
          %s265 = smul.addr %s264, 32
          %s266 = scalar_lea.vmem [#allocation3], %s265
          %s268 = ssub.s32 512, 512
          %269 = vsyncadd %s263, %s268
          %s270 = smul.addr %s19, 4
          %s271 = smul.addr %s270, 128
          %s272 = scalar_lea.hbm %s0, %s271
          %s273 = sshll.u32 %s266, 4
          %s274 = int_to_ptr.vmem [resolvable:$true] %s273
          %279 = dma.hbm_to_vmem [thread:$0]  %s272, 512, %s274, %s263, 256, 256, 16
        $region44: #{tpu_custom_call.1} parent=39 // pred_fallthru
          _
      $region40: #{tpu_custom_call.1} parent=5 // pred_fallthru
        _
      %p280 = scmp.le.s32.totalorder 1, %s19
      %p281 = scmp.lt.s32.totalorder %s19, 9
      %p282 = pnand %p280, %p281
      %p283 = pneg %p282
      // Predicated region
      $region45: #{tpu_custom_call.1} parent=5 // pred_check
        _
      $region46: #{tpu_custom_call.1} parent=5 // pred_check_branch
        %285 = sbr.rel (%p282) target = $region48
      $region47: #{tpu_custom_call.1} parent=5 // pred_region
        %s286 = ssub.s32 %s19, 1
        %s287 = sand.u32 %s32, 1
        %s288 = scalar_lea.sflag [#allocation4], %s287
        %s289 = sand.u32 %s32, 1
        %s290 = smul.addr %s289, 32
        %s291 = scalar_lea.vmem [#allocation3], %s290
        // Predicated region
        $region49: #{tpu_custom_call.1} parent=47 // pred_check
          %p292 = pneg %p45
        $region50: #{tpu_custom_call.1} parent=47 // pred_check_branch
          %294 = sbr.rel (%p292) target = $region52
        $region51: #{tpu_custom_call.1} parent=47 // pred_region
          %295 = dma.done %s288, 512
        $region52: #{tpu_custom_call.1} parent=47 // pred_fallthru
          _
        // Predicated region
        $region53: #{tpu_custom_call.1} parent=47 // pred_check
          %p296 = pneg %p66
        $region54: #{tpu_custom_call.1} parent=47 // pred_check_branch
          %298 = sbr.rel (%p296) target = $region56
        $region55: #{tpu_custom_call.1} parent=47 // pred_region
          %299 = dma.done [#allocation7], 12288
        $region56: #{tpu_custom_call.1} parent=47 // pred_fallthru
          _
        // Predicated region
        $region57: #{tpu_custom_call.1} parent=47 // pred_check
          %p300 = pneg %p108
        $region58: #{tpu_custom_call.1} parent=47 // pred_check_branch
          %302 = sbr.rel (%p300) target = $region60
        $region59: #{tpu_custom_call.1} parent=47 // pred_region
          %303 = dma.done [#allocation7], 12288
        $region60: #{tpu_custom_call.1} parent=47 // pred_fallthru
          _
        // Predicated region
        $region61: #{tpu_custom_call.1} parent=47 // pred_check
          %p304 = pneg %p150
        $region62: #{tpu_custom_call.1} parent=47 // pred_check_branch
          %306 = sbr.rel (%p304) target = $region64
        $region63: #{tpu_custom_call.1} parent=47 // pred_region
          %307 = dma.done [#allocation10], 2048
        $region64: #{tpu_custom_call.1} parent=47 // pred_fallthru
          _
        %s308 = sand.u32 %s32, 1
        %s309 = scalar_lea.sflag [#allocation4], %s308
        %s310 = sand.u32 %s32, 1
        %s311 = smul.addr %s310, 32
        %s312 = scalar_lea.vmem [#allocation3], %s311
        %p313 = pneg %p45
        %p314 = pneg %p42
        %p315 = pneg %p66
        %p316 = pneg %p63
        %p317 = pneg %p87
        %p318 = pneg %p84
        %p319 = pneg %p108
        %p320 = pneg %p105
        %p321 = pneg %p129
        %p322 = pneg %p126
        %p323 = pneg %p150
        %p324 = pneg %p147
        %p325 = pneg %p171
        %p326 = pneg %p168
        %p327 = pneg %p192
        %p328 = pneg %p189
        %v330 = vld [vmem:[%s291] sm:$0xff]
        %v331 = vld [vmem:[%s291 + $0x8] sm:$0xff]
        %v332 = vld [vmem:[%s291 + $0x10] sm:$0xff]
        %v333 = vld [vmem:[%s291 + $0x18] sm:$0xff]
        %v334 = vpack.c.bf16 %v332, %v330
        %v335 = vpack.c.bf16 %v333, %v331
        %v336 = vld [vmem:[#allocation6] sm:$0xff]
        %v337 = vld [vmem:[#allocation6 + $0x8] sm:$0xff]
        %v338 = vld [vmem:[#allocation6 + $0x10] sm:$0xff]
        %v339 = vld [vmem:[#allocation6 + $0x18] sm:$0xff]
        %v340 = vld [vmem:[#allocation6 + $0x20] sm:$0xff]
        %v341 = vld [vmem:[#allocation6 + $0x28] sm:$0xff]
        %v342 = vld [vmem:[#allocation6 + $0x30] sm:$0xff]
        %v343 = vld [vmem:[#allocation6 + $0x38] sm:$0xff]
        %v344 = vld [vmem:[#allocation6 + $0x40] sm:$0xff]
        %v345 = vld [vmem:[#allocation6 + $0x48] sm:$0xff]
        %v346 = vld [vmem:[#allocation6 + $0x50] sm:$0xff]
        %v347 = vld [vmem:[#allocation6 + $0x58] sm:$0xff]
        %v348 = vld [vmem:[#allocation6 + $0x60] sm:$0xff]
        %v349 = vld [vmem:[#allocation6 + $0x68] sm:$0xff]
        %v350 = vld [vmem:[#allocation6 + $0x70] sm:$0xff]
        %v351 = vld [vmem:[#allocation6 + $0x78] sm:$0xff]
        %v352 = vld [vmem:[#allocation6 + $0x80] sm:$0xff]
        %v353 = vld [vmem:[#allocation6 + $0x88] sm:$0xff]
        %v354 = vld [vmem:[#allocation6 + $0x90] sm:$0xff]
        %v355 = vld [vmem:[#allocation6 + $0x98] sm:$0xff]
        %v356 = vld [vmem:[#allocation6 + $0xa0] sm:$0xff]
        %v357 = vld [vmem:[#allocation6 + $0xa8] sm:$0xff]
        %v358 = vld [vmem:[#allocation6 + $0xb0] sm:$0xff]
        %v359 = vld [vmem:[#allocation6 + $0xb8] sm:$0xff]
        %v360 = vld [vmem:[#allocation6 + $0xc0] sm:$0xff]
        %v361 = vld [vmem:[#allocation6 + $0xc8] sm:$0xff]
        %v362 = vld [vmem:[#allocation6 + $0xd0] sm:$0xff]
        %v363 = vld [vmem:[#allocation6 + $0xd8] sm:$0xff]
        %v364 = vld [vmem:[#allocation6 + $0xe0] sm:$0xff]
        %v365 = vld [vmem:[#allocation6 + $0xe8] sm:$0xff]
        %v366 = vld [vmem:[#allocation6 + $0xf0] sm:$0xff]
        %v367 = vld [vmem:[#allocation6 + $0xf8] sm:$0xff]
        %v368 = vld [vmem:[#allocation6 + $0x100] sm:$0xff]
        %v369 = vld [vmem:[#allocation6 + $0x108] sm:$0xff]
        %v370 = vld [vmem:[#allocation6 + $0x110] sm:$0xff]
        %v371 = vld [vmem:[#allocation6 + $0x118] sm:$0xff]
        %v372 = vld [vmem:[#allocation6 + $0x120] sm:$0xff]
        %v373 = vld [vmem:[#allocation6 + $0x128] sm:$0xff]
        %v374 = vld [vmem:[#allocation6 + $0x130] sm:$0xff]
        %v375 = vld [vmem:[#allocation6 + $0x138] sm:$0xff]
        %v376 = vld [vmem:[#allocation6 + $0x140] sm:$0xff]
        %v377 = vld [vmem:[#allocation6 + $0x148] sm:$0xff]
        %v378 = vld [vmem:[#allocation6 + $0x150] sm:$0xff]
        %v379 = vld [vmem:[#allocation6 + $0x158] sm:$0xff]
        %v380 = vld [vmem:[#allocation6 + $0x160] sm:$0xff]
        %v381 = vld [vmem:[#allocation6 + $0x168] sm:$0xff]
        %v382 = vld [vmem:[#allocation6 + $0x170] sm:$0xff]
        %v383 = vld [vmem:[#allocation6 + $0x178] sm:$0xff]
        %v384 = vld [vmem:[#allocation6 + $0x180] sm:$0xff]
        %v385 = vld [vmem:[#allocation6 + $0x188] sm:$0xff]
        %v386 = vld [vmem:[#allocation6 + $0x190] sm:$0xff]
        %v387 = vld [vmem:[#allocation6 + $0x198] sm:$0xff]
        %v388 = vld [vmem:[#allocation6 + $0x1a0] sm:$0xff]
        %v389 = vld [vmem:[#allocation6 + $0x1a8] sm:$0xff]
        %v390 = vld [vmem:[#allocation6 + $0x1b0] sm:$0xff]
        %v391 = vld [vmem:[#allocation6 + $0x1b8] sm:$0xff]
        %v392 = vld [vmem:[#allocation6 + $0x1c0] sm:$0xff]
        %v393 = vld [vmem:[#allocation6 + $0x1c8] sm:$0xff]
        %v394 = vld [vmem:[#allocation6 + $0x1d0] sm:$0xff]
        %v395 = vld [vmem:[#allocation6 + $0x1d8] sm:$0xff]
        %v396 = vld [vmem:[#allocation6 + $0x1e0] sm:$0xff]
        %v397 = vld [vmem:[#allocation6 + $0x1e8] sm:$0xff]
        %v398 = vld [vmem:[#allocation6 + $0x1f0] sm:$0xff]
        %v399 = vld [vmem:[#allocation6 + $0x1f8] sm:$0xff]
        %v400 = vld [vmem:[#allocation6 + $0x200] sm:$0xff]
        %v401 = vld [vmem:[#allocation6 + $0x208] sm:$0xff]
        %v402 = vld [vmem:[#allocation6 + $0x210] sm:$0xff]
        %v403 = vld [vmem:[#allocation6 + $0x218] sm:$0xff]
        %v404 = vld [vmem:[#allocation6 + $0x220] sm:$0xff]
        %v405 = vld [vmem:[#allocation6 + $0x228] sm:$0xff]
        %v406 = vld [vmem:[#allocation6 + $0x230] sm:$0xff]
        %v407 = vld [vmem:[#allocation6 + $0x238] sm:$0xff]
        %v408 = vld [vmem:[#allocation6 + $0x240] sm:$0xff]
        %v409 = vld [vmem:[#allocation6 + $0x248] sm:$0xff]
        %v410 = vld [vmem:[#allocation6 + $0x250] sm:$0xff]
        %v411 = vld [vmem:[#allocation6 + $0x258] sm:$0xff]
        %v412 = vld [vmem:[#allocation6 + $0x260] sm:$0xff]
        %v413 = vld [vmem:[#allocation6 + $0x268] sm:$0xff]
        %v414 = vld [vmem:[#allocation6 + $0x270] sm:$0xff]
        %v415 = vld [vmem:[#allocation6 + $0x278] sm:$0xff]
        %v416 = vld [vmem:[#allocation6 + $0x280] sm:$0xff]
        %v417 = vld [vmem:[#allocation6 + $0x288] sm:$0xff]
        %v418 = vld [vmem:[#allocation6 + $0x290] sm:$0xff]
        %v419 = vld [vmem:[#allocation6 + $0x298] sm:$0xff]
        %v420 = vld [vmem:[#allocation6 + $0x2a0] sm:$0xff]
        %v421 = vld [vmem:[#allocation6 + $0x2a8] sm:$0xff]
        %v422 = vld [vmem:[#allocation6 + $0x2b0] sm:$0xff]
        %v423 = vld [vmem:[#allocation6 + $0x2b8] sm:$0xff]
        %v424 = vld [vmem:[#allocation6 + $0x2c0] sm:$0xff]
        %v425 = vld [vmem:[#allocation6 + $0x2c8] sm:$0xff]
        %v426 = vld [vmem:[#allocation6 + $0x2d0] sm:$0xff]
        %v427 = vld [vmem:[#allocation6 + $0x2d8] sm:$0xff]
        %v428 = vld [vmem:[#allocation6 + $0x2e0] sm:$0xff]
        %v429 = vld [vmem:[#allocation6 + $0x2e8] sm:$0xff]
        %v430 = vld [vmem:[#allocation6 + $0x2f0] sm:$0xff]
        %v431 = vld [vmem:[#allocation6 + $0x2f8] sm:$0xff]
        %v432 = vld [vmem:[%s2] sm:$0x3f]
        %v434 = vlaneseq
        %v435 = vshrl.u32 %v434, 7
        %v436 = vsub.s32 0, %v435
        %v437 = vrot.slane %v432, %v436
        %v438 = vlaneseq
        %v439 = vshrl.u32 %v438, 7
        %v440 = vsub.s32 1, %v439
        %v441 = vrot.slane %v432, %v440
        %v442 = vlaneseq
        %v443 = vshrl.u32 %v442, 7
        %v444 = vsub.s32 2, %v443
        %v445 = vrot.slane %v432, %v444
        %v446 = vlaneseq
        %v447 = vshrl.u32 %v446, 7
        %v448 = vsub.s32 3, %v447
        %v449 = vrot.slane %v432, %v448
        %v450 = vlaneseq
        %v451 = vshrl.u32 %v450, 7
        %v452 = vsub.s32 4, %v451
        %v453 = vrot.slane %v432, %v452
        %v454 = vlaneseq
        %v455 = vshrl.u32 %v454, 7
        %v456 = vsub.s32 5, %v455
        %v457 = vrot.slane %v432, %v456
        %v560 = vunpack.c.l.b16 %v336
        %v561 = vunpack.c.h.b16 %v336
        %v562 = vunpack.c.l.b16 %v337
        %v563 = vunpack.c.h.b16 %v337
        %v564 = vunpack.c.l.b16 %v338
        %v565 = vunpack.c.h.b16 %v338
        %v566 = vunpack.c.l.b16 %v339
        %v567 = vunpack.c.h.b16 %v339
        %v568 = vunpack.c.l.b16 %v340
        %v569 = vunpack.c.h.b16 %v340
        %v570 = vunpack.c.l.b16 %v341
        %v571 = vunpack.c.h.b16 %v341
        %v572 = vunpack.c.l.b16 %v342
        %v573 = vunpack.c.h.b16 %v342
        %v574 = vunpack.c.l.b16 %v343
        %v575 = vunpack.c.h.b16 %v343
        %v576 = vunpack.c.l.b16 %v344
        %v577 = vunpack.c.h.b16 %v344
        %v578 = vunpack.c.l.b16 %v345
        %v579 = vunpack.c.h.b16 %v345
        %v580 = vunpack.c.l.b16 %v346
        %v581 = vunpack.c.h.b16 %v346
        %v582 = vunpack.c.l.b16 %v347
        %v583 = vunpack.c.h.b16 %v347
        %v584 = vunpack.c.l.b16 %v348
        %v585 = vunpack.c.h.b16 %v348
        %v586 = vunpack.c.l.b16 %v349
        %v587 = vunpack.c.h.b16 %v349
        %v588 = vunpack.c.l.b16 %v350
        %v589 = vunpack.c.h.b16 %v350
        %v590 = vunpack.c.l.b16 %v351
        %v591 = vunpack.c.h.b16 %v351
        %v592 = vunpack.c.l.b16 %v352
        %v593 = vunpack.c.h.b16 %v352
        %v594 = vunpack.c.l.b16 %v353
        %v595 = vunpack.c.h.b16 %v353
        %v596 = vunpack.c.l.b16 %v354
        %v597 = vunpack.c.h.b16 %v354
        %v598 = vunpack.c.l.b16 %v355
        %v599 = vunpack.c.h.b16 %v355
        %v600 = vunpack.c.l.b16 %v356
        %v601 = vunpack.c.h.b16 %v356
        %v602 = vunpack.c.l.b16 %v357
        %v603 = vunpack.c.h.b16 %v357
        %v604 = vunpack.c.l.b16 %v358
        %v605 = vunpack.c.h.b16 %v358
        %v606 = vunpack.c.l.b16 %v359
        %v607 = vunpack.c.h.b16 %v359
        %v608 = vunpack.c.l.b16 %v360
        %v609 = vunpack.c.h.b16 %v360
        %v610 = vunpack.c.l.b16 %v361
        %v611 = vunpack.c.h.b16 %v361
        %v612 = vunpack.c.l.b16 %v362
        %v613 = vunpack.c.h.b16 %v362
        %v614 = vunpack.c.l.b16 %v363
        %v615 = vunpack.c.h.b16 %v363
        %v616 = vunpack.c.l.b16 %v364
        %v617 = vunpack.c.h.b16 %v364
        %v618 = vunpack.c.l.b16 %v365
        %v619 = vunpack.c.h.b16 %v365
        %v620 = vunpack.c.l.b16 %v366
        %v621 = vunpack.c.h.b16 %v366
        %v622 = vunpack.c.l.b16 %v367
        %v623 = vunpack.c.h.b16 %v367
        %v624 = vunpack.c.l.b16 %v368
        %v625 = vunpack.c.h.b16 %v368
        %v626 = vunpack.c.l.b16 %v369
        %v627 = vunpack.c.h.b16 %v369
        %v628 = vunpack.c.l.b16 %v370
        %v629 = vunpack.c.h.b16 %v370
        %v630 = vunpack.c.l.b16 %v371
        %v631 = vunpack.c.h.b16 %v371
        %v632 = vunpack.c.l.b16 %v372
        %v633 = vunpack.c.h.b16 %v372
        %v634 = vunpack.c.l.b16 %v373
        %v635 = vunpack.c.h.b16 %v373
        %v636 = vunpack.c.l.b16 %v374
        %v637 = vunpack.c.h.b16 %v374
        %v638 = vunpack.c.l.b16 %v375
        %v639 = vunpack.c.h.b16 %v375
        %v640 = vunpack.c.l.b16 %v376
        %v641 = vunpack.c.h.b16 %v376
        %v642 = vunpack.c.l.b16 %v377
        %v643 = vunpack.c.h.b16 %v377
        %v644 = vunpack.c.l.b16 %v378
        %v645 = vunpack.c.h.b16 %v378
        %v646 = vunpack.c.l.b16 %v379
        %v647 = vunpack.c.h.b16 %v379
        %v648 = vunpack.c.l.b16 %v380
        %v649 = vunpack.c.h.b16 %v380
        %v650 = vunpack.c.l.b16 %v381
        %v651 = vunpack.c.h.b16 %v381
        %v652 = vunpack.c.l.b16 %v382
        %v653 = vunpack.c.h.b16 %v382
        %v654 = vunpack.c.l.b16 %v383
        %v655 = vunpack.c.h.b16 %v383
        %v656 = vunpack.c.l.b16 %v384
        %v657 = vunpack.c.h.b16 %v384
        %v658 = vunpack.c.l.b16 %v385
        %v659 = vunpack.c.h.b16 %v385
        %v660 = vunpack.c.l.b16 %v386
        %v661 = vunpack.c.h.b16 %v386
        %v662 = vunpack.c.l.b16 %v387
        %v663 = vunpack.c.h.b16 %v387
        %v664 = vunpack.c.l.b16 %v388
        %v665 = vunpack.c.h.b16 %v388
        %v666 = vunpack.c.l.b16 %v389
        %v667 = vunpack.c.h.b16 %v389
        %v668 = vunpack.c.l.b16 %v390
        %v669 = vunpack.c.h.b16 %v390
        %v670 = vunpack.c.l.b16 %v391
        %v671 = vunpack.c.h.b16 %v391
        %v672 = vunpack.c.l.b16 %v392
        %v673 = vunpack.c.h.b16 %v392
        %v674 = vunpack.c.l.b16 %v393
        %v675 = vunpack.c.h.b16 %v393
        %v676 = vunpack.c.l.b16 %v394
        %v677 = vunpack.c.h.b16 %v394
        %v678 = vunpack.c.l.b16 %v395
        %v679 = vunpack.c.h.b16 %v395
        %v680 = vunpack.c.l.b16 %v396
        %v681 = vunpack.c.h.b16 %v396
        %v682 = vunpack.c.l.b16 %v397
        %v683 = vunpack.c.h.b16 %v397
        %v684 = vunpack.c.l.b16 %v398
        %v685 = vunpack.c.h.b16 %v398
        %v686 = vunpack.c.l.b16 %v399
        %v687 = vunpack.c.h.b16 %v399
        %v688 = vunpack.c.l.b16 %v400
        %v689 = vunpack.c.h.b16 %v400
        %v690 = vunpack.c.l.b16 %v401
        %v691 = vunpack.c.h.b16 %v401
        %v692 = vunpack.c.l.b16 %v402
        %v693 = vunpack.c.h.b16 %v402
        %v694 = vunpack.c.l.b16 %v403
        %v695 = vunpack.c.h.b16 %v403
        %v696 = vunpack.c.l.b16 %v404
        %v697 = vunpack.c.h.b16 %v404
        %v698 = vunpack.c.l.b16 %v405
        %v699 = vunpack.c.h.b16 %v405
        %v700 = vunpack.c.l.b16 %v406
        %v701 = vunpack.c.h.b16 %v406
        %v702 = vunpack.c.l.b16 %v407
        %v703 = vunpack.c.h.b16 %v407
        %v704 = vunpack.c.l.b16 %v408
        %v705 = vunpack.c.h.b16 %v408
        %v706 = vunpack.c.l.b16 %v409
        %v707 = vunpack.c.h.b16 %v409
        %v708 = vunpack.c.l.b16 %v410
        %v709 = vunpack.c.h.b16 %v410
        %v710 = vunpack.c.l.b16 %v411
        %v711 = vunpack.c.h.b16 %v411
        %v712 = vunpack.c.l.b16 %v412
        %v713 = vunpack.c.h.b16 %v412
        %v714 = vunpack.c.l.b16 %v413
        %v715 = vunpack.c.h.b16 %v413
        %v716 = vunpack.c.l.b16 %v414
        %v717 = vunpack.c.h.b16 %v414
        %v718 = vunpack.c.l.b16 %v415
        %v719 = vunpack.c.h.b16 %v415
        %v720 = vunpack.c.l.b16 %v416
        %v721 = vunpack.c.h.b16 %v416
        %v722 = vunpack.c.l.b16 %v417
        %v723 = vunpack.c.h.b16 %v417
        %v724 = vunpack.c.l.b16 %v418
        %v725 = vunpack.c.h.b16 %v418
        %v726 = vunpack.c.l.b16 %v419
        %v727 = vunpack.c.h.b16 %v419
        %v728 = vunpack.c.l.b16 %v420
        %v729 = vunpack.c.h.b16 %v420
        %v730 = vunpack.c.l.b16 %v421
        %v731 = vunpack.c.h.b16 %v421
        %v732 = vunpack.c.l.b16 %v422
        %v733 = vunpack.c.h.b16 %v422
        %v734 = vunpack.c.l.b16 %v423
        %v735 = vunpack.c.h.b16 %v423
        %v736 = vunpack.c.l.b16 %v424
        %v737 = vunpack.c.h.b16 %v424
        %v738 = vunpack.c.l.b16 %v425
        %v739 = vunpack.c.h.b16 %v425
        %v740 = vunpack.c.l.b16 %v426
        %v741 = vunpack.c.h.b16 %v426
        %v742 = vunpack.c.l.b16 %v427
        %v743 = vunpack.c.h.b16 %v427
        %v744 = vunpack.c.l.b16 %v428
        %v745 = vunpack.c.h.b16 %v428
        %v746 = vunpack.c.l.b16 %v429
        %v747 = vunpack.c.h.b16 %v429
        %v748 = vunpack.c.l.b16 %v430
        %v749 = vunpack.c.h.b16 %v430
        %v750 = vunpack.c.l.b16 %v431
        %v751 = vunpack.c.h.b16 %v431
        %v752 = vpack.c.b16 %v566, %v560
        %v753 = vpack.c.b16 %v567, %v561
        %v754 = vpack.c.b16 %v568, %v562
        %v755 = vpack.c.b16 %v569, %v563
        %v756 = vpack.c.b16 %v570, %v564
        %v757 = vpack.c.b16 %v571, %v565
        %v758 = vpack.c.b16 %v578, %v572
        %v759 = vpack.c.b16 %v579, %v573
        %v760 = vpack.c.b16 %v580, %v574
        %v761 = vpack.c.b16 %v581, %v575
        %v762 = vpack.c.b16 %v582, %v576
        %v763 = vpack.c.b16 %v583, %v577
        %v764 = vpack.c.b16 %v590, %v584
        %v765 = vpack.c.b16 %v591, %v585
        %v766 = vpack.c.b16 %v592, %v586
        %v767 = vpack.c.b16 %v593, %v587
        %v768 = vpack.c.b16 %v594, %v588
        %v769 = vpack.c.b16 %v595, %v589
        %v770 = vpack.c.b16 %v602, %v596
        %v771 = vpack.c.b16 %v603, %v597
        %v772 = vpack.c.b16 %v604, %v598
        %v773 = vpack.c.b16 %v605, %v599
        %v774 = vpack.c.b16 %v606, %v600
        %v775 = vpack.c.b16 %v607, %v601
        %v776 = vpack.c.b16 %v614, %v608
        %v777 = vpack.c.b16 %v615, %v609
        %v778 = vpack.c.b16 %v616, %v610
        %v779 = vpack.c.b16 %v617, %v611
        %v780 = vpack.c.b16 %v618, %v612
        %v781 = vpack.c.b16 %v619, %v613
        %v782 = vpack.c.b16 %v626, %v620
        %v783 = vpack.c.b16 %v627, %v621
        %v784 = vpack.c.b16 %v628, %v622
        %v785 = vpack.c.b16 %v629, %v623
        %v786 = vpack.c.b16 %v630, %v624
        %v787 = vpack.c.b16 %v631, %v625
        %v788 = vpack.c.b16 %v638, %v632
        %v789 = vpack.c.b16 %v639, %v633
        %v790 = vpack.c.b16 %v640, %v634
        %v791 = vpack.c.b16 %v641, %v635
        %v792 = vpack.c.b16 %v642, %v636
        %v793 = vpack.c.b16 %v643, %v637
        %v794 = vpack.c.b16 %v650, %v644
        %v795 = vpack.c.b16 %v651, %v645
        %v796 = vpack.c.b16 %v652, %v646
        %v797 = vpack.c.b16 %v653, %v647
        %v798 = vpack.c.b16 %v654, %v648
        %v799 = vpack.c.b16 %v655, %v649
        %v800 = vpack.c.b16 %v662, %v656
        %v801 = vpack.c.b16 %v663, %v657
        %v802 = vpack.c.b16 %v664, %v658
        %v803 = vpack.c.b16 %v665, %v659
        %v804 = vpack.c.b16 %v666, %v660
        %v805 = vpack.c.b16 %v667, %v661
        %v806 = vpack.c.b16 %v674, %v668
        %v807 = vpack.c.b16 %v675, %v669
        %v808 = vpack.c.b16 %v676, %v670
        %v809 = vpack.c.b16 %v677, %v671
        %v810 = vpack.c.b16 %v678, %v672
        %v811 = vpack.c.b16 %v679, %v673
        %v812 = vpack.c.b16 %v686, %v680
        %v813 = vpack.c.b16 %v687, %v681
        %v814 = vpack.c.b16 %v688, %v682
        %v815 = vpack.c.b16 %v689, %v683
        %v816 = vpack.c.b16 %v690, %v684
        %v817 = vpack.c.b16 %v691, %v685
        %v818 = vpack.c.b16 %v698, %v692
        %v819 = vpack.c.b16 %v699, %v693
        %v820 = vpack.c.b16 %v700, %v694
        %v821 = vpack.c.b16 %v701, %v695
        %v822 = vpack.c.b16 %v702, %v696
        %v823 = vpack.c.b16 %v703, %v697
        %v824 = vpack.c.b16 %v710, %v704
        %v825 = vpack.c.b16 %v711, %v705
        %v826 = vpack.c.b16 %v712, %v706
        %v827 = vpack.c.b16 %v713, %v707
        %v828 = vpack.c.b16 %v714, %v708
        %v829 = vpack.c.b16 %v715, %v709
        %v830 = vpack.c.b16 %v722, %v716
        %v831 = vpack.c.b16 %v723, %v717
        %v832 = vpack.c.b16 %v724, %v718
        %v833 = vpack.c.b16 %v725, %v719
        %v834 = vpack.c.b16 %v726, %v720
        %v835 = vpack.c.b16 %v727, %v721
        %v836 = vpack.c.b16 %v734, %v728
        %v837 = vpack.c.b16 %v735, %v729
        %v838 = vpack.c.b16 %v736, %v730
        %v839 = vpack.c.b16 %v737, %v731
        %v840 = vpack.c.b16 %v738, %v732
        %v841 = vpack.c.b16 %v739, %v733
        %v842 = vpack.c.b16 %v746, %v740
        %v843 = vpack.c.b16 %v747, %v741
        %v844 = vpack.c.b16 %v748, %v742
        %v845 = vpack.c.b16 %v749, %v743
        %v846 = vpack.c.b16 %v750, %v744
        %v847 = vpack.c.b16 %v751, %v745
        %944 = vmatprep.subr.bf16.mxu0 %v753
        %945 = vmatpush1.bf16.msra.mxu0 %v752
        %946 = vmatprep.subr.bf16.mxu0 %v759
        %947 = vmatpush1.bf16.msra.mxu0 %v758
        %948 = vmatprep.subr.bf16.mxu0 %v765
        %949 = vmatpush1.bf16.msra.mxu0 %v764
        %950 = vmatprep.subr.bf16.mxu0 %v771
        %951 = vmatpush1.bf16.msra.mxu0 %v770
        %952 = vmatprep.subr.bf16.mxu0 %v777
        %953 = vmatpush1.bf16.msra.mxu0 %v776
        %954 = vmatprep.subr.bf16.mxu0 %v783
        %955 = vmatpush1.bf16.msra.mxu0 %v782
        %956 = vmatprep.subr.bf16.mxu0 %v789
        %957 = vmatpush1.bf16.msra.mxu0 %v788
        %958 = vmatprep.subr.bf16.mxu0 %v795
        %959 = vmatpush1.bf16.msra.mxu0 %v794
        %960 = vmatprep.subr.bf16.mxu0 %v801
        %961 = vmatpush1.bf16.msra.mxu0 %v800
        %962 = vmatprep.subr.bf16.mxu0 %v807
        %963 = vmatpush1.bf16.msra.mxu0 %v806
        %964 = vmatprep.subr.bf16.mxu0 %v813
        %965 = vmatpush1.bf16.msra.mxu0 %v812
        %966 = vmatprep.subr.bf16.mxu0 %v819
        %967 = vmatpush1.bf16.msra.mxu0 %v818
        %968 = vmatprep.subr.bf16.mxu0 %v825
        %969 = vmatpush1.bf16.msra.mxu0 %v824
        %970 = vmatprep.subr.bf16.mxu0 %v831
        %971 = vmatpush1.bf16.msra.mxu0 %v830
        %972 = vmatprep.subr.bf16.mxu0 %v837
        %973 = vmatpush1.bf16.msra.mxu0 %v836
        %974 = vmatprep.subr.bf16.mxu0 %v843
        %975 = vmatpush1.bf16.msra.mxu0 %v842
        %976 = vmatprep.mubr.bf16.mxu0 %v335
        %977 = vmatmul.mubr.bf16.gmra.mrb[0].mxu0 %v334
        %v978 = vpop.f32.mrb[0].mxu0
        %v979 = vadd.f32 %v437, %v978
        %v980 = vpop.f32.mrb[0].mxu0
        %v981 = vadd.f32 %v441, %v980
        %v982 = vpop.f32.mrb[0].mxu0
        %v983 = vadd.f32 %v437, %v982
        %v984 = vpop.f32.mrb[0].mxu0
        %v985 = vadd.f32 %v441, %v984
        %986 = vdwg.mxu0
        %987 = vmatprep.subr.bf16.mxu0 %v755
        %988 = vmatpush1.bf16.msra.mxu0 %v754
        %989 = vmatprep.subr.bf16.mxu0 %v761
        %990 = vmatpush1.bf16.msra.mxu0 %v760
        %991 = vmatprep.subr.bf16.mxu0 %v767
        %992 = vmatpush1.bf16.msra.mxu0 %v766
        %993 = vmatprep.subr.bf16.mxu0 %v773
        %994 = vmatpush1.bf16.msra.mxu0 %v772
        %995 = vmatprep.subr.bf16.mxu0 %v779
        %996 = vmatpush1.bf16.msra.mxu0 %v778
        %997 = vmatprep.subr.bf16.mxu0 %v785
        %998 = vmatpush1.bf16.msra.mxu0 %v784
        %999 = vmatprep.subr.bf16.mxu0 %v791
        %1000 = vmatpush1.bf16.msra.mxu0 %v790
        %1001 = vmatprep.subr.bf16.mxu0 %v797
        %1002 = vmatpush1.bf16.msra.mxu0 %v796
        %1003 = vmatprep.subr.bf16.mxu0 %v803
        %1004 = vmatpush1.bf16.msra.mxu0 %v802
        %1005 = vmatprep.subr.bf16.mxu0 %v809
        %1006 = vmatpush1.bf16.msra.mxu0 %v808
        %1007 = vmatprep.subr.bf16.mxu0 %v815
        %1008 = vmatpush1.bf16.msra.mxu0 %v814
        %1009 = vmatprep.subr.bf16.mxu0 %v821
        %1010 = vmatpush1.bf16.msra.mxu0 %v820
        %1011 = vmatprep.subr.bf16.mxu0 %v827
        %1012 = vmatpush1.bf16.msra.mxu0 %v826
        %1013 = vmatprep.subr.bf16.mxu0 %v833
        %1014 = vmatpush1.bf16.msra.mxu0 %v832
        %1015 = vmatprep.subr.bf16.mxu0 %v839
        %1016 = vmatpush1.bf16.msra.mxu0 %v838
        %1017 = vmatprep.subr.bf16.mxu0 %v845
        %1018 = vmatpush1.bf16.msra.mxu0 %v844
        %1019 = vmatprep.mubr.bf16.mxu0 %v335
        %1020 = vmatmul.mubr.bf16.gmra.mrb[0].mxu0 %v334
        %v1021 = vpop.f32.mrb[0].mxu0
        %v1022 = vadd.f32 %v445, %v1021
        %v1023 = vpop.f32.mrb[0].mxu0
        %v1024 = vadd.f32 %v449, %v1023
        %v1025 = vpop.f32.mrb[0].mxu0
        %v1026 = vadd.f32 %v445, %v1025
        %v1027 = vpop.f32.mrb[0].mxu0
        %v1028 = vadd.f32 %v449, %v1027
        %1029 = vdwg.mxu0
        %1030 = vmatprep.subr.bf16.mxu0 %v757
        %1031 = vmatpush1.bf16.msra.mxu0 %v756
        %1032 = vmatprep.subr.bf16.mxu0 %v763
        %1033 = vmatpush1.bf16.msra.mxu0 %v762
        %1034 = vmatprep.subr.bf16.mxu0 %v769
        %1035 = vmatpush1.bf16.msra.mxu0 %v768
        %1036 = vmatprep.subr.bf16.mxu0 %v775
        %1037 = vmatpush1.bf16.msra.mxu0 %v774
        %1038 = vmatprep.subr.bf16.mxu0 %v781
        %1039 = vmatpush1.bf16.msra.mxu0 %v780
        %1040 = vmatprep.subr.bf16.mxu0 %v787
        %1041 = vmatpush1.bf16.msra.mxu0 %v786
        %1042 = vmatprep.subr.bf16.mxu0 %v793
        %1043 = vmatpush1.bf16.msra.mxu0 %v792
        %1044 = vmatprep.subr.bf16.mxu0 %v799
        %1045 = vmatpush1.bf16.msra.mxu0 %v798
        %1046 = vmatprep.subr.bf16.mxu0 %v805
        %1047 = vmatpush1.bf16.msra.mxu0 %v804
        %1048 = vmatprep.subr.bf16.mxu0 %v811
        %1049 = vmatpush1.bf16.msra.mxu0 %v810
        %1050 = vmatprep.subr.bf16.mxu0 %v817
        %1051 = vmatpush1.bf16.msra.mxu0 %v816
        %1052 = vmatprep.subr.bf16.mxu0 %v823
        %1053 = vmatpush1.bf16.msra.mxu0 %v822
        %1054 = vmatprep.subr.bf16.mxu0 %v829
        %1055 = vmatpush1.bf16.msra.mxu0 %v828
        %1056 = vmatprep.subr.bf16.mxu0 %v835
        %1057 = vmatpush1.bf16.msra.mxu0 %v834
        %1058 = vmatprep.subr.bf16.mxu0 %v841
        %1059 = vmatpush1.bf16.msra.mxu0 %v840
        %1060 = vmatprep.subr.bf16.mxu0 %v847
        %1061 = vmatpush1.bf16.msra.mxu0 %v846
        %1062 = vmatprep.mubr.bf16.mxu0 %v335
        %1063 = vmatmul.mubr.bf16.gmra.mrb[0].mxu0 %v334
        %v1064 = vpop.f32.mrb[0].mxu0
        %v1065 = vadd.f32 %v453, %v1064
        %v1066 = vpop.f32.mrb[0].mxu0
        %v1067 = vadd.f32 %v457, %v1066
        %v1068 = vpop.f32.mrb[0].mxu0
        %v1069 = vadd.f32 %v453, %v1068
        %v1070 = vpop.f32.mrb[0].mxu0
        %v1071 = vadd.f32 %v457, %v1070
        %1072 = vdwg.mxu0
        %v1073 = vpack.c.bf16 %v983, %v979
        %v1074 = vpack.c.bf16 %v985, %v981
        %v1075 = vpack.c.bf16 %v1026, %v1022
        %v1076 = vpack.c.bf16 %v1028, %v1024
        %v1077 = vpack.c.bf16 %v1069, %v1065
        %v1078 = vpack.c.bf16 %v1071, %v1067
        %s1079 = smul.u32 %s24, 16
        %s1080 = sshra.s32 %s1079, 4
        %s1081 = sand.u32 %s1079, 15
        %s1082 = smul.u32 %s1080, 6
        %s1083 = smul.addr %s1082, 8
        %s1084 = scalar_lea.vmem [#allocation2], %s1083
        %1085 = vst [vmem:[%s1084] sm:$0xff] %v1073
        %1086 = vst [vmem:[%s1084 + $0x8] sm:$0xff] %v1074
        %1087 = vst [vmem:[%s1084 + $0x10] sm:$0xff] %v1075
        %1088 = vst [vmem:[%s1084 + $0x18] sm:$0xff] %v1076
        %1089 = vst [vmem:[%s1084 + $0x20] sm:$0xff] %v1077
        %1090 = vst [vmem:[%s1084 + $0x28] sm:$0xff] %v1078
        %p1091 = scmp.eq.s32.totalorder %s24, 7
        // Predicated region
        $region65: #{tpu_custom_call.1} parent=47 // pred_check
          %p1092 = pneg %p1091
        $region66: #{tpu_custom_call.1} parent=47 // pred_check_branch
          %1094 = sbr.rel (%p1092) target = $region68
        $region67: #{tpu_custom_call.1} parent=47 // pred_region
          %v1095 = vld [vmem:[#allocation8] sm:$0xff]
          %v1096 = vld [vmem:[#allocation8 + $0x8] sm:$0xff]
          %v1097 = vld [vmem:[#allocation8 + $0x10] sm:$0xff]
          %v1098 = vld [vmem:[#allocation8 + $0x18] sm:$0xff]
          %v1099 = vld [vmem:[#allocation8 + $0x20] sm:$0xff]
          %v1100 = vld [vmem:[#allocation8 + $0x28] sm:$0xff]
          %v1101 = vld [vmem:[#allocation8 + $0x30] sm:$0xff]
          %v1102 = vld [vmem:[#allocation8 + $0x38] sm:$0xff]
          %v1103 = vld [vmem:[#allocation8 + $0x40] sm:$0xff]
          %v1104 = vld [vmem:[#allocation8 + $0x48] sm:$0xff]
          %v1105 = vld [vmem:[#allocation8 + $0x50] sm:$0xff]
          %v1106 = vld [vmem:[#allocation8 + $0x58] sm:$0xff]
          %v1107 = vld [vmem:[#allocation8 + $0x60] sm:$0xff]
          %v1108 = vld [vmem:[#allocation8 + $0x68] sm:$0xff]
          %v1109 = vld [vmem:[#allocation8 + $0x70] sm:$0xff]
          %v1110 = vld [vmem:[#allocation8 + $0x78] sm:$0xff]
          %v1111 = vld [vmem:[#allocation8 + $0x80] sm:$0xff]
          %v1112 = vld [vmem:[#allocation8 + $0x88] sm:$0xff]
          %v1113 = vld [vmem:[#allocation8 + $0x90] sm:$0xff]
          %v1114 = vld [vmem:[#allocation8 + $0x98] sm:$0xff]
          %v1115 = vld [vmem:[#allocation8 + $0xa0] sm:$0xff]
          %v1116 = vld [vmem:[#allocation8 + $0xa8] sm:$0xff]
          %v1117 = vld [vmem:[#allocation8 + $0xb0] sm:$0xff]
          %v1118 = vld [vmem:[#allocation8 + $0xb8] sm:$0xff]
          %v1119 = vld [vmem:[#allocation8 + $0xc0] sm:$0xff]
          %v1120 = vld [vmem:[#allocation8 + $0xc8] sm:$0xff]
          %v1121 = vld [vmem:[#allocation8 + $0xd0] sm:$0xff]
          %v1122 = vld [vmem:[#allocation8 + $0xd8] sm:$0xff]
          %v1123 = vld [vmem:[#allocation8 + $0xe0] sm:$0xff]
          %v1124 = vld [vmem:[#allocation8 + $0xe8] sm:$0xff]
          %v1125 = vld [vmem:[#allocation8 + $0xf0] sm:$0xff]
          %v1126 = vld [vmem:[#allocation8 + $0xf8] sm:$0xff]
          %v1127 = vld [vmem:[#allocation8 + $0x100] sm:$0xff]
          %v1128 = vld [vmem:[#allocation8 + $0x108] sm:$0xff]
          %v1129 = vld [vmem:[#allocation8 + $0x110] sm:$0xff]
          %v1130 = vld [vmem:[#allocation8 + $0x118] sm:$0xff]
          %v1131 = vld [vmem:[#allocation8 + $0x120] sm:$0xff]
          %v1132 = vld [vmem:[#allocation8 + $0x128] sm:$0xff]
          %v1133 = vld [vmem:[#allocation8 + $0x130] sm:$0xff]
          %v1134 = vld [vmem:[#allocation8 + $0x138] sm:$0xff]
          %v1135 = vld [vmem:[#allocation8 + $0x140] sm:$0xff]
          %v1136 = vld [vmem:[#allocation8 + $0x148] sm:$0xff]
          %v1137 = vld [vmem:[#allocation8 + $0x150] sm:$0xff]
          %v1138 = vld [vmem:[#allocation8 + $0x158] sm:$0xff]
          %v1139 = vld [vmem:[#allocation8 + $0x160] sm:$0xff]
          %v1140 = vld [vmem:[#allocation8 + $0x168] sm:$0xff]
          %v1141 = vld [vmem:[#allocation8 + $0x170] sm:$0xff]
          %v1142 = vld [vmem:[#allocation8 + $0x178] sm:$0xff]
          %v1143 = vld [vmem:[#allocation8 + $0x180] sm:$0xff]
          %v1144 = vld [vmem:[#allocation8 + $0x188] sm:$0xff]
          %v1145 = vld [vmem:[#allocation8 + $0x190] sm:$0xff]
          %v1146 = vld [vmem:[#allocation8 + $0x198] sm:$0xff]
          %v1147 = vld [vmem:[#allocation8 + $0x1a0] sm:$0xff]
          %v1148 = vld [vmem:[#allocation8 + $0x1a8] sm:$0xff]
          %v1149 = vld [vmem:[#allocation8 + $0x1b0] sm:$0xff]
          %v1150 = vld [vmem:[#allocation8 + $0x1b8] sm:$0xff]
          %v1151 = vld [vmem:[#allocation8 + $0x1c0] sm:$0xff]
          %v1152 = vld [vmem:[#allocation8 + $0x1c8] sm:$0xff]
          %v1153 = vld [vmem:[#allocation8 + $0x1d0] sm:$0xff]
          %v1154 = vld [vmem:[#allocation8 + $0x1d8] sm:$0xff]
          %v1155 = vld [vmem:[#allocation8 + $0x1e0] sm:$0xff]
          %v1156 = vld [vmem:[#allocation8 + $0x1e8] sm:$0xff]
          %v1157 = vld [vmem:[#allocation8 + $0x1f0] sm:$0xff]
          %v1158 = vld [vmem:[#allocation8 + $0x1f8] sm:$0xff]
          %v1159 = vld [vmem:[#allocation8 + $0x200] sm:$0xff]
          %v1160 = vld [vmem:[#allocation8 + $0x208] sm:$0xff]
          %v1161 = vld [vmem:[#allocation8 + $0x210] sm:$0xff]
          %v1162 = vld [vmem:[#allocation8 + $0x218] sm:$0xff]
          %v1163 = vld [vmem:[#allocation8 + $0x220] sm:$0xff]
          %v1164 = vld [vmem:[#allocation8 + $0x228] sm:$0xff]
          %v1165 = vld [vmem:[#allocation8 + $0x230] sm:$0xff]
          %v1166 = vld [vmem:[#allocation8 + $0x238] sm:$0xff]
          %v1167 = vld [vmem:[#allocation8 + $0x240] sm:$0xff]
          %v1168 = vld [vmem:[#allocation8 + $0x248] sm:$0xff]
          %v1169 = vld [vmem:[#allocation8 + $0x250] sm:$0xff]
          %v1170 = vld [vmem:[#allocation8 + $0x258] sm:$0xff]
          %v1171 = vld [vmem:[#allocation8 + $0x260] sm:$0xff]
          %v1172 = vld [vmem:[#allocation8 + $0x268] sm:$0xff]
          %v1173 = vld [vmem:[#allocation8 + $0x270] sm:$0xff]
          %v1174 = vld [vmem:[#allocation8 + $0x278] sm:$0xff]
          %v1175 = vld [vmem:[#allocation8 + $0x280] sm:$0xff]
          %v1176 = vld [vmem:[#allocation8 + $0x288] sm:$0xff]
          %v1177 = vld [vmem:[#allocation8 + $0x290] sm:$0xff]
          %v1178 = vld [vmem:[#allocation8 + $0x298] sm:$0xff]
          %v1179 = vld [vmem:[#allocation8 + $0x2a0] sm:$0xff]
          %v1180 = vld [vmem:[#allocation8 + $0x2a8] sm:$0xff]
          %v1181 = vld [vmem:[#allocation8 + $0x2b0] sm:$0xff]
          %v1182 = vld [vmem:[#allocation8 + $0x2b8] sm:$0xff]
          %v1183 = vld [vmem:[#allocation8 + $0x2c0] sm:$0xff]
          %v1184 = vld [vmem:[#allocation8 + $0x2c8] sm:$0xff]
          %v1185 = vld [vmem:[#allocation8 + $0x2d0] sm:$0xff]
          %v1186 = vld [vmem:[#allocation8 + $0x2d8] sm:$0xff]
          %v1187 = vld [vmem:[#allocation8 + $0x2e0] sm:$0xff]
          %v1188 = vld [vmem:[#allocation8 + $0x2e8] sm:$0xff]
          %v1189 = vld [vmem:[#allocation8 + $0x2f0] sm:$0xff]
          %v1190 = vld [vmem:[#allocation8 + $0x2f8] sm:$0xff]
          %v1191 = vld [vmem:[%s4] sm:$0x1]
          %v1192 = vld [vmem:[%s4 + $0x1] sm:$0x1]
          %v1289 = vunpack.c.l.b16 %v1095
          %v1290 = vunpack.c.h.b16 %v1095
          %v1291 = vunpack.c.l.b16 %v1096
          %v1292 = vunpack.c.h.b16 %v1096
          %v1293 = vunpack.c.l.b16 %v1097
          %v1294 = vunpack.c.h.b16 %v1097
          %v1295 = vunpack.c.l.b16 %v1098
          %v1296 = vunpack.c.h.b16 %v1098
          %v1297 = vunpack.c.l.b16 %v1099
          %v1298 = vunpack.c.h.b16 %v1099
          %v1299 = vunpack.c.l.b16 %v1100
          %v1300 = vunpack.c.h.b16 %v1100
          %v1301 = vunpack.c.l.b16 %v1101
          %v1302 = vunpack.c.h.b16 %v1101
          %v1303 = vunpack.c.l.b16 %v1102
          %v1304 = vunpack.c.h.b16 %v1102
          %v1305 = vunpack.c.l.b16 %v1103
          %v1306 = vunpack.c.h.b16 %v1103
          %v1307 = vunpack.c.l.b16 %v1104
          %v1308 = vunpack.c.h.b16 %v1104
          %v1309 = vunpack.c.l.b16 %v1105
          %v1310 = vunpack.c.h.b16 %v1105
          %v1311 = vunpack.c.l.b16 %v1106
          %v1312 = vunpack.c.h.b16 %v1106
          %v1313 = vunpack.c.l.b16 %v1107
          %v1314 = vunpack.c.h.b16 %v1107
          %v1315 = vunpack.c.l.b16 %v1108
          %v1316 = vunpack.c.h.b16 %v1108
          %v1317 = vunpack.c.l.b16 %v1109
          %v1318 = vunpack.c.h.b16 %v1109
          %v1319 = vunpack.c.l.b16 %v1110
          %v1320 = vunpack.c.h.b16 %v1110
          %v1321 = vunpack.c.l.b16 %v1111
          %v1322 = vunpack.c.h.b16 %v1111
          %v1323 = vunpack.c.l.b16 %v1112
          %v1324 = vunpack.c.h.b16 %v1112
          %v1325 = vunpack.c.l.b16 %v1113
          %v1326 = vunpack.c.h.b16 %v1113
          %v1327 = vunpack.c.l.b16 %v1114
          %v1328 = vunpack.c.h.b16 %v1114
          %v1329 = vunpack.c.l.b16 %v1115
          %v1330 = vunpack.c.h.b16 %v1115
          %v1331 = vunpack.c.l.b16 %v1116
          %v1332 = vunpack.c.h.b16 %v1116
          %v1333 = vunpack.c.l.b16 %v1117
          %v1334 = vunpack.c.h.b16 %v1117
          %v1335 = vunpack.c.l.b16 %v1118
          %v1336 = vunpack.c.h.b16 %v1118
          %v1337 = vunpack.c.l.b16 %v1119
          %v1338 = vunpack.c.h.b16 %v1119
          %v1339 = vunpack.c.l.b16 %v1120
          %v1340 = vunpack.c.h.b16 %v1120
          %v1341 = vunpack.c.l.b16 %v1121
          %v1342 = vunpack.c.h.b16 %v1121
          %v1343 = vunpack.c.l.b16 %v1122
          %v1344 = vunpack.c.h.b16 %v1122
          %v1345 = vunpack.c.l.b16 %v1123
          %v1346 = vunpack.c.h.b16 %v1123
          %v1347 = vunpack.c.l.b16 %v1124
          %v1348 = vunpack.c.h.b16 %v1124
          %v1349 = vunpack.c.l.b16 %v1125
          %v1350 = vunpack.c.h.b16 %v1125
          %v1351 = vunpack.c.l.b16 %v1126
          %v1352 = vunpack.c.h.b16 %v1126
          %v1353 = vunpack.c.l.b16 %v1127
          %v1354 = vunpack.c.h.b16 %v1127
          %v1355 = vunpack.c.l.b16 %v1128
          %v1356 = vunpack.c.h.b16 %v1128
          %v1357 = vunpack.c.l.b16 %v1129
          %v1358 = vunpack.c.h.b16 %v1129
          %v1359 = vunpack.c.l.b16 %v1130
          %v1360 = vunpack.c.h.b16 %v1130
          %v1361 = vunpack.c.l.b16 %v1131
          %v1362 = vunpack.c.h.b16 %v1131
          %v1363 = vunpack.c.l.b16 %v1132
          %v1364 = vunpack.c.h.b16 %v1132
          %v1365 = vunpack.c.l.b16 %v1133
          %v1366 = vunpack.c.h.b16 %v1133
          %v1367 = vunpack.c.l.b16 %v1134
          %v1368 = vunpack.c.h.b16 %v1134
          %v1369 = vunpack.c.l.b16 %v1135
          %v1370 = vunpack.c.h.b16 %v1135
          %v1371 = vunpack.c.l.b16 %v1136
          %v1372 = vunpack.c.h.b16 %v1136
          %v1373 = vunpack.c.l.b16 %v1137
          %v1374 = vunpack.c.h.b16 %v1137
          %v1375 = vunpack.c.l.b16 %v1138
          %v1376 = vunpack.c.h.b16 %v1138
          %v1377 = vunpack.c.l.b16 %v1139
          %v1378 = vunpack.c.h.b16 %v1139
          %v1379 = vunpack.c.l.b16 %v1140
          %v1380 = vunpack.c.h.b16 %v1140
          %v1381 = vunpack.c.l.b16 %v1141
          %v1382 = vunpack.c.h.b16 %v1141
          %v1383 = vunpack.c.l.b16 %v1142
          %v1384 = vunpack.c.h.b16 %v1142
          %v1385 = vunpack.c.l.b16 %v1143
          %v1386 = vunpack.c.h.b16 %v1143
          %v1387 = vunpack.c.l.b16 %v1144
          %v1388 = vunpack.c.h.b16 %v1144
          %v1389 = vunpack.c.l.b16 %v1145
          %v1390 = vunpack.c.h.b16 %v1145
          %v1391 = vunpack.c.l.b16 %v1146
          %v1392 = vunpack.c.h.b16 %v1146
          %v1393 = vunpack.c.l.b16 %v1147
          %v1394 = vunpack.c.h.b16 %v1147
          %v1395 = vunpack.c.l.b16 %v1148
          %v1396 = vunpack.c.h.b16 %v1148
          %v1397 = vunpack.c.l.b16 %v1149
          %v1398 = vunpack.c.h.b16 %v1149
          %v1399 = vunpack.c.l.b16 %v1150
          %v1400 = vunpack.c.h.b16 %v1150
          %v1401 = vunpack.c.l.b16 %v1151
          %v1402 = vunpack.c.h.b16 %v1151
          %v1403 = vunpack.c.l.b16 %v1152
          %v1404 = vunpack.c.h.b16 %v1152
          %v1405 = vunpack.c.l.b16 %v1153
          %v1406 = vunpack.c.h.b16 %v1153
          %v1407 = vunpack.c.l.b16 %v1154
          %v1408 = vunpack.c.h.b16 %v1154
          %v1409 = vunpack.c.l.b16 %v1155
          %v1410 = vunpack.c.h.b16 %v1155
          %v1411 = vunpack.c.l.b16 %v1156
          %v1412 = vunpack.c.h.b16 %v1156
          %v1413 = vunpack.c.l.b16 %v1157
          %v1414 = vunpack.c.h.b16 %v1157
          %v1415 = vunpack.c.l.b16 %v1158
          %v1416 = vunpack.c.h.b16 %v1158
          %v1417 = vunpack.c.l.b16 %v1159
          %v1418 = vunpack.c.h.b16 %v1159
          %v1419 = vunpack.c.l.b16 %v1160
          %v1420 = vunpack.c.h.b16 %v1160
          %v1421 = vunpack.c.l.b16 %v1161
          %v1422 = vunpack.c.h.b16 %v1161
          %v1423 = vunpack.c.l.b16 %v1162
          %v1424 = vunpack.c.h.b16 %v1162
          %v1425 = vunpack.c.l.b16 %v1163
          %v1426 = vunpack.c.h.b16 %v1163
          %v1427 = vunpack.c.l.b16 %v1164
          %v1428 = vunpack.c.h.b16 %v1164
          %v1429 = vunpack.c.l.b16 %v1165
          %v1430 = vunpack.c.h.b16 %v1165
          %v1431 = vunpack.c.l.b16 %v1166
          %v1432 = vunpack.c.h.b16 %v1166
          %v1433 = vunpack.c.l.b16 %v1167
          %v1434 = vunpack.c.h.b16 %v1167
          %v1435 = vunpack.c.l.b16 %v1168
          %v1436 = vunpack.c.h.b16 %v1168
          %v1437 = vunpack.c.l.b16 %v1169
          %v1438 = vunpack.c.h.b16 %v1169
          %v1439 = vunpack.c.l.b16 %v1170
          %v1440 = vunpack.c.h.b16 %v1170
          %v1441 = vunpack.c.l.b16 %v1171
          %v1442 = vunpack.c.h.b16 %v1171
          %v1443 = vunpack.c.l.b16 %v1172
          %v1444 = vunpack.c.h.b16 %v1172
          %v1445 = vunpack.c.l.b16 %v1173
          %v1446 = vunpack.c.h.b16 %v1173
          %v1447 = vunpack.c.l.b16 %v1174
          %v1448 = vunpack.c.h.b16 %v1174
          %v1449 = vunpack.c.l.b16 %v1175
          %v1450 = vunpack.c.h.b16 %v1175
          %v1451 = vunpack.c.l.b16 %v1176
          %v1452 = vunpack.c.h.b16 %v1176
          %v1453 = vunpack.c.l.b16 %v1177
          %v1454 = vunpack.c.h.b16 %v1177
          %v1455 = vunpack.c.l.b16 %v1178
          %v1456 = vunpack.c.h.b16 %v1178
          %v1457 = vunpack.c.l.b16 %v1179
          %v1458 = vunpack.c.h.b16 %v1179
          %v1459 = vunpack.c.l.b16 %v1180
          %v1460 = vunpack.c.h.b16 %v1180
          %v1461 = vunpack.c.l.b16 %v1181
          %v1462 = vunpack.c.h.b16 %v1181
          %v1463 = vunpack.c.l.b16 %v1182
          %v1464 = vunpack.c.h.b16 %v1182
          %v1465 = vunpack.c.l.b16 %v1183
          %v1466 = vunpack.c.h.b16 %v1183
          %v1467 = vunpack.c.l.b16 %v1184
          %v1468 = vunpack.c.h.b16 %v1184
          %v1469 = vunpack.c.l.b16 %v1185
          %v1470 = vunpack.c.h.b16 %v1185
          %v1471 = vunpack.c.l.b16 %v1186
          %v1472 = vunpack.c.h.b16 %v1186
          %v1473 = vunpack.c.l.b16 %v1187
          %v1474 = vunpack.c.h.b16 %v1187
          %v1475 = vunpack.c.l.b16 %v1188
          %v1476 = vunpack.c.h.b16 %v1188
          %v1477 = vunpack.c.l.b16 %v1189
          %v1478 = vunpack.c.h.b16 %v1189
          %v1479 = vunpack.c.l.b16 %v1190
          %v1480 = vunpack.c.h.b16 %v1190
          %v1481 = vpack.c.b16 %v1295, %v1289
          %v1482 = vpack.c.b16 %v1296, %v1290
          %v1483 = vpack.c.b16 %v1297, %v1291
          %v1484 = vpack.c.b16 %v1298, %v1292
          %v1485 = vpack.c.b16 %v1299, %v1293
          %v1486 = vpack.c.b16 %v1300, %v1294
          %v1487 = vpack.c.b16 %v1307, %v1301
          %v1488 = vpack.c.b16 %v1308, %v1302
          %v1489 = vpack.c.b16 %v1309, %v1303
          %v1490 = vpack.c.b16 %v1310, %v1304
          %v1491 = vpack.c.b16 %v1311, %v1305
          %v1492 = vpack.c.b16 %v1312, %v1306
          %v1493 = vpack.c.b16 %v1319, %v1313
          %v1494 = vpack.c.b16 %v1320, %v1314
          %v1495 = vpack.c.b16 %v1321, %v1315
          %v1496 = vpack.c.b16 %v1322, %v1316
          %v1497 = vpack.c.b16 %v1323, %v1317
          %v1498 = vpack.c.b16 %v1324, %v1318
          %v1499 = vpack.c.b16 %v1331, %v1325
          %v1500 = vpack.c.b16 %v1332, %v1326
          %v1501 = vpack.c.b16 %v1333, %v1327
          %v1502 = vpack.c.b16 %v1334, %v1328
          %v1503 = vpack.c.b16 %v1335, %v1329
          %v1504 = vpack.c.b16 %v1336, %v1330
          %v1505 = vpack.c.b16 %v1343, %v1337
          %v1506 = vpack.c.b16 %v1344, %v1338
          %v1507 = vpack.c.b16 %v1345, %v1339
          %v1508 = vpack.c.b16 %v1346, %v1340
          %v1509 = vpack.c.b16 %v1347, %v1341
          %v1510 = vpack.c.b16 %v1348, %v1342
          %v1511 = vpack.c.b16 %v1355, %v1349
          %v1512 = vpack.c.b16 %v1356, %v1350
          %v1513 = vpack.c.b16 %v1357, %v1351
          %v1514 = vpack.c.b16 %v1358, %v1352
          %v1515 = vpack.c.b16 %v1359, %v1353
          %v1516 = vpack.c.b16 %v1360, %v1354
          %v1517 = vpack.c.b16 %v1367, %v1361
          %v1518 = vpack.c.b16 %v1368, %v1362
          %v1519 = vpack.c.b16 %v1369, %v1363
          %v1520 = vpack.c.b16 %v1370, %v1364
          %v1521 = vpack.c.b16 %v1371, %v1365
          %v1522 = vpack.c.b16 %v1372, %v1366
          %v1523 = vpack.c.b16 %v1379, %v1373
          %v1524 = vpack.c.b16 %v1380, %v1374
          %v1525 = vpack.c.b16 %v1381, %v1375
          %v1526 = vpack.c.b16 %v1382, %v1376
          %v1527 = vpack.c.b16 %v1383, %v1377
          %v1528 = vpack.c.b16 %v1384, %v1378
          %v1529 = vpack.c.b16 %v1391, %v1385
          %v1530 = vpack.c.b16 %v1392, %v1386
          %v1531 = vpack.c.b16 %v1393, %v1387
          %v1532 = vpack.c.b16 %v1394, %v1388
          %v1533 = vpack.c.b16 %v1395, %v1389
          %v1534 = vpack.c.b16 %v1396, %v1390
          %v1535 = vpack.c.b16 %v1403, %v1397
          %v1536 = vpack.c.b16 %v1404, %v1398
          %v1537 = vpack.c.b16 %v1405, %v1399
          %v1538 = vpack.c.b16 %v1406, %v1400
          %v1539 = vpack.c.b16 %v1407, %v1401
          %v1540 = vpack.c.b16 %v1408, %v1402
          %v1541 = vpack.c.b16 %v1415, %v1409
          %v1542 = vpack.c.b16 %v1416, %v1410
          %v1543 = vpack.c.b16 %v1417, %v1411
          %v1544 = vpack.c.b16 %v1418, %v1412
          %v1545 = vpack.c.b16 %v1419, %v1413
          %v1546 = vpack.c.b16 %v1420, %v1414
          %v1547 = vpack.c.b16 %v1427, %v1421
          %v1548 = vpack.c.b16 %v1428, %v1422
          %v1549 = vpack.c.b16 %v1429, %v1423
          %v1550 = vpack.c.b16 %v1430, %v1424
          %v1551 = vpack.c.b16 %v1431, %v1425
          %v1552 = vpack.c.b16 %v1432, %v1426
          %v1553 = vpack.c.b16 %v1439, %v1433
          %v1554 = vpack.c.b16 %v1440, %v1434
          %v1555 = vpack.c.b16 %v1441, %v1435
          %v1556 = vpack.c.b16 %v1442, %v1436
          %v1557 = vpack.c.b16 %v1443, %v1437
          %v1558 = vpack.c.b16 %v1444, %v1438
          %v1559 = vpack.c.b16 %v1451, %v1445
          %v1560 = vpack.c.b16 %v1452, %v1446
          %v1561 = vpack.c.b16 %v1453, %v1447
          %v1562 = vpack.c.b16 %v1454, %v1448
          %v1563 = vpack.c.b16 %v1455, %v1449
          %v1564 = vpack.c.b16 %v1456, %v1450
          %v1565 = vpack.c.b16 %v1463, %v1457
          %v1566 = vpack.c.b16 %v1464, %v1458
          %v1567 = vpack.c.b16 %v1465, %v1459
          %v1568 = vpack.c.b16 %v1466, %v1460
          %v1569 = vpack.c.b16 %v1467, %v1461
          %v1570 = vpack.c.b16 %v1468, %v1462
          %v1571 = vpack.c.b16 %v1475, %v1469
          %v1572 = vpack.c.b16 %v1476, %v1470
          %v1573 = vpack.c.b16 %v1477, %v1471
          %v1574 = vpack.c.b16 %v1478, %v1472
          %v1575 = vpack.c.b16 %v1479, %v1473
          %v1576 = vpack.c.b16 %v1480, %v1474
          %1673 = vmatprep.subr.bf16.mxu0 %v1482
          %1674 = vmatpush1.bf16.msra.mxu0 %v1481
          %1675 = vmatprep.subr.bf16.mxu0 %v1488
          %1676 = vmatpush1.bf16.msra.mxu0 %v1487
          %1677 = vmatprep.subr.bf16.mxu0 %v1494
          %1678 = vmatpush1.bf16.msra.mxu0 %v1493
          %1679 = vmatprep.subr.bf16.mxu0 %v1500
          %1680 = vmatpush1.bf16.msra.mxu0 %v1499
          %1681 = vmatprep.subr.bf16.mxu0 %v1506
          %1682 = vmatpush1.bf16.msra.mxu0 %v1505
          %1683 = vmatprep.subr.bf16.mxu0 %v1512
          %1684 = vmatpush1.bf16.msra.mxu0 %v1511
          %1685 = vmatprep.subr.bf16.mxu0 %v1518
          %1686 = vmatpush1.bf16.msra.mxu0 %v1517
          %1687 = vmatprep.subr.bf16.mxu0 %v1524
          %1688 = vmatpush1.bf16.msra.mxu0 %v1523
          %1689 = vmatprep.subr.bf16.mxu0 %v1530
          %1690 = vmatpush1.bf16.msra.mxu0 %v1529
          %1691 = vmatprep.subr.bf16.mxu0 %v1536
          %1692 = vmatpush1.bf16.msra.mxu0 %v1535
          %1693 = vmatprep.subr.bf16.mxu0 %v1542
          %1694 = vmatpush1.bf16.msra.mxu0 %v1541
          %1695 = vmatprep.subr.bf16.mxu0 %v1548
          %1696 = vmatpush1.bf16.msra.mxu0 %v1547
          %1697 = vmatprep.subr.bf16.mxu0 %v1554
          %1698 = vmatpush1.bf16.msra.mxu0 %v1553
          %1699 = vmatprep.subr.bf16.mxu0 %v1560
          %1700 = vmatpush1.bf16.msra.mxu0 %v1559
          %1701 = vmatprep.subr.bf16.mxu0 %v1566
          %1702 = vmatpush1.bf16.msra.mxu0 %v1565
          %1703 = vmatprep.subr.bf16.mxu0 %v1572
          %1704 = vmatpush1.bf16.msra.mxu0 %v1571
          %1705 = vmatprep.mubr.bf16.mxu0 0
          %1706 = vmatmul.mubr.bf16.gmra.mrb[0].mxu0 0
          %v1707 = vpop.f32.mrb[0].mxu0
          %v1708 = vadd.f32 0.0, %v1707
          %v1709 = vpop.f32.mrb[0].mxu0
          %v1710 = vadd.f32 0.0, %v1709
          %v1711 = vpop.f32.mrb[0].mxu0
          %v1712 = vadd.f32 0.0, %v1711
          %v1713 = vpop.f32.mrb[0].mxu0
          %v1714 = vadd.f32 0.0, %v1713
          %1715 = vdwg.mxu0
          %1716 = vmatprep.subr.bf16.mxu0 %v1484
          %1717 = vmatpush1.bf16.msra.mxu0 %v1483
          %1718 = vmatprep.subr.bf16.mxu0 %v1490
          %1719 = vmatpush1.bf16.msra.mxu0 %v1489
          %1720 = vmatprep.subr.bf16.mxu0 %v1496
          %1721 = vmatpush1.bf16.msra.mxu0 %v1495
          %1722 = vmatprep.subr.bf16.mxu0 %v1502
          %1723 = vmatpush1.bf16.msra.mxu0 %v1501
          %1724 = vmatprep.subr.bf16.mxu0 %v1508
          %1725 = vmatpush1.bf16.msra.mxu0 %v1507
          %1726 = vmatprep.subr.bf16.mxu0 %v1514
          %1727 = vmatpush1.bf16.msra.mxu0 %v1513
          %1728 = vmatprep.subr.bf16.mxu0 %v1520
          %1729 = vmatpush1.bf16.msra.mxu0 %v1519
          %1730 = vmatprep.subr.bf16.mxu0 %v1526
          %1731 = vmatpush1.bf16.msra.mxu0 %v1525
          %1732 = vmatprep.subr.bf16.mxu0 %v1532
          %1733 = vmatpush1.bf16.msra.mxu0 %v1531
          %1734 = vmatprep.subr.bf16.mxu0 %v1538
          %1735 = vmatpush1.bf16.msra.mxu0 %v1537
          %1736 = vmatprep.subr.bf16.mxu0 %v1544
          %1737 = vmatpush1.bf16.msra.mxu0 %v1543
          %1738 = vmatprep.subr.bf16.mxu0 %v1550
          %1739 = vmatpush1.bf16.msra.mxu0 %v1549
          %1740 = vmatprep.subr.bf16.mxu0 %v1556
          %1741 = vmatpush1.bf16.msra.mxu0 %v1555
          %1742 = vmatprep.subr.bf16.mxu0 %v1562
          %1743 = vmatpush1.bf16.msra.mxu0 %v1561
          %1744 = vmatprep.subr.bf16.mxu0 %v1568
          %1745 = vmatpush1.bf16.msra.mxu0 %v1567
          %1746 = vmatprep.subr.bf16.mxu0 %v1574
          %1747 = vmatpush1.bf16.msra.mxu0 %v1573
          %1748 = vmatprep.mubr.bf16.mxu0 0
          %1749 = vmatmul.mubr.bf16.gmra.mrb[0].mxu0 0
          %v1750 = vpop.f32.mrb[0].mxu0
          %v1751 = vadd.f32 0.0, %v1750
          %v1752 = vpop.f32.mrb[0].mxu0
          %v1753 = vadd.f32 0.0, %v1752
          %v1754 = vpop.f32.mrb[0].mxu0
          %v1755 = vadd.f32 0.0, %v1754
          %v1756 = vpop.f32.mrb[0].mxu0
          %v1757 = vadd.f32 0.0, %v1756
          %1758 = vdwg.mxu0
          %1759 = vmatprep.subr.bf16.mxu0 %v1486
          %1760 = vmatpush1.bf16.msra.mxu0 %v1485
          %1761 = vmatprep.subr.bf16.mxu0 %v1492
          %1762 = vmatpush1.bf16.msra.mxu0 %v1491
          %1763 = vmatprep.subr.bf16.mxu0 %v1498
          %1764 = vmatpush1.bf16.msra.mxu0 %v1497
          %1765 = vmatprep.subr.bf16.mxu0 %v1504
          %1766 = vmatpush1.bf16.msra.mxu0 %v1503
          %1767 = vmatprep.subr.bf16.mxu0 %v1510
          %1768 = vmatpush1.bf16.msra.mxu0 %v1509
          %1769 = vmatprep.subr.bf16.mxu0 %v1516
          %1770 = vmatpush1.bf16.msra.mxu0 %v1515
          %1771 = vmatprep.subr.bf16.mxu0 %v1522
          %1772 = vmatpush1.bf16.msra.mxu0 %v1521
          %1773 = vmatprep.subr.bf16.mxu0 %v1528
          %1774 = vmatpush1.bf16.msra.mxu0 %v1527
          %1775 = vmatprep.subr.bf16.mxu0 %v1534
          %1776 = vmatpush1.bf16.msra.mxu0 %v1533
          %1777 = vmatprep.subr.bf16.mxu0 %v1540
          %1778 = vmatpush1.bf16.msra.mxu0 %v1539
          %1779 = vmatprep.subr.bf16.mxu0 %v1546
          %1780 = vmatpush1.bf16.msra.mxu0 %v1545
          %1781 = vmatprep.subr.bf16.mxu0 %v1552
          %1782 = vmatpush1.bf16.msra.mxu0 %v1551
          %1783 = vmatprep.subr.bf16.mxu0 %v1558
          %1784 = vmatpush1.bf16.msra.mxu0 %v1557
          %1785 = vmatprep.subr.bf16.mxu0 %v1564
          %1786 = vmatpush1.bf16.msra.mxu0 %v1563
          %1787 = vmatprep.subr.bf16.mxu0 %v1570
          %1788 = vmatpush1.bf16.msra.mxu0 %v1569
          %1789 = vmatprep.subr.bf16.mxu0 %v1576
          %1790 = vmatpush1.bf16.msra.mxu0 %v1575
          %1791 = vmatprep.mubr.bf16.mxu0 0
          %1792 = vmatmul.mubr.bf16.gmra.mrb[0].mxu0 0
          %v1793 = vpop.f32.mrb[0].mxu0
          %v1794 = vadd.f32 0.0, %v1793
          %v1795 = vpop.f32.mrb[0].mxu0
          %v1796 = vadd.f32 0.0, %v1795
          %v1797 = vpop.f32.mrb[0].mxu0
          %v1798 = vadd.f32 0.0, %v1797
          %v1799 = vpop.f32.mrb[0].mxu0
          %v1800 = vadd.f32 0.0, %v1799
          %1801 = vdwg.mxu0
          %s1802 = smul.u32 0, 6
          %s1803 = smul.addr %s1802, 8
          %s1804 = scalar_lea.vmem [#allocation2], %s1803
          %v1805 = vld [vmem:[%s1804] sm:$0xff]
          %v1806 = vld [vmem:[%s1804 + $0x8] sm:$0xff]
          %v1807 = vld [vmem:[%s1804 + $0x10] sm:$0xff]
          %v1808 = vunpack.c.l.bf16 %v1805
          %v1809 = vunpack.c.l.bf16 %v1806
          %v1810 = vunpack.c.l.bf16 %v1807
          %v1811 = vunpack.c.h.bf16 %v1805
          %v1812 = vunpack.c.h.bf16 %v1806
          %v1813 = vunpack.c.h.bf16 %v1807
          %s1814 = smul.u32 7, 6
          %s1815 = smul.addr %s1814, 8
          %s1816 = scalar_lea.vmem [#allocation2], %s1815
          %v1817 = vld [vmem:[%s1816 + $0x18] sm:$0xff]
          %v1818 = vld [vmem:[%s1816 + $0x20] sm:$0xff]
          %v1819 = vld [vmem:[%s1816 + $0x28] sm:$0xff]
          %v1820 = vunpack.c.l.bf16 %v1817
          %v1821 = vunpack.c.l.bf16 %v1818
          %v1822 = vunpack.c.l.bf16 %v1819
          %v1823 = vunpack.c.h.bf16 %v1817
          %v1824 = vunpack.c.h.bf16 %v1818
          %v1825 = vunpack.c.h.bf16 %v1819
          %v1826 = vadd.f32 %v1808, %v1708
          %v1827 = vadd.f32 %v1811, %v1712
          %v1828 = vxor.u32 %v1826, 2147483648
          %v1829 = vxor.u32 %v1827, 2147483648
          %v1830 = vmul.f32 %v1828, 1.442695
          %v1831 = vpow.pop %v1830
          %v1832 = vmul.f32 %v1829, 1.442695
          %v1833 = vpow.pop %v1832
          %v1834 = vadd.f32 %v1831, 1.0
          %v1835 = vadd.f32 %v1833, 1.0
          %v1836 = vrcp.pop %v1834
          %v1837 = vmul.f32 1.0, %v1836
          %v1838 = vrcp.pop %v1835
          %v1839 = vmul.f32 1.0, %v1838
          %v1840 = vadd.f32 %v1809, %v1710
          %v1841 = vadd.f32 %v1812, %v1714
          %v1842 = vxor.u32 %v1840, 2147483648
          %v1843 = vxor.u32 %v1841, 2147483648
          %v1844 = vmul.f32 %v1842, 1.442695
          %v1845 = vpow.pop %v1844
          %v1846 = vmul.f32 %v1843, 1.442695
          %v1847 = vpow.pop %v1846
          %v1848 = vadd.f32 %v1845, 1.0
          %v1849 = vadd.f32 %v1847, 1.0
          %v1850 = vrcp.pop %v1848
          %v1851 = vmul.f32 1.0, %v1850
          %v1852 = vrcp.pop %v1849
          %v1853 = vmul.f32 1.0, %v1852
          %v1855 = vlaneseq
          %v1856 = vshrl.u32 %v1855, 7
          %v1857 = vsub.s32 0, %v1856
          %v1858 = vrot.slane %v1191, %v1857
          %v1860 = vadd.f32 %v1751, %v1858
          %v1861 = vadd.f32 %v1755, %v1858
          %v1862 = vmul.f32 %v1837, %v1860
          %v1863 = vmul.f32 %v1839, %v1861
          %v1864 = vadd.f32 %v1810, %v1862
          %v1865 = vadd.f32 %v1813, %v1863
          %v1866 = vtanh.pop %v1864
          %v1867 = vtanh.pop %v1865
          %v1868 = vsub.f32 1.0, %v1851
          %v1869 = vsub.f32 1.0, %v1853
          %v1870 = vmul.f32 %v1868, %v1866
          %v1871 = vmul.f32 %v1869, %v1867
          %v1872 = vmul.f32 %v1851, 0.0
          %v1873 = vmul.f32 %v1853, 0.0
          %v1874 = vadd.f32 %v1870, %v1872
          %v1875 = vadd.f32 %v1871, %v1873
          %v1876 = vadd.f32 %v1820, %v1753
          %v1877 = vadd.f32 %v1823, %v1757
          %v1878 = vxor.u32 %v1876, 2147483648
          %v1879 = vxor.u32 %v1877, 2147483648
          %v1880 = vmul.f32 %v1878, 1.442695
          %v1881 = vpow.pop %v1880
          %v1882 = vmul.f32 %v1879, 1.442695
          %v1883 = vpow.pop %v1882
          %v1884 = vadd.f32 %v1881, 1.0
          %v1885 = vadd.f32 %v1883, 1.0
          %v1886 = vrcp.pop %v1884
          %v1887 = vmul.f32 1.0, %v1886
          %v1888 = vrcp.pop %v1885
          %v1889 = vmul.f32 1.0, %v1888
          %v1890 = vadd.f32 %v1821, %v1794
          %v1891 = vadd.f32 %v1824, %v1798
          %v1892 = vxor.u32 %v1890, 2147483648
          %v1893 = vxor.u32 %v1891, 2147483648
          %v1894 = vmul.f32 %v1892, 1.442695
          %v1895 = vpow.pop %v1894
          %v1896 = vmul.f32 %v1893, 1.442695
          %v1897 = vpow.pop %v1896
          %v1898 = vadd.f32 %v1895, 1.0
          %v1899 = vadd.f32 %v1897, 1.0
          %v1900 = vrcp.pop %v1898
          %v1901 = vmul.f32 1.0, %v1900
          %v1902 = vrcp.pop %v1899
          %v1903 = vmul.f32 1.0, %v1902
          %v1905 = vlaneseq
          %v1906 = vshrl.u32 %v1905, 7
          %v1907 = vsub.s32 0, %v1906
          %v1908 = vrot.slane %v1192, %v1907
          %v1910 = vadd.f32 %v1796, %v1908
          %v1911 = vadd.f32 %v1800, %v1908
          %v1912 = vmul.f32 %v1887, %v1910
          %v1913 = vmul.f32 %v1889, %v1911
          %v1914 = vadd.f32 %v1822, %v1912
          %v1915 = vadd.f32 %v1825, %v1913
          %v1916 = vtanh.pop %v1914
          %v1917 = vtanh.pop %v1915
          %v1918 = vsub.f32 1.0, %v1901
          %v1919 = vsub.f32 1.0, %v1903
          %v1920 = vmul.f32 %v1918, %v1916
          %v1921 = vmul.f32 %v1919, %v1917
          %v1922 = vmul.f32 %v1901, 0.0
          %v1923 = vmul.f32 %v1903, 0.0
          %v1924 = vadd.f32 %v1920, %v1922
          %v1925 = vadd.f32 %v1921, %v1923
          %v1926 = vpack.c.bf16 %v1875, %v1874
          %v1927 = vpack.c.bf16 %v1925, %v1924
          %1928 = vmatprep.subr.bf16.mxu0 %v1482
          %1929 = vmatpush1.bf16.msra.mxu0 %v1481
          %1930 = vmatprep.subr.bf16.mxu0 %v1488
          %1931 = vmatpush1.bf16.msra.mxu0 %v1487
          %1932 = vmatprep.subr.bf16.mxu0 %v1494
          %1933 = vmatpush1.bf16.msra.mxu0 %v1493
          %1934 = vmatprep.subr.bf16.mxu0 %v1500
          %1935 = vmatpush1.bf16.msra.mxu0 %v1499
          %1936 = vmatprep.subr.bf16.mxu0 %v1506
          %1937 = vmatpush1.bf16.msra.mxu0 %v1505
          %1938 = vmatprep.subr.bf16.mxu0 %v1512
          %1939 = vmatpush1.bf16.msra.mxu0 %v1511
          %1940 = vmatprep.subr.bf16.mxu0 %v1518
          %1941 = vmatpush1.bf16.msra.mxu0 %v1517
          %1942 = vmatprep.subr.bf16.mxu0 %v1524
          %1943 = vmatpush1.bf16.msra.mxu0 %v1523
          %1944 = vmatprep.subr.bf16.mxu0 %v1530
          %1945 = vmatpush1.bf16.msra.mxu0 %v1529
          %1946 = vmatprep.subr.bf16.mxu0 %v1536
          %1947 = vmatpush1.bf16.msra.mxu0 %v1535
          %1948 = vmatprep.subr.bf16.mxu0 %v1542
          %1949 = vmatpush1.bf16.msra.mxu0 %v1541
          %1950 = vmatprep.subr.bf16.mxu0 %v1548
          %1951 = vmatpush1.bf16.msra.mxu0 %v1547
          %1952 = vmatprep.subr.bf16.mxu0 %v1554
          %1953 = vmatpush1.bf16.msra.mxu0 %v1553
          %1954 = vmatprep.subr.bf16.mxu0 %v1560
          %1955 = vmatpush1.bf16.msra.mxu0 %v1559
          %1956 = vmatprep.subr.bf16.mxu0 %v1566
          %1957 = vmatpush1.bf16.msra.mxu0 %v1565
          %1958 = vmatprep.subr.bf16.mxu0 %v1572
          %1959 = vmatpush1.bf16.msra.mxu0 %v1571
          %1960 = vmatprep.mubr.bf16.mxu0 %v1927
          %1961 = vmatmul.mubr.bf16.gmra.mrb[0].mxu0 %v1926
          %v1962 = vpop.f32.mrb[0].mxu0
          %v1963 = vadd.f32 0.0, %v1962
          %v1964 = vpop.f32.mrb[0].mxu0
          %v1965 = vadd.f32 0.0, %v1964
          %v1966 = vpop.f32.mrb[0].mxu0
          %v1967 = vadd.f32 0.0, %v1966
          %v1968 = vpop.f32.mrb[0].mxu0
          %v1969 = vadd.f32 0.0, %v1968
          %1970 = vdwg.mxu0
          %1971 = vmatprep.subr.bf16.mxu0 %v1484
          %1972 = vmatpush1.bf16.msra.mxu0 %v1483
          %1973 = vmatprep.subr.bf16.mxu0 %v1490
          %1974 = vmatpush1.bf16.msra.mxu0 %v1489
          %1975 = vmatprep.subr.bf16.mxu0 %v1496
          %1976 = vmatpush1.bf16.msra.mxu0 %v1495
          %1977 = vmatprep.subr.bf16.mxu0 %v1502
          %1978 = vmatpush1.bf16.msra.mxu0 %v1501
          %1979 = vmatprep.subr.bf16.mxu0 %v1508
          %1980 = vmatpush1.bf16.msra.mxu0 %v1507
          %1981 = vmatprep.subr.bf16.mxu0 %v1514
          %1982 = vmatpush1.bf16.msra.mxu0 %v1513
          %1983 = vmatprep.subr.bf16.mxu0 %v1520
          %1984 = vmatpush1.bf16.msra.mxu0 %v1519
          %1985 = vmatprep.subr.bf16.mxu0 %v1526
          %1986 = vmatpush1.bf16.msra.mxu0 %v1525
          %1987 = vmatprep.subr.bf16.mxu0 %v1532
          %1988 = vmatpush1.bf16.msra.mxu0 %v1531
          %1989 = vmatprep.subr.bf16.mxu0 %v1538
          %1990 = vmatpush1.bf16.msra.mxu0 %v1537
          %1991 = vmatprep.subr.bf16.mxu0 %v1544
          %1992 = vmatpush1.bf16.msra.mxu0 %v1543
          %1993 = vmatprep.subr.bf16.mxu0 %v1550
          %1994 = vmatpush1.bf16.msra.mxu0 %v1549
          %1995 = vmatprep.subr.bf16.mxu0 %v1556
          %1996 = vmatpush1.bf16.msra.mxu0 %v1555
          %1997 = vmatprep.subr.bf16.mxu0 %v1562
          %1998 = vmatpush1.bf16.msra.mxu0 %v1561
          %1999 = vmatprep.subr.bf16.mxu0 %v1568
          %2000 = vmatpush1.bf16.msra.mxu0 %v1567
          %2001 = vmatprep.subr.bf16.mxu0 %v1574
          %2002 = vmatpush1.bf16.msra.mxu0 %v1573
          %2003 = vmatprep.mubr.bf16.mxu0 %v1927
          %2004 = vmatmul.mubr.bf16.gmra.mrb[0].mxu0 %v1926
          %v2005 = vpop.f32.mrb[0].mxu0
          %v2006 = vadd.f32 0.0, %v2005
          %v2007 = vpop.f32.mrb[0].mxu0
          %v2008 = vadd.f32 0.0, %v2007
          %v2009 = vpop.f32.mrb[0].mxu0
          %v2010 = vadd.f32 0.0, %v2009
          %v2011 = vpop.f32.mrb[0].mxu0
          %v2012 = vadd.f32 0.0, %v2011
          %2013 = vdwg.mxu0
          %2014 = vmatprep.subr.bf16.mxu0 %v1486
          %2015 = vmatpush1.bf16.msra.mxu0 %v1485
          %2016 = vmatprep.subr.bf16.mxu0 %v1492
          %2017 = vmatpush1.bf16.msra.mxu0 %v1491
          %2018 = vmatprep.subr.bf16.mxu0 %v1498
          %2019 = vmatpush1.bf16.msra.mxu0 %v1497
          %2020 = vmatprep.subr.bf16.mxu0 %v1504
          %2021 = vmatpush1.bf16.msra.mxu0 %v1503
          %2022 = vmatprep.subr.bf16.mxu0 %v1510
          %2023 = vmatpush1.bf16.msra.mxu0 %v1509
          %2024 = vmatprep.subr.bf16.mxu0 %v1516
          %2025 = vmatpush1.bf16.msra.mxu0 %v1515
          %2026 = vmatprep.subr.bf16.mxu0 %v1522
          %2027 = vmatpush1.bf16.msra.mxu0 %v1521
          %2028 = vmatprep.subr.bf16.mxu0 %v1528
          %2029 = vmatpush1.bf16.msra.mxu0 %v1527
          %2030 = vmatprep.subr.bf16.mxu0 %v1534
          %2031 = vmatpush1.bf16.msra.mxu0 %v1533
          %2032 = vmatprep.subr.bf16.mxu0 %v1540
          %2033 = vmatpush1.bf16.msra.mxu0 %v1539
          %2034 = vmatprep.subr.bf16.mxu0 %v1546
          %2035 = vmatpush1.bf16.msra.mxu0 %v1545
          %2036 = vmatprep.subr.bf16.mxu0 %v1552
          %2037 = vmatpush1.bf16.msra.mxu0 %v1551
          %2038 = vmatprep.subr.bf16.mxu0 %v1558
          %2039 = vmatpush1.bf16.msra.mxu0 %v1557
          %2040 = vmatprep.subr.bf16.mxu0 %v1564
          %2041 = vmatpush1.bf16.msra.mxu0 %v1563
          %2042 = vmatprep.subr.bf16.mxu0 %v1570
          %2043 = vmatpush1.bf16.msra.mxu0 %v1569
          %2044 = vmatprep.subr.bf16.mxu0 %v1576
          %2045 = vmatpush1.bf16.msra.mxu0 %v1575
          %2046 = vmatprep.mubr.bf16.mxu0 %v1927
          %2047 = vmatmul.mubr.bf16.gmra.mrb[0].mxu0 %v1926
          %v2048 = vpop.f32.mrb[0].mxu0
          %v2049 = vadd.f32 0.0, %v2048
          %v2050 = vpop.f32.mrb[0].mxu0
          %v2051 = vadd.f32 0.0, %v2050
          %v2052 = vpop.f32.mrb[0].mxu0
          %v2053 = vadd.f32 0.0, %v2052
          %v2054 = vpop.f32.mrb[0].mxu0
          %v2055 = vadd.f32 0.0, %v2054
          %2056 = vdwg.mxu0
          %s2057 = smul.u32 1, 6
          %s2058 = smul.addr %s2057, 8
          %s2059 = scalar_lea.vmem [#allocation2], %s2058
          %v2060 = vld [vmem:[%s2059] sm:$0xff]
          %v2061 = vld [vmem:[%s2059 + $0x8] sm:$0xff]
          %v2062 = vld [vmem:[%s2059 + $0x10] sm:$0xff]
          %v2063 = vunpack.c.l.bf16 %v2060
          %v2064 = vunpack.c.l.bf16 %v2061
          %v2065 = vunpack.c.l.bf16 %v2062
          %v2066 = vunpack.c.h.bf16 %v2060
          %v2067 = vunpack.c.h.bf16 %v2061
          %v2068 = vunpack.c.h.bf16 %v2062
          %s2069 = smul.u32 6, 6
          %s2070 = smul.addr %s2069, 8
          %s2071 = scalar_lea.vmem [#allocation2], %s2070
          %v2072 = vld [vmem:[%s2071 + $0x18] sm:$0xff]
          %v2073 = vld [vmem:[%s2071 + $0x20] sm:$0xff]
          %v2074 = vld [vmem:[%s2071 + $0x28] sm:$0xff]
          %v2075 = vunpack.c.l.bf16 %v2072
          %v2076 = vunpack.c.l.bf16 %v2073
          %v2077 = vunpack.c.l.bf16 %v2074
          %v2078 = vunpack.c.h.bf16 %v2072
          %v2079 = vunpack.c.h.bf16 %v2073
          %v2080 = vunpack.c.h.bf16 %v2074
          %v2081 = vadd.f32 %v2063, %v1963
          %v2082 = vadd.f32 %v2066, %v1967
          %v2083 = vxor.u32 %v2081, 2147483648
          %v2084 = vxor.u32 %v2082, 2147483648
          %v2085 = vmul.f32 %v2083, 1.442695
          %v2086 = vpow.pop %v2085
          %v2087 = vmul.f32 %v2084, 1.442695
          %v2088 = vpow.pop %v2087
          %v2089 = vadd.f32 %v2086, 1.0
          %v2090 = vadd.f32 %v2088, 1.0
          %v2091 = vrcp.pop %v2089
          %v2092 = vmul.f32 1.0, %v2091
          %v2093 = vrcp.pop %v2090
          %v2094 = vmul.f32 1.0, %v2093
          %v2095 = vadd.f32 %v2064, %v1965
          %v2096 = vadd.f32 %v2067, %v1969
          %v2097 = vxor.u32 %v2095, 2147483648
          %v2098 = vxor.u32 %v2096, 2147483648
          %v2099 = vmul.f32 %v2097, 1.442695
          %v2100 = vpow.pop %v2099
          %v2101 = vmul.f32 %v2098, 1.442695
          %v2102 = vpow.pop %v2101
          %v2103 = vadd.f32 %v2100, 1.0
          %v2104 = vadd.f32 %v2102, 1.0
          %v2105 = vrcp.pop %v2103
          %v2106 = vmul.f32 1.0, %v2105
          %v2107 = vrcp.pop %v2104
          %v2108 = vmul.f32 1.0, %v2107
          %v2109 = vadd.f32 %v2006, %v1858
          %v2110 = vadd.f32 %v2010, %v1858
          %v2111 = vmul.f32 %v2092, %v2109
          %v2112 = vmul.f32 %v2094, %v2110
          %v2113 = vadd.f32 %v2065, %v2111
          %v2114 = vadd.f32 %v2068, %v2112
          %v2115 = vtanh.pop %v2113
          %v2116 = vtanh.pop %v2114
          %v2117 = vsub.f32 1.0, %v2106
          %v2118 = vsub.f32 1.0, %v2108
          %v2119 = vmul.f32 %v2117, %v2115
          %v2120 = vmul.f32 %v2118, %v2116
          %v2121 = vmul.f32 %v2106, %v1874
          %v2122 = vmul.f32 %v2108, %v1875
          %v2123 = vadd.f32 %v2119, %v2121
          %v2124 = vadd.f32 %v2120, %v2122
          %v2125 = vadd.f32 %v2075, %v2008
          %v2126 = vadd.f32 %v2078, %v2012
          %v2127 = vxor.u32 %v2125, 2147483648
          %v2128 = vxor.u32 %v2126, 2147483648
          %v2129 = vmul.f32 %v2127, 1.442695
          %v2130 = vpow.pop %v2129
          %v2131 = vmul.f32 %v2128, 1.442695
          %v2132 = vpow.pop %v2131
          %v2133 = vadd.f32 %v2130, 1.0
          %v2134 = vadd.f32 %v2132, 1.0
          %v2135 = vrcp.pop %v2133
          %v2136 = vmul.f32 1.0, %v2135
          %v2137 = vrcp.pop %v2134
          %v2138 = vmul.f32 1.0, %v2137
          %v2139 = vadd.f32 %v2076, %v2049
          %v2140 = vadd.f32 %v2079, %v2053
          %v2141 = vxor.u32 %v2139, 2147483648
          %v2142 = vxor.u32 %v2140, 2147483648
          %v2143 = vmul.f32 %v2141, 1.442695
          %v2144 = vpow.pop %v2143
          %v2145 = vmul.f32 %v2142, 1.442695
          %v2146 = vpow.pop %v2145
          %v2147 = vadd.f32 %v2144, 1.0
          %v2148 = vadd.f32 %v2146, 1.0
          %v2149 = vrcp.pop %v2147
          %v2150 = vmul.f32 1.0, %v2149
          %v2151 = vrcp.pop %v2148
          %v2152 = vmul.f32 1.0, %v2151
          %v2153 = vadd.f32 %v2051, %v1908
          %v2154 = vadd.f32 %v2055, %v1908
          %v2155 = vmul.f32 %v2136, %v2153
          %v2156 = vmul.f32 %v2138, %v2154
          %v2157 = vadd.f32 %v2077, %v2155
          %v2158 = vadd.f32 %v2080, %v2156
          %v2159 = vtanh.pop %v2157
          %v2160 = vtanh.pop %v2158
          %v2161 = vsub.f32 1.0, %v2150
          %v2162 = vsub.f32 1.0, %v2152
          %v2163 = vmul.f32 %v2161, %v2159
          %v2164 = vmul.f32 %v2162, %v2160
          %v2165 = vmul.f32 %v2150, %v1924
          %v2166 = vmul.f32 %v2152, %v1925
          %v2167 = vadd.f32 %v2163, %v2165
          %v2168 = vadd.f32 %v2164, %v2166
          %v2169 = vpack.c.bf16 %v2124, %v2123
          %v2170 = vpack.c.bf16 %v2168, %v2167
          %2171 = vmatprep.subr.bf16.mxu0 %v1482
          %2172 = vmatpush1.bf16.msra.mxu0 %v1481
          %2173 = vmatprep.subr.bf16.mxu0 %v1488
          %2174 = vmatpush1.bf16.msra.mxu0 %v1487
          %2175 = vmatprep.subr.bf16.mxu0 %v1494
          %2176 = vmatpush1.bf16.msra.mxu0 %v1493
          %2177 = vmatprep.subr.bf16.mxu0 %v1500
          %2178 = vmatpush1.bf16.msra.mxu0 %v1499
          %2179 = vmatprep.subr.bf16.mxu0 %v1506
          %2180 = vmatpush1.bf16.msra.mxu0 %v1505
          %2181 = vmatprep.subr.bf16.mxu0 %v1512
          %2182 = vmatpush1.bf16.msra.mxu0 %v1511
          %2183 = vmatprep.subr.bf16.mxu0 %v1518
          %2184 = vmatpush1.bf16.msra.mxu0 %v1517
          %2185 = vmatprep.subr.bf16.mxu0 %v1524
          %2186 = vmatpush1.bf16.msra.mxu0 %v1523
          %2187 = vmatprep.subr.bf16.mxu0 %v1530
          %2188 = vmatpush1.bf16.msra.mxu0 %v1529
          %2189 = vmatprep.subr.bf16.mxu0 %v1536
          %2190 = vmatpush1.bf16.msra.mxu0 %v1535
          %2191 = vmatprep.subr.bf16.mxu0 %v1542
          %2192 = vmatpush1.bf16.msra.mxu0 %v1541
          %2193 = vmatprep.subr.bf16.mxu0 %v1548
          %2194 = vmatpush1.bf16.msra.mxu0 %v1547
          %2195 = vmatprep.subr.bf16.mxu0 %v1554
          %2196 = vmatpush1.bf16.msra.mxu0 %v1553
          %2197 = vmatprep.subr.bf16.mxu0 %v1560
          %2198 = vmatpush1.bf16.msra.mxu0 %v1559
          %2199 = vmatprep.subr.bf16.mxu0 %v1566
          %2200 = vmatpush1.bf16.msra.mxu0 %v1565
          %2201 = vmatprep.subr.bf16.mxu0 %v1572
          %2202 = vmatpush1.bf16.msra.mxu0 %v1571
          %2203 = vmatprep.mubr.bf16.mxu0 %v2170
          %2204 = vmatmul.mubr.bf16.gmra.mrb[0].mxu0 %v2169
          %v2205 = vpop.f32.mrb[0].mxu0
          %v2206 = vadd.f32 0.0, %v2205
          %v2207 = vpop.f32.mrb[0].mxu0
          %v2208 = vadd.f32 0.0, %v2207
          %v2209 = vpop.f32.mrb[0].mxu0
          %v2210 = vadd.f32 0.0, %v2209
          %v2211 = vpop.f32.mrb[0].mxu0
          %v2212 = vadd.f32 0.0, %v2211
          %2213 = vdwg.mxu0
          %2214 = vmatprep.subr.bf16.mxu0 %v1484
          %2215 = vmatpush1.bf16.msra.mxu0 %v1483
          %2216 = vmatprep.subr.bf16.mxu0 %v1490
          %2217 = vmatpush1.bf16.msra.mxu0 %v1489
          %2218 = vmatprep.subr.bf16.mxu0 %v1496
          %2219 = vmatpush1.bf16.msra.mxu0 %v1495
          %2220 = vmatprep.subr.bf16.mxu0 %v1502
          %2221 = vmatpush1.bf16.msra.mxu0 %v1501
          %2222 = vmatprep.subr.bf16.mxu0 %v1508
          %2223 = vmatpush1.bf16.msra.mxu0 %v1507
          %2224 = vmatprep.subr.bf16.mxu0 %v1514
          %2225 = vmatpush1.bf16.msra.mxu0 %v1513
          %2226 = vmatprep.subr.bf16.mxu0 %v1520
          %2227 = vmatpush1.bf16.msra.mxu0 %v1519
          %2228 = vmatprep.subr.bf16.mxu0 %v1526
          %2229 = vmatpush1.bf16.msra.mxu0 %v1525
          %2230 = vmatprep.subr.bf16.mxu0 %v1532
          %2231 = vmatpush1.bf16.msra.mxu0 %v1531
          %2232 = vmatprep.subr.bf16.mxu0 %v1538
          %2233 = vmatpush1.bf16.msra.mxu0 %v1537
          %2234 = vmatprep.subr.bf16.mxu0 %v1544
          %2235 = vmatpush1.bf16.msra.mxu0 %v1543
          %2236 = vmatprep.subr.bf16.mxu0 %v1550
          %2237 = vmatpush1.bf16.msra.mxu0 %v1549
          %2238 = vmatprep.subr.bf16.mxu0 %v1556
          %2239 = vmatpush1.bf16.msra.mxu0 %v1555
          %2240 = vmatprep.subr.bf16.mxu0 %v1562
          %2241 = vmatpush1.bf16.msra.mxu0 %v1561
          %2242 = vmatprep.subr.bf16.mxu0 %v1568
          %2243 = vmatpush1.bf16.msra.mxu0 %v1567
          %2244 = vmatprep.subr.bf16.mxu0 %v1574
          %2245 = vmatpush1.bf16.msra.mxu0 %v1573
          %2246 = vmatprep.mubr.bf16.mxu0 %v2170
          %2247 = vmatmul.mubr.bf16.gmra.mrb[0].mxu0 %v2169
          %v2248 = vpop.f32.mrb[0].mxu0
          %v2249 = vadd.f32 0.0, %v2248
          %v2250 = vpop.f32.mrb[0].mxu0
          %v2251 = vadd.f32 0.0, %v2250
          %v2252 = vpop.f32.mrb[0].mxu0
          %v2253 = vadd.f32 0.0, %v2252
          %v2254 = vpop.f32.mrb[0].mxu0
          %v2255 = vadd.f32 0.0, %v2254
          %2256 = vdwg.mxu0
          %2257 = vmatprep.subr.bf16.mxu0 %v1486
          %2258 = vmatpush1.bf16.msra.mxu0 %v1485
          %2259 = vmatprep.subr.bf16.mxu0 %v1492
          %2260 = vmatpush1.bf16.msra.mxu0 %v1491
          %2261 = vmatprep.subr.bf16.mxu0 %v1498
          %2262 = vmatpush1.bf16.msra.mxu0 %v1497
          %2263 = vmatprep.subr.bf16.mxu0 %v1504
          %2264 = vmatpush1.bf16.msra.mxu0 %v1503
          %2265 = vmatprep.subr.bf16.mxu0 %v1510
          %2266 = vmatpush1.bf16.msra.mxu0 %v1509
          %2267 = vmatprep.subr.bf16.mxu0 %v1516
          %2268 = vmatpush1.bf16.msra.mxu0 %v1515
          %2269 = vmatprep.subr.bf16.mxu0 %v1522
          %2270 = vmatpush1.bf16.msra.mxu0 %v1521
          %2271 = vmatprep.subr.bf16.mxu0 %v1528
          %2272 = vmatpush1.bf16.msra.mxu0 %v1527
          %2273 = vmatprep.subr.bf16.mxu0 %v1534
          %2274 = vmatpush1.bf16.msra.mxu0 %v1533
          %2275 = vmatprep.subr.bf16.mxu0 %v1540
          %2276 = vmatpush1.bf16.msra.mxu0 %v1539
          %2277 = vmatprep.subr.bf16.mxu0 %v1546
          %2278 = vmatpush1.bf16.msra.mxu0 %v1545
          %2279 = vmatprep.subr.bf16.mxu0 %v1552
          %2280 = vmatpush1.bf16.msra.mxu0 %v1551
          %2281 = vmatprep.subr.bf16.mxu0 %v1558
          %2282 = vmatpush1.bf16.msra.mxu0 %v1557
          %2283 = vmatprep.subr.bf16.mxu0 %v1564
          %2284 = vmatpush1.bf16.msra.mxu0 %v1563
          %2285 = vmatprep.subr.bf16.mxu0 %v1570
          %2286 = vmatpush1.bf16.msra.mxu0 %v1569
          %2287 = vmatprep.subr.bf16.mxu0 %v1576
          %2288 = vmatpush1.bf16.msra.mxu0 %v1575
          %2289 = vmatprep.mubr.bf16.mxu0 %v2170
          %2290 = vmatmul.mubr.bf16.gmra.mrb[0].mxu0 %v2169
          %v2291 = vpop.f32.mrb[0].mxu0
          %v2292 = vadd.f32 0.0, %v2291
          %v2293 = vpop.f32.mrb[0].mxu0
          %v2294 = vadd.f32 0.0, %v2293
          %v2295 = vpop.f32.mrb[0].mxu0
          %v2296 = vadd.f32 0.0, %v2295
          %v2297 = vpop.f32.mrb[0].mxu0
          %v2298 = vadd.f32 0.0, %v2297
          %2299 = vdwg.mxu0
          %s2300 = smul.u32 2, 6
          %s2301 = smul.addr %s2300, 8
          %s2302 = scalar_lea.vmem [#allocation2], %s2301
          %v2303 = vld [vmem:[%s2302] sm:$0xff]
          %v2304 = vld [vmem:[%s2302 + $0x8] sm:$0xff]
          %v2305 = vld [vmem:[%s2302 + $0x10] sm:$0xff]
          %v2306 = vunpack.c.l.bf16 %v2303
          %v2307 = vunpack.c.l.bf16 %v2304
          %v2308 = vunpack.c.l.bf16 %v2305
          %v2309 = vunpack.c.h.bf16 %v2303
          %v2310 = vunpack.c.h.bf16 %v2304
          %v2311 = vunpack.c.h.bf16 %v2305
          %s2312 = smul.u32 5, 6
          %s2313 = smul.addr %s2312, 8
          %s2314 = scalar_lea.vmem [#allocation2], %s2313
          %v2315 = vld [vmem:[%s2314 + $0x18] sm:$0xff]
          %v2316 = vld [vmem:[%s2314 + $0x20] sm:$0xff]
          %v2317 = vld [vmem:[%s2314 + $0x28] sm:$0xff]
          %v2318 = vunpack.c.l.bf16 %v2315
          %v2319 = vunpack.c.l.bf16 %v2316
          %v2320 = vunpack.c.l.bf16 %v2317
          %v2321 = vunpack.c.h.bf16 %v2315
          %v2322 = vunpack.c.h.bf16 %v2316
          %v2323 = vunpack.c.h.bf16 %v2317
          %v2324 = vadd.f32 %v2306, %v2206
          %v2325 = vadd.f32 %v2309, %v2210
          %v2326 = vxor.u32 %v2324, 2147483648
          %v2327 = vxor.u32 %v2325, 2147483648
          %v2328 = vmul.f32 %v2326, 1.442695
          %v2329 = vpow.pop %v2328
          %v2330 = vmul.f32 %v2327, 1.442695
          %v2331 = vpow.pop %v2330
          %v2332 = vadd.f32 %v2329, 1.0
          %v2333 = vadd.f32 %v2331, 1.0
          %v2334 = vrcp.pop %v2332
          %v2335 = vmul.f32 1.0, %v2334
          %v2336 = vrcp.pop %v2333
          %v2337 = vmul.f32 1.0, %v2336
          %v2338 = vadd.f32 %v2307, %v2208
          %v2339 = vadd.f32 %v2310, %v2212
          %v2340 = vxor.u32 %v2338, 2147483648
          %v2341 = vxor.u32 %v2339, 2147483648
          %v2342 = vmul.f32 %v2340, 1.442695
          %v2343 = vpow.pop %v2342
          %v2344 = vmul.f32 %v2341, 1.442695
          %v2345 = vpow.pop %v2344
          %v2346 = vadd.f32 %v2343, 1.0
          %v2347 = vadd.f32 %v2345, 1.0
          %v2348 = vrcp.pop %v2346
          %v2349 = vmul.f32 1.0, %v2348
          %v2350 = vrcp.pop %v2347
          %v2351 = vmul.f32 1.0, %v2350
          %v2352 = vadd.f32 %v2249, %v1858
          %v2353 = vadd.f32 %v2253, %v1858
          %v2354 = vmul.f32 %v2335, %v2352
          %v2355 = vmul.f32 %v2337, %v2353
          %v2356 = vadd.f32 %v2308, %v2354
          %v2357 = vadd.f32 %v2311, %v2355
          %v2358 = vtanh.pop %v2356
          %v2359 = vtanh.pop %v2357
          %v2360 = vsub.f32 1.0, %v2349
          %v2361 = vsub.f32 1.0, %v2351
          %v2362 = vmul.f32 %v2360, %v2358
          %v2363 = vmul.f32 %v2361, %v2359
          %v2364 = vmul.f32 %v2349, %v2123
          %v2365 = vmul.f32 %v2351, %v2124
          %v2366 = vadd.f32 %v2362, %v2364
          %v2367 = vadd.f32 %v2363, %v2365
          %v2368 = vadd.f32 %v2318, %v2251
          %v2369 = vadd.f32 %v2321, %v2255
          %v2370 = vxor.u32 %v2368, 2147483648
          %v2371 = vxor.u32 %v2369, 2147483648
          %v2372 = vmul.f32 %v2370, 1.442695
          %v2373 = vpow.pop %v2372
          %v2374 = vmul.f32 %v2371, 1.442695
          %v2375 = vpow.pop %v2374
          %v2376 = vadd.f32 %v2373, 1.0
          %v2377 = vadd.f32 %v2375, 1.0
          %v2378 = vrcp.pop %v2376
          %v2379 = vmul.f32 1.0, %v2378
          %v2380 = vrcp.pop %v2377
          %v2381 = vmul.f32 1.0, %v2380
          %v2382 = vadd.f32 %v2319, %v2292
          %v2383 = vadd.f32 %v2322, %v2296
          %v2384 = vxor.u32 %v2382, 2147483648
          %v2385 = vxor.u32 %v2383, 2147483648
          %v2386 = vmul.f32 %v2384, 1.442695
          %v2387 = vpow.pop %v2386
          %v2388 = vmul.f32 %v2385, 1.442695
          %v2389 = vpow.pop %v2388
          %v2390 = vadd.f32 %v2387, 1.0
          %v2391 = vadd.f32 %v2389, 1.0
          %v2392 = vrcp.pop %v2390
          %v2393 = vmul.f32 1.0, %v2392
          %v2394 = vrcp.pop %v2391
          %v2395 = vmul.f32 1.0, %v2394
          %v2396 = vadd.f32 %v2294, %v1908
          %v2397 = vadd.f32 %v2298, %v1908
          %v2398 = vmul.f32 %v2379, %v2396
          %v2399 = vmul.f32 %v2381, %v2397
          %v2400 = vadd.f32 %v2320, %v2398
          %v2401 = vadd.f32 %v2323, %v2399
          %v2402 = vtanh.pop %v2400
          %v2403 = vtanh.pop %v2401
          %v2404 = vsub.f32 1.0, %v2393
          %v2405 = vsub.f32 1.0, %v2395
          %v2406 = vmul.f32 %v2404, %v2402
          %v2407 = vmul.f32 %v2405, %v2403
          %v2408 = vmul.f32 %v2393, %v2167
          %v2409 = vmul.f32 %v2395, %v2168
          %v2410 = vadd.f32 %v2406, %v2408
          %v2411 = vadd.f32 %v2407, %v2409
          %v2412 = vpack.c.bf16 %v2367, %v2366
          %v2413 = vpack.c.bf16 %v2411, %v2410
          %2414 = vmatprep.subr.bf16.mxu0 %v1482
          %2415 = vmatpush1.bf16.msra.mxu0 %v1481
          %2416 = vmatprep.subr.bf16.mxu0 %v1488
          %2417 = vmatpush1.bf16.msra.mxu0 %v1487
          %2418 = vmatprep.subr.bf16.mxu0 %v1494
          %2419 = vmatpush1.bf16.msra.mxu0 %v1493
          %2420 = vmatprep.subr.bf16.mxu0 %v1500
          %2421 = vmatpush1.bf16.msra.mxu0 %v1499
          %2422 = vmatprep.subr.bf16.mxu0 %v1506
          %2423 = vmatpush1.bf16.msra.mxu0 %v1505
          %2424 = vmatprep.subr.bf16.mxu0 %v1512
          %2425 = vmatpush1.bf16.msra.mxu0 %v1511
          %2426 = vmatprep.subr.bf16.mxu0 %v1518
          %2427 = vmatpush1.bf16.msra.mxu0 %v1517
          %2428 = vmatprep.subr.bf16.mxu0 %v1524
          %2429 = vmatpush1.bf16.msra.mxu0 %v1523
          %2430 = vmatprep.subr.bf16.mxu0 %v1530
          %2431 = vmatpush1.bf16.msra.mxu0 %v1529
          %2432 = vmatprep.subr.bf16.mxu0 %v1536
          %2433 = vmatpush1.bf16.msra.mxu0 %v1535
          %2434 = vmatprep.subr.bf16.mxu0 %v1542
          %2435 = vmatpush1.bf16.msra.mxu0 %v1541
          %2436 = vmatprep.subr.bf16.mxu0 %v1548
          %2437 = vmatpush1.bf16.msra.mxu0 %v1547
          %2438 = vmatprep.subr.bf16.mxu0 %v1554
          %2439 = vmatpush1.bf16.msra.mxu0 %v1553
          %2440 = vmatprep.subr.bf16.mxu0 %v1560
          %2441 = vmatpush1.bf16.msra.mxu0 %v1559
          %2442 = vmatprep.subr.bf16.mxu0 %v1566
          %2443 = vmatpush1.bf16.msra.mxu0 %v1565
          %2444 = vmatprep.subr.bf16.mxu0 %v1572
          %2445 = vmatpush1.bf16.msra.mxu0 %v1571
          %2446 = vmatprep.mubr.bf16.mxu0 %v2413
          %2447 = vmatmul.mubr.bf16.gmra.mrb[0].mxu0 %v2412
          %v2448 = vpop.f32.mrb[0].mxu0
          %v2449 = vadd.f32 0.0, %v2448
          %v2450 = vpop.f32.mrb[0].mxu0
          %v2451 = vadd.f32 0.0, %v2450
          %v2452 = vpop.f32.mrb[0].mxu0
          %v2453 = vadd.f32 0.0, %v2452
          %v2454 = vpop.f32.mrb[0].mxu0
          %v2455 = vadd.f32 0.0, %v2454
          %2456 = vdwg.mxu0
          %2457 = vmatprep.subr.bf16.mxu0 %v1484
          %2458 = vmatpush1.bf16.msra.mxu0 %v1483
          %2459 = vmatprep.subr.bf16.mxu0 %v1490
          %2460 = vmatpush1.bf16.msra.mxu0 %v1489
          %2461 = vmatprep.subr.bf16.mxu0 %v1496
          %2462 = vmatpush1.bf16.msra.mxu0 %v1495
          %2463 = vmatprep.subr.bf16.mxu0 %v1502
          %2464 = vmatpush1.bf16.msra.mxu0 %v1501
          %2465 = vmatprep.subr.bf16.mxu0 %v1508
          %2466 = vmatpush1.bf16.msra.mxu0 %v1507
          %2467 = vmatprep.subr.bf16.mxu0 %v1514
          %2468 = vmatpush1.bf16.msra.mxu0 %v1513
          %2469 = vmatprep.subr.bf16.mxu0 %v1520
          %2470 = vmatpush1.bf16.msra.mxu0 %v1519
          %2471 = vmatprep.subr.bf16.mxu0 %v1526
          %2472 = vmatpush1.bf16.msra.mxu0 %v1525
          %2473 = vmatprep.subr.bf16.mxu0 %v1532
          %2474 = vmatpush1.bf16.msra.mxu0 %v1531
          %2475 = vmatprep.subr.bf16.mxu0 %v1538
          %2476 = vmatpush1.bf16.msra.mxu0 %v1537
          %2477 = vmatprep.subr.bf16.mxu0 %v1544
          %2478 = vmatpush1.bf16.msra.mxu0 %v1543
          %2479 = vmatprep.subr.bf16.mxu0 %v1550
          %2480 = vmatpush1.bf16.msra.mxu0 %v1549
          %2481 = vmatprep.subr.bf16.mxu0 %v1556
          %2482 = vmatpush1.bf16.msra.mxu0 %v1555
          %2483 = vmatprep.subr.bf16.mxu0 %v1562
          %2484 = vmatpush1.bf16.msra.mxu0 %v1561
          %2485 = vmatprep.subr.bf16.mxu0 %v1568
          %2486 = vmatpush1.bf16.msra.mxu0 %v1567
          %2487 = vmatprep.subr.bf16.mxu0 %v1574
          %2488 = vmatpush1.bf16.msra.mxu0 %v1573
          %2489 = vmatprep.mubr.bf16.mxu0 %v2413
          %2490 = vmatmul.mubr.bf16.gmra.mrb[0].mxu0 %v2412
          %v2491 = vpop.f32.mrb[0].mxu0
          %v2492 = vadd.f32 0.0, %v2491
          %v2493 = vpop.f32.mrb[0].mxu0
          %v2494 = vadd.f32 0.0, %v2493
          %v2495 = vpop.f32.mrb[0].mxu0
          %v2496 = vadd.f32 0.0, %v2495
          %v2497 = vpop.f32.mrb[0].mxu0
          %v2498 = vadd.f32 0.0, %v2497
          %2499 = vdwg.mxu0
          %2500 = vmatprep.subr.bf16.mxu0 %v1486
          %2501 = vmatpush1.bf16.msra.mxu0 %v1485
          %2502 = vmatprep.subr.bf16.mxu0 %v1492
          %2503 = vmatpush1.bf16.msra.mxu0 %v1491
          %2504 = vmatprep.subr.bf16.mxu0 %v1498
          %2505 = vmatpush1.bf16.msra.mxu0 %v1497
          %2506 = vmatprep.subr.bf16.mxu0 %v1504
          %2507 = vmatpush1.bf16.msra.mxu0 %v1503
          %2508 = vmatprep.subr.bf16.mxu0 %v1510
          %2509 = vmatpush1.bf16.msra.mxu0 %v1509
          %2510 = vmatprep.subr.bf16.mxu0 %v1516
          %2511 = vmatpush1.bf16.msra.mxu0 %v1515
          %2512 = vmatprep.subr.bf16.mxu0 %v1522
          %2513 = vmatpush1.bf16.msra.mxu0 %v1521
          %2514 = vmatprep.subr.bf16.mxu0 %v1528
          %2515 = vmatpush1.bf16.msra.mxu0 %v1527
          %2516 = vmatprep.subr.bf16.mxu0 %v1534
          %2517 = vmatpush1.bf16.msra.mxu0 %v1533
          %2518 = vmatprep.subr.bf16.mxu0 %v1540
          %2519 = vmatpush1.bf16.msra.mxu0 %v1539
          %2520 = vmatprep.subr.bf16.mxu0 %v1546
          %2521 = vmatpush1.bf16.msra.mxu0 %v1545
          %2522 = vmatprep.subr.bf16.mxu0 %v1552
          %2523 = vmatpush1.bf16.msra.mxu0 %v1551
          %2524 = vmatprep.subr.bf16.mxu0 %v1558
          %2525 = vmatpush1.bf16.msra.mxu0 %v1557
          %2526 = vmatprep.subr.bf16.mxu0 %v1564
          %2527 = vmatpush1.bf16.msra.mxu0 %v1563
          %2528 = vmatprep.subr.bf16.mxu0 %v1570
          %2529 = vmatpush1.bf16.msra.mxu0 %v1569
          %2530 = vmatprep.subr.bf16.mxu0 %v1576
          %2531 = vmatpush1.bf16.msra.mxu0 %v1575
          %2532 = vmatprep.mubr.bf16.mxu0 %v2413
          %2533 = vmatmul.mubr.bf16.gmra.mrb[0].mxu0 %v2412
          %v2534 = vpop.f32.mrb[0].mxu0
          %v2535 = vadd.f32 0.0, %v2534
          %v2536 = vpop.f32.mrb[0].mxu0
          %v2537 = vadd.f32 0.0, %v2536
          %v2538 = vpop.f32.mrb[0].mxu0
          %v2539 = vadd.f32 0.0, %v2538
          %v2540 = vpop.f32.mrb[0].mxu0
          %v2541 = vadd.f32 0.0, %v2540
          %2542 = vdwg.mxu0
          %s2543 = smul.u32 3, 6
          %s2544 = smul.addr %s2543, 8
          %s2545 = scalar_lea.vmem [#allocation2], %s2544
          %v2546 = vld [vmem:[%s2545] sm:$0xff]
          %v2547 = vld [vmem:[%s2545 + $0x8] sm:$0xff]
          %v2548 = vld [vmem:[%s2545 + $0x10] sm:$0xff]
          %v2549 = vunpack.c.l.bf16 %v2546
          %v2550 = vunpack.c.l.bf16 %v2547
          %v2551 = vunpack.c.l.bf16 %v2548
          %v2552 = vunpack.c.h.bf16 %v2546
          %v2553 = vunpack.c.h.bf16 %v2547
          %v2554 = vunpack.c.h.bf16 %v2548
          %s2555 = smul.u32 4, 6
          %s2556 = smul.addr %s2555, 8
          %s2557 = scalar_lea.vmem [#allocation2], %s2556
          %v2558 = vld [vmem:[%s2557 + $0x18] sm:$0xff]
          %v2559 = vld [vmem:[%s2557 + $0x20] sm:$0xff]
          %v2560 = vld [vmem:[%s2557 + $0x28] sm:$0xff]
          %v2561 = vunpack.c.l.bf16 %v2558
          %v2562 = vunpack.c.l.bf16 %v2559
          %v2563 = vunpack.c.l.bf16 %v2560
          %v2564 = vunpack.c.h.bf16 %v2558
          %v2565 = vunpack.c.h.bf16 %v2559
          %v2566 = vunpack.c.h.bf16 %v2560
          %v2567 = vadd.f32 %v2549, %v2449
          %v2568 = vadd.f32 %v2552, %v2453
          %v2569 = vxor.u32 %v2567, 2147483648
          %v2570 = vxor.u32 %v2568, 2147483648
          %v2571 = vmul.f32 %v2569, 1.442695
          %v2572 = vpow.pop %v2571
          %v2573 = vmul.f32 %v2570, 1.442695
          %v2574 = vpow.pop %v2573
          %v2575 = vadd.f32 %v2572, 1.0
          %v2576 = vadd.f32 %v2574, 1.0
          %v2577 = vrcp.pop %v2575
          %v2578 = vmul.f32 1.0, %v2577
          %v2579 = vrcp.pop %v2576
          %v2580 = vmul.f32 1.0, %v2579
          %v2581 = vadd.f32 %v2550, %v2451
          %v2582 = vadd.f32 %v2553, %v2455
          %v2583 = vxor.u32 %v2581, 2147483648
          %v2584 = vxor.u32 %v2582, 2147483648
          %v2585 = vmul.f32 %v2583, 1.442695
          %v2586 = vpow.pop %v2585
          %v2587 = vmul.f32 %v2584, 1.442695
          %v2588 = vpow.pop %v2587
          %v2589 = vadd.f32 %v2586, 1.0
          %v2590 = vadd.f32 %v2588, 1.0
          %v2591 = vrcp.pop %v2589
          %v2592 = vmul.f32 1.0, %v2591
          %v2593 = vrcp.pop %v2590
          %v2594 = vmul.f32 1.0, %v2593
          %v2595 = vadd.f32 %v2492, %v1858
          %v2596 = vadd.f32 %v2496, %v1858
          %v2597 = vmul.f32 %v2578, %v2595
          %v2598 = vmul.f32 %v2580, %v2596
          %v2599 = vadd.f32 %v2551, %v2597
          %v2600 = vadd.f32 %v2554, %v2598
          %v2601 = vtanh.pop %v2599
          %v2602 = vtanh.pop %v2600
          %v2603 = vsub.f32 1.0, %v2592
          %v2604 = vsub.f32 1.0, %v2594
          %v2605 = vmul.f32 %v2603, %v2601
          %v2606 = vmul.f32 %v2604, %v2602
          %v2607 = vmul.f32 %v2592, %v2366
          %v2608 = vmul.f32 %v2594, %v2367
          %v2609 = vadd.f32 %v2605, %v2607
          %v2610 = vadd.f32 %v2606, %v2608
          %v2611 = vadd.f32 %v2561, %v2494
          %v2612 = vadd.f32 %v2564, %v2498
          %v2613 = vxor.u32 %v2611, 2147483648
          %v2614 = vxor.u32 %v2612, 2147483648
          %v2615 = vmul.f32 %v2613, 1.442695
          %v2616 = vpow.pop %v2615
          %v2617 = vmul.f32 %v2614, 1.442695
          %v2618 = vpow.pop %v2617
          %v2619 = vadd.f32 %v2616, 1.0
          %v2620 = vadd.f32 %v2618, 1.0
          %v2621 = vrcp.pop %v2619
          %v2622 = vmul.f32 1.0, %v2621
          %v2623 = vrcp.pop %v2620
          %v2624 = vmul.f32 1.0, %v2623
          %v2625 = vadd.f32 %v2562, %v2535
          %v2626 = vadd.f32 %v2565, %v2539
          %v2627 = vxor.u32 %v2625, 2147483648
          %v2628 = vxor.u32 %v2626, 2147483648
          %v2629 = vmul.f32 %v2627, 1.442695
          %v2630 = vpow.pop %v2629
          %v2631 = vmul.f32 %v2628, 1.442695
          %v2632 = vpow.pop %v2631
          %v2633 = vadd.f32 %v2630, 1.0
          %v2634 = vadd.f32 %v2632, 1.0
          %v2635 = vrcp.pop %v2633
          %v2636 = vmul.f32 1.0, %v2635
          %v2637 = vrcp.pop %v2634
          %v2638 = vmul.f32 1.0, %v2637
          %v2639 = vadd.f32 %v2537, %v1908
          %v2640 = vadd.f32 %v2541, %v1908
          %v2641 = vmul.f32 %v2622, %v2639
          %v2642 = vmul.f32 %v2624, %v2640
          %v2643 = vadd.f32 %v2563, %v2641
          %v2644 = vadd.f32 %v2566, %v2642
          %v2645 = vtanh.pop %v2643
          %v2646 = vtanh.pop %v2644
          %v2647 = vsub.f32 1.0, %v2636
          %v2648 = vsub.f32 1.0, %v2638
          %v2649 = vmul.f32 %v2647, %v2645
          %v2650 = vmul.f32 %v2648, %v2646
          %v2651 = vmul.f32 %v2636, %v2410
          %v2652 = vmul.f32 %v2638, %v2411
          %v2653 = vadd.f32 %v2649, %v2651
          %v2654 = vadd.f32 %v2650, %v2652
          %v2655 = vpack.c.bf16 %v2610, %v2609
          %v2656 = vpack.c.bf16 %v2654, %v2653
          %2657 = vmatprep.subr.bf16.mxu0 %v1482
          %2658 = vmatpush1.bf16.msra.mxu0 %v1481
          %2659 = vmatprep.subr.bf16.mxu0 %v1488
          %2660 = vmatpush1.bf16.msra.mxu0 %v1487
          %2661 = vmatprep.subr.bf16.mxu0 %v1494
          %2662 = vmatpush1.bf16.msra.mxu0 %v1493
          %2663 = vmatprep.subr.bf16.mxu0 %v1500
          %2664 = vmatpush1.bf16.msra.mxu0 %v1499
          %2665 = vmatprep.subr.bf16.mxu0 %v1506
          %2666 = vmatpush1.bf16.msra.mxu0 %v1505
          %2667 = vmatprep.subr.bf16.mxu0 %v1512
          %2668 = vmatpush1.bf16.msra.mxu0 %v1511
          %2669 = vmatprep.subr.bf16.mxu0 %v1518
          %2670 = vmatpush1.bf16.msra.mxu0 %v1517
          %2671 = vmatprep.subr.bf16.mxu0 %v1524
          %2672 = vmatpush1.bf16.msra.mxu0 %v1523
          %2673 = vmatprep.subr.bf16.mxu0 %v1530
          %2674 = vmatpush1.bf16.msra.mxu0 %v1529
          %2675 = vmatprep.subr.bf16.mxu0 %v1536
          %2676 = vmatpush1.bf16.msra.mxu0 %v1535
          %2677 = vmatprep.subr.bf16.mxu0 %v1542
          %2678 = vmatpush1.bf16.msra.mxu0 %v1541
          %2679 = vmatprep.subr.bf16.mxu0 %v1548
          %2680 = vmatpush1.bf16.msra.mxu0 %v1547
          %2681 = vmatprep.subr.bf16.mxu0 %v1554
          %2682 = vmatpush1.bf16.msra.mxu0 %v1553
          %2683 = vmatprep.subr.bf16.mxu0 %v1560
          %2684 = vmatpush1.bf16.msra.mxu0 %v1559
          %2685 = vmatprep.subr.bf16.mxu0 %v1566
          %2686 = vmatpush1.bf16.msra.mxu0 %v1565
          %2687 = vmatprep.subr.bf16.mxu0 %v1572
          %2688 = vmatpush1.bf16.msra.mxu0 %v1571
          %2689 = vmatprep.mubr.bf16.mxu0 %v2656
          %2690 = vmatmul.mubr.bf16.gmra.mrb[0].mxu0 %v2655
          %v2691 = vpop.f32.mrb[0].mxu0
          %v2692 = vadd.f32 0.0, %v2691
          %v2693 = vpop.f32.mrb[0].mxu0
          %v2694 = vadd.f32 0.0, %v2693
          %v2695 = vpop.f32.mrb[0].mxu0
          %v2696 = vadd.f32 0.0, %v2695
          %v2697 = vpop.f32.mrb[0].mxu0
          %v2698 = vadd.f32 0.0, %v2697
          %2699 = vdwg.mxu0
          %2700 = vmatprep.subr.bf16.mxu0 %v1484
          %2701 = vmatpush1.bf16.msra.mxu0 %v1483
          %2702 = vmatprep.subr.bf16.mxu0 %v1490
          %2703 = vmatpush1.bf16.msra.mxu0 %v1489
          %2704 = vmatprep.subr.bf16.mxu0 %v1496
          %2705 = vmatpush1.bf16.msra.mxu0 %v1495
          %2706 = vmatprep.subr.bf16.mxu0 %v1502
          %2707 = vmatpush1.bf16.msra.mxu0 %v1501
          %2708 = vmatprep.subr.bf16.mxu0 %v1508
          %2709 = vmatpush1.bf16.msra.mxu0 %v1507
          %2710 = vmatprep.subr.bf16.mxu0 %v1514
          %2711 = vmatpush1.bf16.msra.mxu0 %v1513
          %2712 = vmatprep.subr.bf16.mxu0 %v1520
          %2713 = vmatpush1.bf16.msra.mxu0 %v1519
          %2714 = vmatprep.subr.bf16.mxu0 %v1526
          %2715 = vmatpush1.bf16.msra.mxu0 %v1525
          %2716 = vmatprep.subr.bf16.mxu0 %v1532
          %2717 = vmatpush1.bf16.msra.mxu0 %v1531
          %2718 = vmatprep.subr.bf16.mxu0 %v1538
          %2719 = vmatpush1.bf16.msra.mxu0 %v1537
          %2720 = vmatprep.subr.bf16.mxu0 %v1544
          %2721 = vmatpush1.bf16.msra.mxu0 %v1543
          %2722 = vmatprep.subr.bf16.mxu0 %v1550
          %2723 = vmatpush1.bf16.msra.mxu0 %v1549
          %2724 = vmatprep.subr.bf16.mxu0 %v1556
          %2725 = vmatpush1.bf16.msra.mxu0 %v1555
          %2726 = vmatprep.subr.bf16.mxu0 %v1562
          %2727 = vmatpush1.bf16.msra.mxu0 %v1561
          %2728 = vmatprep.subr.bf16.mxu0 %v1568
          %2729 = vmatpush1.bf16.msra.mxu0 %v1567
          %2730 = vmatprep.subr.bf16.mxu0 %v1574
          %2731 = vmatpush1.bf16.msra.mxu0 %v1573
          %2732 = vmatprep.mubr.bf16.mxu0 %v2656
          %2733 = vmatmul.mubr.bf16.gmra.mrb[0].mxu0 %v2655
          %v2734 = vpop.f32.mrb[0].mxu0
          %v2735 = vadd.f32 0.0, %v2734
          %v2736 = vpop.f32.mrb[0].mxu0
          %v2737 = vadd.f32 0.0, %v2736
          %v2738 = vpop.f32.mrb[0].mxu0
          %v2739 = vadd.f32 0.0, %v2738
          %v2740 = vpop.f32.mrb[0].mxu0
          %v2741 = vadd.f32 0.0, %v2740
          %2742 = vdwg.mxu0
          %2743 = vmatprep.subr.bf16.mxu0 %v1486
          %2744 = vmatpush1.bf16.msra.mxu0 %v1485
          %2745 = vmatprep.subr.bf16.mxu0 %v1492
          %2746 = vmatpush1.bf16.msra.mxu0 %v1491
          %2747 = vmatprep.subr.bf16.mxu0 %v1498
          %2748 = vmatpush1.bf16.msra.mxu0 %v1497
          %2749 = vmatprep.subr.bf16.mxu0 %v1504
          %2750 = vmatpush1.bf16.msra.mxu0 %v1503
          %2751 = vmatprep.subr.bf16.mxu0 %v1510
          %2752 = vmatpush1.bf16.msra.mxu0 %v1509
          %2753 = vmatprep.subr.bf16.mxu0 %v1516
          %2754 = vmatpush1.bf16.msra.mxu0 %v1515
          %2755 = vmatprep.subr.bf16.mxu0 %v1522
          %2756 = vmatpush1.bf16.msra.mxu0 %v1521
          %2757 = vmatprep.subr.bf16.mxu0 %v1528
          %2758 = vmatpush1.bf16.msra.mxu0 %v1527
          %2759 = vmatprep.subr.bf16.mxu0 %v1534
          %2760 = vmatpush1.bf16.msra.mxu0 %v1533
          %2761 = vmatprep.subr.bf16.mxu0 %v1540
          %2762 = vmatpush1.bf16.msra.mxu0 %v1539
          %2763 = vmatprep.subr.bf16.mxu0 %v1546
          %2764 = vmatpush1.bf16.msra.mxu0 %v1545
          %2765 = vmatprep.subr.bf16.mxu0 %v1552
          %2766 = vmatpush1.bf16.msra.mxu0 %v1551
          %2767 = vmatprep.subr.bf16.mxu0 %v1558
          %2768 = vmatpush1.bf16.msra.mxu0 %v1557
          %2769 = vmatprep.subr.bf16.mxu0 %v1564
          %2770 = vmatpush1.bf16.msra.mxu0 %v1563
          %2771 = vmatprep.subr.bf16.mxu0 %v1570
          %2772 = vmatpush1.bf16.msra.mxu0 %v1569
          %2773 = vmatprep.subr.bf16.mxu0 %v1576
          %2774 = vmatpush1.bf16.msra.mxu0 %v1575
          %2775 = vmatprep.mubr.bf16.mxu0 %v2656
          %2776 = vmatmul.mubr.bf16.gmra.mrb[0].mxu0 %v2655
          %v2777 = vpop.f32.mrb[0].mxu0
          %v2778 = vadd.f32 0.0, %v2777
          %v2779 = vpop.f32.mrb[0].mxu0
          %v2780 = vadd.f32 0.0, %v2779
          %v2781 = vpop.f32.mrb[0].mxu0
          %v2782 = vadd.f32 0.0, %v2781
          %v2783 = vpop.f32.mrb[0].mxu0
          %v2784 = vadd.f32 0.0, %v2783
          %2785 = vdwg.mxu0
          %v2786 = vld [vmem:[%s2557] sm:$0xff]
          %v2787 = vld [vmem:[%s2557 + $0x8] sm:$0xff]
          %v2788 = vld [vmem:[%s2557 + $0x10] sm:$0xff]
          %v2789 = vunpack.c.l.bf16 %v2786
          %v2790 = vunpack.c.l.bf16 %v2787
          %v2791 = vunpack.c.l.bf16 %v2788
          %v2792 = vunpack.c.h.bf16 %v2786
          %v2793 = vunpack.c.h.bf16 %v2787
          %v2794 = vunpack.c.h.bf16 %v2788
          %v2795 = vld [vmem:[%s2545 + $0x18] sm:$0xff]
          %v2796 = vld [vmem:[%s2545 + $0x20] sm:$0xff]
          %v2797 = vld [vmem:[%s2545 + $0x28] sm:$0xff]
          %v2798 = vunpack.c.l.bf16 %v2795
          %v2799 = vunpack.c.l.bf16 %v2796
          %v2800 = vunpack.c.l.bf16 %v2797
          %v2801 = vunpack.c.h.bf16 %v2795
          %v2802 = vunpack.c.h.bf16 %v2796
          %v2803 = vunpack.c.h.bf16 %v2797
          %v2804 = vadd.f32 %v2789, %v2692
          %v2805 = vadd.f32 %v2792, %v2696
          %v2806 = vxor.u32 %v2804, 2147483648
          %v2807 = vxor.u32 %v2805, 2147483648
          %v2808 = vmul.f32 %v2806, 1.442695
          %v2809 = vpow.pop %v2808
          %v2810 = vmul.f32 %v2807, 1.442695
          %v2811 = vpow.pop %v2810
          %v2812 = vadd.f32 %v2809, 1.0
          %v2813 = vadd.f32 %v2811, 1.0
          %v2814 = vrcp.pop %v2812
          %v2815 = vmul.f32 1.0, %v2814
          %v2816 = vrcp.pop %v2813
          %v2817 = vmul.f32 1.0, %v2816
          %v2818 = vadd.f32 %v2790, %v2694
          %v2819 = vadd.f32 %v2793, %v2698
          %v2820 = vxor.u32 %v2818, 2147483648
          %v2821 = vxor.u32 %v2819, 2147483648
          %v2822 = vmul.f32 %v2820, 1.442695
          %v2823 = vpow.pop %v2822
          %v2824 = vmul.f32 %v2821, 1.442695
          %v2825 = vpow.pop %v2824
          %v2826 = vadd.f32 %v2823, 1.0
          %v2827 = vadd.f32 %v2825, 1.0
          %v2828 = vrcp.pop %v2826
          %v2829 = vmul.f32 1.0, %v2828
          %v2830 = vrcp.pop %v2827
          %v2831 = vmul.f32 1.0, %v2830
          %v2832 = vadd.f32 %v2735, %v1858
          %v2833 = vadd.f32 %v2739, %v1858
          %v2834 = vmul.f32 %v2815, %v2832
          %v2835 = vmul.f32 %v2817, %v2833
          %v2836 = vadd.f32 %v2791, %v2834
          %v2837 = vadd.f32 %v2794, %v2835
          %v2838 = vtanh.pop %v2836
          %v2839 = vtanh.pop %v2837
          %v2840 = vsub.f32 1.0, %v2829
          %v2841 = vsub.f32 1.0, %v2831
          %v2842 = vmul.f32 %v2840, %v2838
          %v2843 = vmul.f32 %v2841, %v2839
          %v2844 = vmul.f32 %v2829, %v2609
          %v2845 = vmul.f32 %v2831, %v2610
          %v2846 = vadd.f32 %v2842, %v2844
          %v2847 = vadd.f32 %v2843, %v2845
          %v2848 = vadd.f32 %v2798, %v2737
          %v2849 = vadd.f32 %v2801, %v2741
          %v2850 = vxor.u32 %v2848, 2147483648
          %v2851 = vxor.u32 %v2849, 2147483648
          %v2852 = vmul.f32 %v2850, 1.442695
          %v2853 = vpow.pop %v2852
          %v2854 = vmul.f32 %v2851, 1.442695
          %v2855 = vpow.pop %v2854
          %v2856 = vadd.f32 %v2853, 1.0
          %v2857 = vadd.f32 %v2855, 1.0
          %v2858 = vrcp.pop %v2856
          %v2859 = vmul.f32 1.0, %v2858
          %v2860 = vrcp.pop %v2857
          %v2861 = vmul.f32 1.0, %v2860
          %v2862 = vadd.f32 %v2799, %v2778
          %v2863 = vadd.f32 %v2802, %v2782
          %v2864 = vxor.u32 %v2862, 2147483648
          %v2865 = vxor.u32 %v2863, 2147483648
          %v2866 = vmul.f32 %v2864, 1.442695
          %v2867 = vpow.pop %v2866
          %v2868 = vmul.f32 %v2865, 1.442695
          %v2869 = vpow.pop %v2868
          %v2870 = vadd.f32 %v2867, 1.0
          %v2871 = vadd.f32 %v2869, 1.0
          %v2872 = vrcp.pop %v2870
          %v2873 = vmul.f32 1.0, %v2872
          %v2874 = vrcp.pop %v2871
          %v2875 = vmul.f32 1.0, %v2874
          %v2876 = vadd.f32 %v2780, %v1908
          %v2877 = vadd.f32 %v2784, %v1908
          %v2878 = vmul.f32 %v2859, %v2876
          %v2879 = vmul.f32 %v2861, %v2877
          %v2880 = vadd.f32 %v2800, %v2878
          %v2881 = vadd.f32 %v2803, %v2879
          %v2882 = vtanh.pop %v2880
          %v2883 = vtanh.pop %v2881
          %v2884 = vsub.f32 1.0, %v2873
          %v2885 = vsub.f32 1.0, %v2875
          %v2886 = vmul.f32 %v2884, %v2882
          %v2887 = vmul.f32 %v2885, %v2883
          %v2888 = vmul.f32 %v2873, %v2653
          %v2889 = vmul.f32 %v2875, %v2654
          %v2890 = vadd.f32 %v2886, %v2888
          %v2891 = vadd.f32 %v2887, %v2889
          %v2892 = vpack.c.bf16 %v2847, %v2846
          %v2893 = vpack.c.bf16 %v2891, %v2890
          %2894 = vmatprep.subr.bf16.mxu0 %v1482
          %2895 = vmatpush1.bf16.msra.mxu0 %v1481
          %2896 = vmatprep.subr.bf16.mxu0 %v1488
          %2897 = vmatpush1.bf16.msra.mxu0 %v1487
          %2898 = vmatprep.subr.bf16.mxu0 %v1494
          %2899 = vmatpush1.bf16.msra.mxu0 %v1493
          %2900 = vmatprep.subr.bf16.mxu0 %v1500
          %2901 = vmatpush1.bf16.msra.mxu0 %v1499
          %2902 = vmatprep.subr.bf16.mxu0 %v1506
          %2903 = vmatpush1.bf16.msra.mxu0 %v1505
          %2904 = vmatprep.subr.bf16.mxu0 %v1512
          %2905 = vmatpush1.bf16.msra.mxu0 %v1511
          %2906 = vmatprep.subr.bf16.mxu0 %v1518
          %2907 = vmatpush1.bf16.msra.mxu0 %v1517
          %2908 = vmatprep.subr.bf16.mxu0 %v1524
          %2909 = vmatpush1.bf16.msra.mxu0 %v1523
          %2910 = vmatprep.subr.bf16.mxu0 %v1530
          %2911 = vmatpush1.bf16.msra.mxu0 %v1529
          %2912 = vmatprep.subr.bf16.mxu0 %v1536
          %2913 = vmatpush1.bf16.msra.mxu0 %v1535
          %2914 = vmatprep.subr.bf16.mxu0 %v1542
          %2915 = vmatpush1.bf16.msra.mxu0 %v1541
          %2916 = vmatprep.subr.bf16.mxu0 %v1548
          %2917 = vmatpush1.bf16.msra.mxu0 %v1547
          %2918 = vmatprep.subr.bf16.mxu0 %v1554
          %2919 = vmatpush1.bf16.msra.mxu0 %v1553
          %2920 = vmatprep.subr.bf16.mxu0 %v1560
          %2921 = vmatpush1.bf16.msra.mxu0 %v1559
          %2922 = vmatprep.subr.bf16.mxu0 %v1566
          %2923 = vmatpush1.bf16.msra.mxu0 %v1565
          %2924 = vmatprep.subr.bf16.mxu0 %v1572
          %2925 = vmatpush1.bf16.msra.mxu0 %v1571
          %2926 = vmatprep.mubr.bf16.mxu0 %v2893
          %2927 = vmatmul.mubr.bf16.gmra.mrb[0].mxu0 %v2892
          %v2928 = vpop.f32.mrb[0].mxu0
          %v2929 = vadd.f32 0.0, %v2928
          %v2930 = vpop.f32.mrb[0].mxu0
          %v2931 = vadd.f32 0.0, %v2930
          %v2932 = vpop.f32.mrb[0].mxu0
          %v2933 = vadd.f32 0.0, %v2932
          %v2934 = vpop.f32.mrb[0].mxu0
          %v2935 = vadd.f32 0.0, %v2934
          %2936 = vdwg.mxu0
          %2937 = vmatprep.subr.bf16.mxu0 %v1484
          %2938 = vmatpush1.bf16.msra.mxu0 %v1483
          %2939 = vmatprep.subr.bf16.mxu0 %v1490
          %2940 = vmatpush1.bf16.msra.mxu0 %v1489
          %2941 = vmatprep.subr.bf16.mxu0 %v1496
          %2942 = vmatpush1.bf16.msra.mxu0 %v1495
          %2943 = vmatprep.subr.bf16.mxu0 %v1502
          %2944 = vmatpush1.bf16.msra.mxu0 %v1501
          %2945 = vmatprep.subr.bf16.mxu0 %v1508
          %2946 = vmatpush1.bf16.msra.mxu0 %v1507
          %2947 = vmatprep.subr.bf16.mxu0 %v1514
          %2948 = vmatpush1.bf16.msra.mxu0 %v1513
          %2949 = vmatprep.subr.bf16.mxu0 %v1520
          %2950 = vmatpush1.bf16.msra.mxu0 %v1519
          %2951 = vmatprep.subr.bf16.mxu0 %v1526
          %2952 = vmatpush1.bf16.msra.mxu0 %v1525
          %2953 = vmatprep.subr.bf16.mxu0 %v1532
          %2954 = vmatpush1.bf16.msra.mxu0 %v1531
          %2955 = vmatprep.subr.bf16.mxu0 %v1538
          %2956 = vmatpush1.bf16.msra.mxu0 %v1537
          %2957 = vmatprep.subr.bf16.mxu0 %v1544
          %2958 = vmatpush1.bf16.msra.mxu0 %v1543
          %2959 = vmatprep.subr.bf16.mxu0 %v1550
          %2960 = vmatpush1.bf16.msra.mxu0 %v1549
          %2961 = vmatprep.subr.bf16.mxu0 %v1556
          %2962 = vmatpush1.bf16.msra.mxu0 %v1555
          %2963 = vmatprep.subr.bf16.mxu0 %v1562
          %2964 = vmatpush1.bf16.msra.mxu0 %v1561
          %2965 = vmatprep.subr.bf16.mxu0 %v1568
          %2966 = vmatpush1.bf16.msra.mxu0 %v1567
          %2967 = vmatprep.subr.bf16.mxu0 %v1574
          %2968 = vmatpush1.bf16.msra.mxu0 %v1573
          %2969 = vmatprep.mubr.bf16.mxu0 %v2893
          %2970 = vmatmul.mubr.bf16.gmra.mrb[0].mxu0 %v2892
          %v2971 = vpop.f32.mrb[0].mxu0
          %v2972 = vadd.f32 0.0, %v2971
          %v2973 = vpop.f32.mrb[0].mxu0
          %v2974 = vadd.f32 0.0, %v2973
          %v2975 = vpop.f32.mrb[0].mxu0
          %v2976 = vadd.f32 0.0, %v2975
          %v2977 = vpop.f32.mrb[0].mxu0
          %v2978 = vadd.f32 0.0, %v2977
          %2979 = vdwg.mxu0
          %2980 = vmatprep.subr.bf16.mxu0 %v1486
          %2981 = vmatpush1.bf16.msra.mxu0 %v1485
          %2982 = vmatprep.subr.bf16.mxu0 %v1492
          %2983 = vmatpush1.bf16.msra.mxu0 %v1491
          %2984 = vmatprep.subr.bf16.mxu0 %v1498
          %2985 = vmatpush1.bf16.msra.mxu0 %v1497
          %2986 = vmatprep.subr.bf16.mxu0 %v1504
          %2987 = vmatpush1.bf16.msra.mxu0 %v1503
          %2988 = vmatprep.subr.bf16.mxu0 %v1510
          %2989 = vmatpush1.bf16.msra.mxu0 %v1509
          %2990 = vmatprep.subr.bf16.mxu0 %v1516
          %2991 = vmatpush1.bf16.msra.mxu0 %v1515
          %2992 = vmatprep.subr.bf16.mxu0 %v1522
          %2993 = vmatpush1.bf16.msra.mxu0 %v1521
          %2994 = vmatprep.subr.bf16.mxu0 %v1528
          %2995 = vmatpush1.bf16.msra.mxu0 %v1527
          %2996 = vmatprep.subr.bf16.mxu0 %v1534
          %2997 = vmatpush1.bf16.msra.mxu0 %v1533
          %2998 = vmatprep.subr.bf16.mxu0 %v1540
          %2999 = vmatpush1.bf16.msra.mxu0 %v1539
          %3000 = vmatprep.subr.bf16.mxu0 %v1546
          %3001 = vmatpush1.bf16.msra.mxu0 %v1545
          %3002 = vmatprep.subr.bf16.mxu0 %v1552
          %3003 = vmatpush1.bf16.msra.mxu0 %v1551
          %3004 = vmatprep.subr.bf16.mxu0 %v1558
          %3005 = vmatpush1.bf16.msra.mxu0 %v1557
          %3006 = vmatprep.subr.bf16.mxu0 %v1564
          %3007 = vmatpush1.bf16.msra.mxu0 %v1563
          %3008 = vmatprep.subr.bf16.mxu0 %v1570
          %3009 = vmatpush1.bf16.msra.mxu0 %v1569
          %3010 = vmatprep.subr.bf16.mxu0 %v1576
          %3011 = vmatpush1.bf16.msra.mxu0 %v1575
          %3012 = vmatprep.mubr.bf16.mxu0 %v2893
          %3013 = vmatmul.mubr.bf16.gmra.mrb[0].mxu0 %v2892
          %v3014 = vpop.f32.mrb[0].mxu0
          %v3015 = vadd.f32 0.0, %v3014
          %v3016 = vpop.f32.mrb[0].mxu0
          %v3017 = vadd.f32 0.0, %v3016
          %v3018 = vpop.f32.mrb[0].mxu0
          %v3019 = vadd.f32 0.0, %v3018
          %v3020 = vpop.f32.mrb[0].mxu0
          %v3021 = vadd.f32 0.0, %v3020
          %3022 = vdwg.mxu0
          %v3023 = vld [vmem:[%s2314] sm:$0xff]
          %v3024 = vld [vmem:[%s2314 + $0x8] sm:$0xff]
          %v3025 = vld [vmem:[%s2314 + $0x10] sm:$0xff]
          %v3026 = vunpack.c.l.bf16 %v3023
          %v3027 = vunpack.c.l.bf16 %v3024
          %v3028 = vunpack.c.l.bf16 %v3025
          %v3029 = vunpack.c.h.bf16 %v3023
          %v3030 = vunpack.c.h.bf16 %v3024
          %v3031 = vunpack.c.h.bf16 %v3025
          %v3032 = vld [vmem:[%s2302 + $0x18] sm:$0xff]
          %v3033 = vld [vmem:[%s2302 + $0x20] sm:$0xff]
          %v3034 = vld [vmem:[%s2302 + $0x28] sm:$0xff]
          %v3035 = vunpack.c.l.bf16 %v3032
          %v3036 = vunpack.c.l.bf16 %v3033
          %v3037 = vunpack.c.l.bf16 %v3034
          %v3038 = vunpack.c.h.bf16 %v3032
          %v3039 = vunpack.c.h.bf16 %v3033
          %v3040 = vunpack.c.h.bf16 %v3034
          %v3041 = vadd.f32 %v3026, %v2929
          %v3042 = vadd.f32 %v3029, %v2933
          %v3043 = vxor.u32 %v3041, 2147483648
          %v3044 = vxor.u32 %v3042, 2147483648
          %v3045 = vmul.f32 %v3043, 1.442695
          %v3046 = vpow.pop %v3045
          %v3047 = vmul.f32 %v3044, 1.442695
          %v3048 = vpow.pop %v3047
          %v3049 = vadd.f32 %v3046, 1.0
          %v3050 = vadd.f32 %v3048, 1.0
          %v3051 = vrcp.pop %v3049
          %v3052 = vmul.f32 1.0, %v3051
          %v3053 = vrcp.pop %v3050
          %v3054 = vmul.f32 1.0, %v3053
          %v3055 = vadd.f32 %v3027, %v2931
          %v3056 = vadd.f32 %v3030, %v2935
          %v3057 = vxor.u32 %v3055, 2147483648
          %v3058 = vxor.u32 %v3056, 2147483648
          %v3059 = vmul.f32 %v3057, 1.442695
          %v3060 = vpow.pop %v3059
          %v3061 = vmul.f32 %v3058, 1.442695
          %v3062 = vpow.pop %v3061
          %v3063 = vadd.f32 %v3060, 1.0
          %v3064 = vadd.f32 %v3062, 1.0
          %v3065 = vrcp.pop %v3063
          %v3066 = vmul.f32 1.0, %v3065
          %v3067 = vrcp.pop %v3064
          %v3068 = vmul.f32 1.0, %v3067
          %v3069 = vadd.f32 %v2972, %v1858
          %v3070 = vadd.f32 %v2976, %v1858
          %v3071 = vmul.f32 %v3052, %v3069
          %v3072 = vmul.f32 %v3054, %v3070
          %v3073 = vadd.f32 %v3028, %v3071
          %v3074 = vadd.f32 %v3031, %v3072
          %v3075 = vtanh.pop %v3073
          %v3076 = vtanh.pop %v3074
          %v3077 = vsub.f32 1.0, %v3066
          %v3078 = vsub.f32 1.0, %v3068
          %v3079 = vmul.f32 %v3077, %v3075
          %v3080 = vmul.f32 %v3078, %v3076
          %v3081 = vmul.f32 %v3066, %v2846
          %v3082 = vmul.f32 %v3068, %v2847
          %v3083 = vadd.f32 %v3079, %v3081
          %v3084 = vadd.f32 %v3080, %v3082
          %v3085 = vadd.f32 %v3035, %v2974
          %v3086 = vadd.f32 %v3038, %v2978
          %v3087 = vxor.u32 %v3085, 2147483648
          %v3088 = vxor.u32 %v3086, 2147483648
          %v3089 = vmul.f32 %v3087, 1.442695
          %v3090 = vpow.pop %v3089
          %v3091 = vmul.f32 %v3088, 1.442695
          %v3092 = vpow.pop %v3091
          %v3093 = vadd.f32 %v3090, 1.0
          %v3094 = vadd.f32 %v3092, 1.0
          %v3095 = vrcp.pop %v3093
          %v3096 = vmul.f32 1.0, %v3095
          %v3097 = vrcp.pop %v3094
          %v3098 = vmul.f32 1.0, %v3097
          %v3099 = vadd.f32 %v3036, %v3015
          %v3100 = vadd.f32 %v3039, %v3019
          %v3101 = vxor.u32 %v3099, 2147483648
          %v3102 = vxor.u32 %v3100, 2147483648
          %v3103 = vmul.f32 %v3101, 1.442695
          %v3104 = vpow.pop %v3103
          %v3105 = vmul.f32 %v3102, 1.442695
          %v3106 = vpow.pop %v3105
          %v3107 = vadd.f32 %v3104, 1.0
          %v3108 = vadd.f32 %v3106, 1.0
          %v3109 = vrcp.pop %v3107
          %v3110 = vmul.f32 1.0, %v3109
          %v3111 = vrcp.pop %v3108
          %v3112 = vmul.f32 1.0, %v3111
          %v3113 = vadd.f32 %v3017, %v1908
          %v3114 = vadd.f32 %v3021, %v1908
          %v3115 = vmul.f32 %v3096, %v3113
          %v3116 = vmul.f32 %v3098, %v3114
          %v3117 = vadd.f32 %v3037, %v3115
          %v3118 = vadd.f32 %v3040, %v3116
          %v3119 = vtanh.pop %v3117
          %v3120 = vtanh.pop %v3118
          %v3121 = vsub.f32 1.0, %v3110
          %v3122 = vsub.f32 1.0, %v3112
          %v3123 = vmul.f32 %v3121, %v3119
          %v3124 = vmul.f32 %v3122, %v3120
          %v3125 = vmul.f32 %v3110, %v2890
          %v3126 = vmul.f32 %v3112, %v2891
          %v3127 = vadd.f32 %v3123, %v3125
          %v3128 = vadd.f32 %v3124, %v3126
          %v3129 = vpack.c.bf16 %v3084, %v3083
          %v3130 = vpack.c.bf16 %v3128, %v3127
          %3131 = vmatprep.subr.bf16.mxu0 %v1482
          %3132 = vmatpush1.bf16.msra.mxu0 %v1481
          %3133 = vmatprep.subr.bf16.mxu0 %v1488
          %3134 = vmatpush1.bf16.msra.mxu0 %v1487
          %3135 = vmatprep.subr.bf16.mxu0 %v1494
          %3136 = vmatpush1.bf16.msra.mxu0 %v1493
          %3137 = vmatprep.subr.bf16.mxu0 %v1500
          %3138 = vmatpush1.bf16.msra.mxu0 %v1499
          %3139 = vmatprep.subr.bf16.mxu0 %v1506
          %3140 = vmatpush1.bf16.msra.mxu0 %v1505
          %3141 = vmatprep.subr.bf16.mxu0 %v1512
          %3142 = vmatpush1.bf16.msra.mxu0 %v1511
          %3143 = vmatprep.subr.bf16.mxu0 %v1518
          %3144 = vmatpush1.bf16.msra.mxu0 %v1517
          %3145 = vmatprep.subr.bf16.mxu0 %v1524
          %3146 = vmatpush1.bf16.msra.mxu0 %v1523
          %3147 = vmatprep.subr.bf16.mxu0 %v1530
          %3148 = vmatpush1.bf16.msra.mxu0 %v1529
          %3149 = vmatprep.subr.bf16.mxu0 %v1536
          %3150 = vmatpush1.bf16.msra.mxu0 %v1535
          %3151 = vmatprep.subr.bf16.mxu0 %v1542
          %3152 = vmatpush1.bf16.msra.mxu0 %v1541
          %3153 = vmatprep.subr.bf16.mxu0 %v1548
          %3154 = vmatpush1.bf16.msra.mxu0 %v1547
          %3155 = vmatprep.subr.bf16.mxu0 %v1554
          %3156 = vmatpush1.bf16.msra.mxu0 %v1553
          %3157 = vmatprep.subr.bf16.mxu0 %v1560
          %3158 = vmatpush1.bf16.msra.mxu0 %v1559
          %3159 = vmatprep.subr.bf16.mxu0 %v1566
          %3160 = vmatpush1.bf16.msra.mxu0 %v1565
          %3161 = vmatprep.subr.bf16.mxu0 %v1572
          %3162 = vmatpush1.bf16.msra.mxu0 %v1571
          %3163 = vmatprep.mubr.bf16.mxu0 %v3130
          %3164 = vmatmul.mubr.bf16.gmra.mrb[0].mxu0 %v3129
          %v3165 = vpop.f32.mrb[0].mxu0
          %v3166 = vadd.f32 0.0, %v3165
          %v3167 = vpop.f32.mrb[0].mxu0
          %v3168 = vadd.f32 0.0, %v3167
          %v3169 = vpop.f32.mrb[0].mxu0
          %v3170 = vadd.f32 0.0, %v3169
          %v3171 = vpop.f32.mrb[0].mxu0
          %v3172 = vadd.f32 0.0, %v3171
          %3173 = vdwg.mxu0
          %3174 = vmatprep.subr.bf16.mxu0 %v1484
          %3175 = vmatpush1.bf16.msra.mxu0 %v1483
          %3176 = vmatprep.subr.bf16.mxu0 %v1490
          %3177 = vmatpush1.bf16.msra.mxu0 %v1489
          %3178 = vmatprep.subr.bf16.mxu0 %v1496
          %3179 = vmatpush1.bf16.msra.mxu0 %v1495
          %3180 = vmatprep.subr.bf16.mxu0 %v1502
          %3181 = vmatpush1.bf16.msra.mxu0 %v1501
          %3182 = vmatprep.subr.bf16.mxu0 %v1508
          %3183 = vmatpush1.bf16.msra.mxu0 %v1507
          %3184 = vmatprep.subr.bf16.mxu0 %v1514
          %3185 = vmatpush1.bf16.msra.mxu0 %v1513
          %3186 = vmatprep.subr.bf16.mxu0 %v1520
          %3187 = vmatpush1.bf16.msra.mxu0 %v1519
          %3188 = vmatprep.subr.bf16.mxu0 %v1526
          %3189 = vmatpush1.bf16.msra.mxu0 %v1525
          %3190 = vmatprep.subr.bf16.mxu0 %v1532
          %3191 = vmatpush1.bf16.msra.mxu0 %v1531
          %3192 = vmatprep.subr.bf16.mxu0 %v1538
          %3193 = vmatpush1.bf16.msra.mxu0 %v1537
          %3194 = vmatprep.subr.bf16.mxu0 %v1544
          %3195 = vmatpush1.bf16.msra.mxu0 %v1543
          %3196 = vmatprep.subr.bf16.mxu0 %v1550
          %3197 = vmatpush1.bf16.msra.mxu0 %v1549
          %3198 = vmatprep.subr.bf16.mxu0 %v1556
          %3199 = vmatpush1.bf16.msra.mxu0 %v1555
          %3200 = vmatprep.subr.bf16.mxu0 %v1562
          %3201 = vmatpush1.bf16.msra.mxu0 %v1561
          %3202 = vmatprep.subr.bf16.mxu0 %v1568
          %3203 = vmatpush1.bf16.msra.mxu0 %v1567
          %3204 = vmatprep.subr.bf16.mxu0 %v1574
          %3205 = vmatpush1.bf16.msra.mxu0 %v1573
          %3206 = vmatprep.mubr.bf16.mxu0 %v3130
          %3207 = vmatmul.mubr.bf16.gmra.mrb[0].mxu0 %v3129
          %v3208 = vpop.f32.mrb[0].mxu0
          %v3209 = vadd.f32 0.0, %v3208
          %v3210 = vpop.f32.mrb[0].mxu0
          %v3211 = vadd.f32 0.0, %v3210
          %v3212 = vpop.f32.mrb[0].mxu0
          %v3213 = vadd.f32 0.0, %v3212
          %v3214 = vpop.f32.mrb[0].mxu0
          %v3215 = vadd.f32 0.0, %v3214
          %3216 = vdwg.mxu0
          %3217 = vmatprep.subr.bf16.mxu0 %v1486
          %3218 = vmatpush1.bf16.msra.mxu0 %v1485
          %3219 = vmatprep.subr.bf16.mxu0 %v1492
          %3220 = vmatpush1.bf16.msra.mxu0 %v1491
          %3221 = vmatprep.subr.bf16.mxu0 %v1498
          %3222 = vmatpush1.bf16.msra.mxu0 %v1497
          %3223 = vmatprep.subr.bf16.mxu0 %v1504
          %3224 = vmatpush1.bf16.msra.mxu0 %v1503
          %3225 = vmatprep.subr.bf16.mxu0 %v1510
          %3226 = vmatpush1.bf16.msra.mxu0 %v1509
          %3227 = vmatprep.subr.bf16.mxu0 %v1516
          %3228 = vmatpush1.bf16.msra.mxu0 %v1515
          %3229 = vmatprep.subr.bf16.mxu0 %v1522
          %3230 = vmatpush1.bf16.msra.mxu0 %v1521
          %3231 = vmatprep.subr.bf16.mxu0 %v1528
          %3232 = vmatpush1.bf16.msra.mxu0 %v1527
          %3233 = vmatprep.subr.bf16.mxu0 %v1534
          %3234 = vmatpush1.bf16.msra.mxu0 %v1533
          %3235 = vmatprep.subr.bf16.mxu0 %v1540
          %3236 = vmatpush1.bf16.msra.mxu0 %v1539
          %3237 = vmatprep.subr.bf16.mxu0 %v1546
          %3238 = vmatpush1.bf16.msra.mxu0 %v1545
          %3239 = vmatprep.subr.bf16.mxu0 %v1552
          %3240 = vmatpush1.bf16.msra.mxu0 %v1551
          %3241 = vmatprep.subr.bf16.mxu0 %v1558
          %3242 = vmatpush1.bf16.msra.mxu0 %v1557
          %3243 = vmatprep.subr.bf16.mxu0 %v1564
          %3244 = vmatpush1.bf16.msra.mxu0 %v1563
          %3245 = vmatprep.subr.bf16.mxu0 %v1570
          %3246 = vmatpush1.bf16.msra.mxu0 %v1569
          %3247 = vmatprep.subr.bf16.mxu0 %v1576
          %3248 = vmatpush1.bf16.msra.mxu0 %v1575
          %3249 = vmatprep.mubr.bf16.mxu0 %v3130
          %3250 = vmatmul.mubr.bf16.gmra.mrb[0].mxu0 %v3129
          %v3251 = vpop.f32.mrb[0].mxu0
          %v3252 = vadd.f32 0.0, %v3251
          %v3253 = vpop.f32.mrb[0].mxu0
          %v3254 = vadd.f32 0.0, %v3253
          %v3255 = vpop.f32.mrb[0].mxu0
          %v3256 = vadd.f32 0.0, %v3255
          %v3257 = vpop.f32.mrb[0].mxu0
          %v3258 = vadd.f32 0.0, %v3257
          %3259 = vdwg.mxu0
          %v3260 = vld [vmem:[%s2071] sm:$0xff]
          %v3261 = vld [vmem:[%s2071 + $0x8] sm:$0xff]
          %v3262 = vld [vmem:[%s2071 + $0x10] sm:$0xff]
          %v3263 = vunpack.c.l.bf16 %v3260
          %v3264 = vunpack.c.l.bf16 %v3261
          %v3265 = vunpack.c.l.bf16 %v3262
          %v3266 = vunpack.c.h.bf16 %v3260
          %v3267 = vunpack.c.h.bf16 %v3261
          %v3268 = vunpack.c.h.bf16 %v3262
          %v3269 = vld [vmem:[%s2059 + $0x18] sm:$0xff]
          %v3270 = vld [vmem:[%s2059 + $0x20] sm:$0xff]
          %v3271 = vld [vmem:[%s2059 + $0x28] sm:$0xff]
          %v3272 = vunpack.c.l.bf16 %v3269
          %v3273 = vunpack.c.l.bf16 %v3270
          %v3274 = vunpack.c.l.bf16 %v3271
          %v3275 = vunpack.c.h.bf16 %v3269
          %v3276 = vunpack.c.h.bf16 %v3270
          %v3277 = vunpack.c.h.bf16 %v3271
          %v3278 = vadd.f32 %v3263, %v3166
          %v3279 = vadd.f32 %v3266, %v3170
          %v3280 = vxor.u32 %v3278, 2147483648
          %v3281 = vxor.u32 %v3279, 2147483648
          %v3282 = vmul.f32 %v3280, 1.442695
          %v3283 = vpow.pop %v3282
          %v3284 = vmul.f32 %v3281, 1.442695
          %v3285 = vpow.pop %v3284
          %v3286 = vadd.f32 %v3283, 1.0
          %v3287 = vadd.f32 %v3285, 1.0
          %v3288 = vrcp.pop %v3286
          %v3289 = vmul.f32 1.0, %v3288
          %v3290 = vrcp.pop %v3287
          %v3291 = vmul.f32 1.0, %v3290
          %v3292 = vadd.f32 %v3264, %v3168
          %v3293 = vadd.f32 %v3267, %v3172
          %v3294 = vxor.u32 %v3292, 2147483648
          %v3295 = vxor.u32 %v3293, 2147483648
          %v3296 = vmul.f32 %v3294, 1.442695
          %v3297 = vpow.pop %v3296
          %v3298 = vmul.f32 %v3295, 1.442695
          %v3299 = vpow.pop %v3298
          %v3300 = vadd.f32 %v3297, 1.0
          %v3301 = vadd.f32 %v3299, 1.0
          %v3302 = vrcp.pop %v3300
          %v3303 = vmul.f32 1.0, %v3302
          %v3304 = vrcp.pop %v3301
          %v3305 = vmul.f32 1.0, %v3304
          %v3306 = vadd.f32 %v3209, %v1858
          %v3307 = vadd.f32 %v3213, %v1858
          %v3308 = vmul.f32 %v3289, %v3306
          %v3309 = vmul.f32 %v3291, %v3307
          %v3310 = vadd.f32 %v3265, %v3308
          %v3311 = vadd.f32 %v3268, %v3309
          %v3312 = vtanh.pop %v3310
          %v3313 = vtanh.pop %v3311
          %v3314 = vsub.f32 1.0, %v3303
          %v3315 = vsub.f32 1.0, %v3305
          %v3316 = vmul.f32 %v3314, %v3312
          %v3317 = vmul.f32 %v3315, %v3313
          %v3318 = vmul.f32 %v3303, %v3083
          %v3319 = vmul.f32 %v3305, %v3084
          %v3320 = vadd.f32 %v3316, %v3318
          %v3321 = vadd.f32 %v3317, %v3319
          %v3322 = vadd.f32 %v3272, %v3211
          %v3323 = vadd.f32 %v3275, %v3215
          %v3324 = vxor.u32 %v3322, 2147483648
          %v3325 = vxor.u32 %v3323, 2147483648
          %v3326 = vmul.f32 %v3324, 1.442695
          %v3327 = vpow.pop %v3326
          %v3328 = vmul.f32 %v3325, 1.442695
          %v3329 = vpow.pop %v3328
          %v3330 = vadd.f32 %v3327, 1.0
          %v3331 = vadd.f32 %v3329, 1.0
          %v3332 = vrcp.pop %v3330
          %v3333 = vmul.f32 1.0, %v3332
          %v3334 = vrcp.pop %v3331
          %v3335 = vmul.f32 1.0, %v3334
          %v3336 = vadd.f32 %v3273, %v3252
          %v3337 = vadd.f32 %v3276, %v3256
          %v3338 = vxor.u32 %v3336, 2147483648
          %v3339 = vxor.u32 %v3337, 2147483648
          %v3340 = vmul.f32 %v3338, 1.442695
          %v3341 = vpow.pop %v3340
          %v3342 = vmul.f32 %v3339, 1.442695
          %v3343 = vpow.pop %v3342
          %v3344 = vadd.f32 %v3341, 1.0
          %v3345 = vadd.f32 %v3343, 1.0
          %v3346 = vrcp.pop %v3344
          %v3347 = vmul.f32 1.0, %v3346
          %v3348 = vrcp.pop %v3345
          %v3349 = vmul.f32 1.0, %v3348
          %v3350 = vadd.f32 %v3254, %v1908
          %v3351 = vadd.f32 %v3258, %v1908
          %v3352 = vmul.f32 %v3333, %v3350
          %v3353 = vmul.f32 %v3335, %v3351
          %v3354 = vadd.f32 %v3274, %v3352
          %v3355 = vadd.f32 %v3277, %v3353
          %v3356 = vtanh.pop %v3354
          %v3357 = vtanh.pop %v3355
          %v3358 = vsub.f32 1.0, %v3347
          %v3359 = vsub.f32 1.0, %v3349
          %v3360 = vmul.f32 %v3358, %v3356
          %v3361 = vmul.f32 %v3359, %v3357
          %v3362 = vmul.f32 %v3347, %v3127
          %v3363 = vmul.f32 %v3349, %v3128
          %v3364 = vadd.f32 %v3360, %v3362
          %v3365 = vadd.f32 %v3361, %v3363
          %v3366 = vpack.c.bf16 %v3321, %v3320
          %v3367 = vpack.c.bf16 %v3365, %v3364
          %3368 = vmatprep.subr.bf16.mxu0 %v1482
          %3369 = vmatpush1.bf16.msra.mxu0 %v1481
          %3370 = vmatprep.subr.bf16.mxu0 %v1488
          %3371 = vmatpush1.bf16.msra.mxu0 %v1487
          %3372 = vmatprep.subr.bf16.mxu0 %v1494
          %3373 = vmatpush1.bf16.msra.mxu0 %v1493
          %3374 = vmatprep.subr.bf16.mxu0 %v1500
          %3375 = vmatpush1.bf16.msra.mxu0 %v1499
          %3376 = vmatprep.subr.bf16.mxu0 %v1506
          %3377 = vmatpush1.bf16.msra.mxu0 %v1505
          %3378 = vmatprep.subr.bf16.mxu0 %v1512
          %3379 = vmatpush1.bf16.msra.mxu0 %v1511
          %3380 = vmatprep.subr.bf16.mxu0 %v1518
          %3381 = vmatpush1.bf16.msra.mxu0 %v1517
          %3382 = vmatprep.subr.bf16.mxu0 %v1524
          %3383 = vmatpush1.bf16.msra.mxu0 %v1523
          %3384 = vmatprep.subr.bf16.mxu0 %v1530
          %3385 = vmatpush1.bf16.msra.mxu0 %v1529
          %3386 = vmatprep.subr.bf16.mxu0 %v1536
          %3387 = vmatpush1.bf16.msra.mxu0 %v1535
          %3388 = vmatprep.subr.bf16.mxu0 %v1542
          %3389 = vmatpush1.bf16.msra.mxu0 %v1541
          %3390 = vmatprep.subr.bf16.mxu0 %v1548
          %3391 = vmatpush1.bf16.msra.mxu0 %v1547
          %3392 = vmatprep.subr.bf16.mxu0 %v1554
          %3393 = vmatpush1.bf16.msra.mxu0 %v1553
          %3394 = vmatprep.subr.bf16.mxu0 %v1560
          %3395 = vmatpush1.bf16.msra.mxu0 %v1559
          %3396 = vmatprep.subr.bf16.mxu0 %v1566
          %3397 = vmatpush1.bf16.msra.mxu0 %v1565
          %3398 = vmatprep.subr.bf16.mxu0 %v1572
          %3399 = vmatpush1.bf16.msra.mxu0 %v1571
          %3400 = vmatprep.mubr.bf16.mxu0 %v3367
          %3401 = vmatmul.mubr.bf16.gmra.mrb[0].mxu0 %v3366
          %v3402 = vpop.f32.mrb[0].mxu0
          %v3403 = vadd.f32 0.0, %v3402
          %v3404 = vpop.f32.mrb[0].mxu0
          %v3405 = vadd.f32 0.0, %v3404
          %v3406 = vpop.f32.mrb[0].mxu0
          %v3407 = vadd.f32 0.0, %v3406
          %v3408 = vpop.f32.mrb[0].mxu0
          %v3409 = vadd.f32 0.0, %v3408
          %3410 = vdwg.mxu0
          %3411 = vmatprep.subr.bf16.mxu0 %v1484
          %3412 = vmatpush1.bf16.msra.mxu0 %v1483
          %3413 = vmatprep.subr.bf16.mxu0 %v1490
          %3414 = vmatpush1.bf16.msra.mxu0 %v1489
          %3415 = vmatprep.subr.bf16.mxu0 %v1496
          %3416 = vmatpush1.bf16.msra.mxu0 %v1495
          %3417 = vmatprep.subr.bf16.mxu0 %v1502
          %3418 = vmatpush1.bf16.msra.mxu0 %v1501
          %3419 = vmatprep.subr.bf16.mxu0 %v1508
          %3420 = vmatpush1.bf16.msra.mxu0 %v1507
          %3421 = vmatprep.subr.bf16.mxu0 %v1514
          %3422 = vmatpush1.bf16.msra.mxu0 %v1513
          %3423 = vmatprep.subr.bf16.mxu0 %v1520
          %3424 = vmatpush1.bf16.msra.mxu0 %v1519
          %3425 = vmatprep.subr.bf16.mxu0 %v1526
          %3426 = vmatpush1.bf16.msra.mxu0 %v1525
          %3427 = vmatprep.subr.bf16.mxu0 %v1532
          %3428 = vmatpush1.bf16.msra.mxu0 %v1531
          %3429 = vmatprep.subr.bf16.mxu0 %v1538
          %3430 = vmatpush1.bf16.msra.mxu0 %v1537
          %3431 = vmatprep.subr.bf16.mxu0 %v1544
          %3432 = vmatpush1.bf16.msra.mxu0 %v1543
          %3433 = vmatprep.subr.bf16.mxu0 %v1550
          %3434 = vmatpush1.bf16.msra.mxu0 %v1549
          %3435 = vmatprep.subr.bf16.mxu0 %v1556
          %3436 = vmatpush1.bf16.msra.mxu0 %v1555
          %3437 = vmatprep.subr.bf16.mxu0 %v1562
          %3438 = vmatpush1.bf16.msra.mxu0 %v1561
          %3439 = vmatprep.subr.bf16.mxu0 %v1568
          %3440 = vmatpush1.bf16.msra.mxu0 %v1567
          %3441 = vmatprep.subr.bf16.mxu0 %v1574
          %3442 = vmatpush1.bf16.msra.mxu0 %v1573
          %3443 = vmatprep.mubr.bf16.mxu0 %v3367
          %3444 = vmatmul.mubr.bf16.gmra.mrb[0].mxu0 %v3366
          %v3445 = vpop.f32.mrb[0].mxu0
          %v3446 = vadd.f32 0.0, %v3445
          %v3447 = vpop.f32.mrb[0].mxu0
          %v3448 = vadd.f32 0.0, %v3447
          %v3449 = vpop.f32.mrb[0].mxu0
          %v3450 = vadd.f32 0.0, %v3449
          %v3451 = vpop.f32.mrb[0].mxu0
          %v3452 = vadd.f32 0.0, %v3451
          %3453 = vdwg.mxu0
          %3454 = vmatprep.subr.bf16.mxu0 %v1486
          %3455 = vmatpush1.bf16.msra.mxu0 %v1485
          %3456 = vmatprep.subr.bf16.mxu0 %v1492
          %3457 = vmatpush1.bf16.msra.mxu0 %v1491
          %3458 = vmatprep.subr.bf16.mxu0 %v1498
          %3459 = vmatpush1.bf16.msra.mxu0 %v1497
          %3460 = vmatprep.subr.bf16.mxu0 %v1504
          %3461 = vmatpush1.bf16.msra.mxu0 %v1503
          %3462 = vmatprep.subr.bf16.mxu0 %v1510
          %3463 = vmatpush1.bf16.msra.mxu0 %v1509
          %3464 = vmatprep.subr.bf16.mxu0 %v1516
          %3465 = vmatpush1.bf16.msra.mxu0 %v1515
          %3466 = vmatprep.subr.bf16.mxu0 %v1522
          %3467 = vmatpush1.bf16.msra.mxu0 %v1521
          %3468 = vmatprep.subr.bf16.mxu0 %v1528
          %3469 = vmatpush1.bf16.msra.mxu0 %v1527
          %3470 = vmatprep.subr.bf16.mxu0 %v1534
          %3471 = vmatpush1.bf16.msra.mxu0 %v1533
          %3472 = vmatprep.subr.bf16.mxu0 %v1540
          %3473 = vmatpush1.bf16.msra.mxu0 %v1539
          %3474 = vmatprep.subr.bf16.mxu0 %v1546
          %3475 = vmatpush1.bf16.msra.mxu0 %v1545
          %3476 = vmatprep.subr.bf16.mxu0 %v1552
          %3477 = vmatpush1.bf16.msra.mxu0 %v1551
          %3478 = vmatprep.subr.bf16.mxu0 %v1558
          %3479 = vmatpush1.bf16.msra.mxu0 %v1557
          %3480 = vmatprep.subr.bf16.mxu0 %v1564
          %3481 = vmatpush1.bf16.msra.mxu0 %v1563
          %3482 = vmatprep.subr.bf16.mxu0 %v1570
          %3483 = vmatpush1.bf16.msra.mxu0 %v1569
          %3484 = vmatprep.subr.bf16.mxu0 %v1576
          %3485 = vmatpush1.bf16.msra.mxu0 %v1575
          %3486 = vmatprep.mubr.bf16.mxu0 %v3367
          %3487 = vmatmul.mubr.bf16.gmra.mrb[0].mxu0 %v3366
          %v3488 = vpop.f32.mrb[0].mxu0
          %v3489 = vadd.f32 0.0, %v3488
          %v3490 = vpop.f32.mrb[0].mxu0
          %v3491 = vadd.f32 0.0, %v3490
          %v3492 = vpop.f32.mrb[0].mxu0
          %v3493 = vadd.f32 0.0, %v3492
          %v3494 = vpop.f32.mrb[0].mxu0
          %v3495 = vadd.f32 0.0, %v3494
          %3496 = vdwg.mxu0
          %v3497 = vld [vmem:[%s1816] sm:$0xff]
          %v3498 = vld [vmem:[%s1816 + $0x8] sm:$0xff]
          %v3499 = vld [vmem:[%s1816 + $0x10] sm:$0xff]
          %v3500 = vunpack.c.l.bf16 %v3497
          %v3501 = vunpack.c.l.bf16 %v3498
          %v3502 = vunpack.c.l.bf16 %v3499
          %v3503 = vunpack.c.h.bf16 %v3497
          %v3504 = vunpack.c.h.bf16 %v3498
          %v3505 = vunpack.c.h.bf16 %v3499
          %v3506 = vld [vmem:[%s1804 + $0x18] sm:$0xff]
          %v3507 = vld [vmem:[%s1804 + $0x20] sm:$0xff]
          %v3508 = vld [vmem:[%s1804 + $0x28] sm:$0xff]
          %v3509 = vunpack.c.l.bf16 %v3506
          %v3510 = vunpack.c.l.bf16 %v3507
          %v3511 = vunpack.c.l.bf16 %v3508
          %v3512 = vunpack.c.h.bf16 %v3506
          %v3513 = vunpack.c.h.bf16 %v3507
          %v3514 = vunpack.c.h.bf16 %v3508
          %v3515 = vadd.f32 %v3500, %v3403
          %v3516 = vadd.f32 %v3503, %v3407
          %v3517 = vxor.u32 %v3515, 2147483648
          %v3518 = vxor.u32 %v3516, 2147483648
          %v3519 = vmul.f32 %v3517, 1.442695
          %v3520 = vpow.pop %v3519
          %v3521 = vmul.f32 %v3518, 1.442695
          %v3522 = vpow.pop %v3521
          %v3523 = vadd.f32 %v3520, 1.0
          %v3524 = vadd.f32 %v3522, 1.0
          %v3525 = vrcp.pop %v3523
          %v3526 = vmul.f32 1.0, %v3525
          %v3527 = vrcp.pop %v3524
          %v3528 = vmul.f32 1.0, %v3527
          %v3529 = vadd.f32 %v3501, %v3405
          %v3530 = vadd.f32 %v3504, %v3409
          %v3531 = vxor.u32 %v3529, 2147483648
          %v3532 = vxor.u32 %v3530, 2147483648
          %v3533 = vmul.f32 %v3531, 1.442695
          %v3534 = vpow.pop %v3533
          %v3535 = vmul.f32 %v3532, 1.442695
          %v3536 = vpow.pop %v3535
          %v3537 = vadd.f32 %v3534, 1.0
          %v3538 = vadd.f32 %v3536, 1.0
          %v3539 = vrcp.pop %v3537
          %v3540 = vmul.f32 1.0, %v3539
          %v3541 = vrcp.pop %v3538
          %v3542 = vmul.f32 1.0, %v3541
          %v3543 = vadd.f32 %v3446, %v1858
          %v3544 = vadd.f32 %v3450, %v1858
          %v3545 = vmul.f32 %v3526, %v3543
          %v3546 = vmul.f32 %v3528, %v3544
          %v3547 = vadd.f32 %v3502, %v3545
          %v3548 = vadd.f32 %v3505, %v3546
          %v3549 = vtanh.pop %v3547
          %v3550 = vtanh.pop %v3548
          %v3551 = vsub.f32 1.0, %v3540
          %v3552 = vsub.f32 1.0, %v3542
          %v3553 = vmul.f32 %v3551, %v3549
          %v3554 = vmul.f32 %v3552, %v3550
          %v3555 = vmul.f32 %v3540, %v3320
          %v3556 = vmul.f32 %v3542, %v3321
          %v3557 = vadd.f32 %v3553, %v3555
          %v3558 = vadd.f32 %v3554, %v3556
          %v3559 = vadd.f32 %v3509, %v3448
          %v3560 = vadd.f32 %v3512, %v3452
          %v3561 = vxor.u32 %v3559, 2147483648
          %v3562 = vxor.u32 %v3560, 2147483648
          %v3563 = vmul.f32 %v3561, 1.442695
          %v3564 = vpow.pop %v3563
          %v3565 = vmul.f32 %v3562, 1.442695
          %v3566 = vpow.pop %v3565
          %v3567 = vadd.f32 %v3564, 1.0
          %v3568 = vadd.f32 %v3566, 1.0
          %v3569 = vrcp.pop %v3567
          %v3570 = vmul.f32 1.0, %v3569
          %v3571 = vrcp.pop %v3568
          %v3572 = vmul.f32 1.0, %v3571
          %v3573 = vadd.f32 %v3510, %v3489
          %v3574 = vadd.f32 %v3513, %v3493
          %v3575 = vxor.u32 %v3573, 2147483648
          %v3576 = vxor.u32 %v3574, 2147483648
          %v3577 = vmul.f32 %v3575, 1.442695
          %v3578 = vpow.pop %v3577
          %v3579 = vmul.f32 %v3576, 1.442695
          %v3580 = vpow.pop %v3579
          %v3581 = vadd.f32 %v3578, 1.0
          %v3582 = vadd.f32 %v3580, 1.0
          %v3583 = vrcp.pop %v3581
          %v3584 = vmul.f32 1.0, %v3583
          %v3585 = vrcp.pop %v3582
          %v3586 = vmul.f32 1.0, %v3585
          %v3587 = vadd.f32 %v3491, %v1908
          %v3588 = vadd.f32 %v3495, %v1908
          %v3589 = vmul.f32 %v3570, %v3587
          %v3590 = vmul.f32 %v3572, %v3588
          %v3591 = vadd.f32 %v3511, %v3589
          %v3592 = vadd.f32 %v3514, %v3590
          %v3593 = vtanh.pop %v3591
          %v3594 = vtanh.pop %v3592
          %v3595 = vsub.f32 1.0, %v3584
          %v3596 = vsub.f32 1.0, %v3586
          %v3597 = vmul.f32 %v3595, %v3593
          %v3598 = vmul.f32 %v3596, %v3594
          %v3599 = vmul.f32 %v3584, %v3364
          %v3600 = vmul.f32 %v3586, %v3365
          %v3601 = vadd.f32 %v3597, %v3599
          %v3602 = vadd.f32 %v3598, %v3600
          %v3603 = vpack.c.bf16 %v3558, %v3557
          %v3604 = vpack.c.bf16 %v3602, %v3601
          %v3605 = vld [vmem:[#allocation9] sm:$0xf]
          %v3606 = vld [vmem:[#allocation9 + $0x4] sm:$0xf]
          %v3607 = vld [vmem:[#allocation9 + $0x8] sm:$0xf]
          %v3608 = vld [vmem:[#allocation9 + $0xc] sm:$0xf]
          %v3609 = vld [vmem:[#allocation9 + $0x10] sm:$0xf]
          %v3610 = vld [vmem:[#allocation9 + $0x14] sm:$0xf]
          %v3611 = vld [vmem:[#allocation9 + $0x18] sm:$0xf]
          %v3612 = vld [vmem:[#allocation9 + $0x1c] sm:$0xf]
          %v3613 = vld [vmem:[#allocation9 + $0x20] sm:$0xf]
          %v3614 = vld [vmem:[#allocation9 + $0x24] sm:$0xf]
          %v3615 = vld [vmem:[#allocation9 + $0x28] sm:$0xf]
          %v3616 = vld [vmem:[#allocation9 + $0x2c] sm:$0xf]
          %v3617 = vld [vmem:[#allocation9 + $0x30] sm:$0xf]
          %v3618 = vld [vmem:[#allocation9 + $0x34] sm:$0xf]
          %v3619 = vld [vmem:[#allocation9 + $0x38] sm:$0xf]
          %v3620 = vld [vmem:[#allocation9 + $0x3c] sm:$0xf]
          %v3621 = vld [vmem:[#allocation9 + $0x40] sm:$0xf]
          %v3622 = vld [vmem:[#allocation9 + $0x44] sm:$0xf]
          %v3623 = vld [vmem:[#allocation9 + $0x48] sm:$0xf]
          %v3624 = vld [vmem:[#allocation9 + $0x4c] sm:$0xf]
          %v3625 = vld [vmem:[#allocation9 + $0x50] sm:$0xf]
          %v3626 = vld [vmem:[#allocation9 + $0x54] sm:$0xf]
          %v3627 = vld [vmem:[#allocation9 + $0x58] sm:$0xf]
          %v3628 = vld [vmem:[#allocation9 + $0x5c] sm:$0xf]
          %v3629 = vld [vmem:[#allocation9 + $0x60] sm:$0xf]
          %v3630 = vld [vmem:[#allocation9 + $0x64] sm:$0xf]
          %v3631 = vld [vmem:[#allocation9 + $0x68] sm:$0xf]
          %v3632 = vld [vmem:[#allocation9 + $0x6c] sm:$0xf]
          %v3633 = vld [vmem:[#allocation9 + $0x70] sm:$0xf]
          %v3634 = vld [vmem:[#allocation9 + $0x74] sm:$0xf]
          %v3635 = vld [vmem:[#allocation9 + $0x78] sm:$0xf]
          %v3636 = vld [vmem:[#allocation9 + $0x7c] sm:$0xf]
          %v3637 = vld [vmem:[%s6] sm:$0x1]
          %v3639 = vlaneseq
          %v3640 = vshrl.u32 %v3639, 7
          %v3641 = vsub.s32 0, %v3640
          %v3642 = vrot.slane %v3637, %v3641
          %v3676 = vunpack.c.l.b16 %v3605
          %v3677 = vunpack.c.l.b16 %v3606
          %v3678 = vunpack.c.l.b16 %v3607
          %v3679 = vunpack.c.l.b16 %v3608
          %v3680 = vunpack.c.l.b16 %v3609
          %v3681 = vunpack.c.l.b16 %v3610
          %v3682 = vunpack.c.l.b16 %v3611
          %v3683 = vunpack.c.l.b16 %v3612
          %v3684 = vunpack.c.l.b16 %v3613
          %v3685 = vunpack.c.l.b16 %v3614
          %v3686 = vunpack.c.l.b16 %v3615
          %v3687 = vunpack.c.l.b16 %v3616
          %v3688 = vunpack.c.l.b16 %v3617
          %v3689 = vunpack.c.l.b16 %v3618
          %v3690 = vunpack.c.l.b16 %v3619
          %v3691 = vunpack.c.l.b16 %v3620
          %v3692 = vunpack.c.l.b16 %v3621
          %v3693 = vunpack.c.l.b16 %v3622
          %v3694 = vunpack.c.l.b16 %v3623
          %v3695 = vunpack.c.l.b16 %v3624
          %v3696 = vunpack.c.l.b16 %v3625
          %v3697 = vunpack.c.l.b16 %v3626
          %v3698 = vunpack.c.l.b16 %v3627
          %v3699 = vunpack.c.l.b16 %v3628
          %v3700 = vunpack.c.l.b16 %v3629
          %v3701 = vunpack.c.l.b16 %v3630
          %v3702 = vunpack.c.l.b16 %v3631
          %v3703 = vunpack.c.l.b16 %v3632
          %v3704 = vunpack.c.l.b16 %v3633
          %v3705 = vunpack.c.l.b16 %v3634
          %v3706 = vunpack.c.l.b16 %v3635
          %v3707 = vunpack.c.l.b16 %v3636
          %v3708 = vpack.c.b16 %v3677, %v3676
          %v3709 = vpack.c.b16 %v3679, %v3678
          %v3710 = vpack.c.b16 %v3681, %v3680
          %v3711 = vpack.c.b16 %v3683, %v3682
          %v3712 = vpack.c.b16 %v3685, %v3684
          %v3713 = vpack.c.b16 %v3687, %v3686
          %v3714 = vpack.c.b16 %v3689, %v3688
          %v3715 = vpack.c.b16 %v3691, %v3690
          %v3716 = vpack.c.b16 %v3693, %v3692
          %v3717 = vpack.c.b16 %v3695, %v3694
          %v3718 = vpack.c.b16 %v3697, %v3696
          %v3719 = vpack.c.b16 %v3699, %v3698
          %v3720 = vpack.c.b16 %v3701, %v3700
          %v3721 = vpack.c.b16 %v3703, %v3702
          %v3722 = vpack.c.b16 %v3705, %v3704
          %v3723 = vpack.c.b16 %v3707, %v3706
          %3740 = vmatprep.subr.bf16.mxu0 0
          %3741 = vmatpush1.bf16.msra.mxu0 %v3708
          %3742 = vmatprep.subr.bf16.mxu0 0
          %3743 = vmatpush1.bf16.msra.mxu0 %v3709
          %3744 = vmatprep.subr.bf16.mxu0 0
          %3745 = vmatpush1.bf16.msra.mxu0 %v3710
          %3746 = vmatprep.subr.bf16.mxu0 0
          %3747 = vmatpush1.bf16.msra.mxu0 %v3711
          %3748 = vmatprep.subr.bf16.mxu0 0
          %3749 = vmatpush1.bf16.msra.mxu0 %v3712
          %3750 = vmatprep.subr.bf16.mxu0 0
          %3751 = vmatpush1.bf16.msra.mxu0 %v3713
          %3752 = vmatprep.subr.bf16.mxu0 0
          %3753 = vmatpush1.bf16.msra.mxu0 %v3714
          %3754 = vmatprep.subr.bf16.mxu0 0
          %3755 = vmatpush1.bf16.msra.mxu0 %v3715
          %3756 = vmatprep.subr.bf16.mxu0 0
          %3757 = vmatpush1.bf16.msra.mxu0 %v3716
          %3758 = vmatprep.subr.bf16.mxu0 0
          %3759 = vmatpush1.bf16.msra.mxu0 %v3717
          %3760 = vmatprep.subr.bf16.mxu0 0
          %3761 = vmatpush1.bf16.msra.mxu0 %v3718
          %3762 = vmatprep.subr.bf16.mxu0 0
          %3763 = vmatpush1.bf16.msra.mxu0 %v3719
          %3764 = vmatprep.subr.bf16.mxu0 0
          %3765 = vmatpush1.bf16.msra.mxu0 %v3720
          %3766 = vmatprep.subr.bf16.mxu0 0
          %3767 = vmatpush1.bf16.msra.mxu0 %v3721
          %3768 = vmatprep.subr.bf16.mxu0 0
          %3769 = vmatpush1.bf16.msra.mxu0 %v3722
          %3770 = vmatprep.subr.bf16.mxu0 0
          %3771 = vmatpush1.bf16.msra.mxu0 %v3723
          %3772 = vmatprep.mubr.bf16.mxu0 %v3604
          %3773 = vmatmul.mubr.bf16.gmra.mrb[0].mxu0 %v3603
          %v3774 = vpop.f32.mrb[0].mxu0
          %v3775 = vadd.f32 %v3642, %v3774
          %v3776 = vpop.f32.mrb[0].mxu0
          %v3777 = vpop.f32.mrb[0].mxu0
          %v3778 = vadd.f32 %v3642, %v3777
          %v3779 = vpop.f32.mrb[0].mxu0
          %3780 = vdwg.mxu0
          %3781 = vst [vmem:[#allocation11] sm:$0xff] %v3775
          %3782 = vst [vmem:[#allocation11 + $0x8] sm:$0xff] %v3778
        $region68: #{tpu_custom_call.1} parent=47 // pred_fallthru
          _
        // Predicated region
        $region69: #{tpu_custom_call.1} parent=47 // pred_check
          %p3783 = pneg %p189
        $region70: #{tpu_custom_call.1} parent=47 // pred_check_branch
          %3785 = sbr.rel (%p3783) target = $region72
        $region71: #{tpu_custom_call.1} parent=47 // pred_region
          %s3787 = ssub.s32 256, 256
          %3788 = vsyncadd [#allocation5], %s3787
          %s3789 = sshll.u32 [#allocation11], 4
          %s3790 = int_to_ptr.vmem [resolvable:$true] %s3789
          %3795 = dma.vmem_to_hbm [thread:$0]  %s3790, 256, %s7, [#allocation5], 128, 128, 8
        $region72: #{tpu_custom_call.1} parent=47 // pred_fallthru
          _
        // Predicated region
        $region73: #{tpu_custom_call.1} parent=47 // pred_check
          %p3796 = pneg %p189
        $region74: #{tpu_custom_call.1} parent=47 // pred_check_branch
          %3798 = sbr.rel (%p3796) target = $region76
        $region75: #{tpu_custom_call.1} parent=47 // pred_region
          %3799 = dma.done [#allocation5], 256
        $region76: #{tpu_custom_call.1} parent=47 // pred_fallthru
          _
      $region48: #{tpu_custom_call.1} parent=5 // pred_fallthru
        _
      %p3800 = scmp.le.s32.totalorder 2, %s19
      // Predicated region
      $region77: #{tpu_custom_call.1} parent=5 // pred_check
        %p3801 = pneg %p3800
      $region78: #{tpu_custom_call.1} parent=5 // pred_check_branch
        %3803 = sbr.rel (%p3801) target = $region80
      $region79: #{tpu_custom_call.1} parent=5 // pred_region
        %s3804 = ssub.s32 %s19, 2
      $region80: #{tpu_custom_call.1} parent=5 // pred_fallthru
        _
    $region6: #{tpu_custom_call.1} parent=1 // loop_footer
      %s23 = sadd.s32 1, %s19
    $region7: #{tpu_custom_call.1} parent=1 // loop_footer_branch
      %18 = sbr.rel target = $region3
    $region8: #{tpu_custom_call.1} parent=1 // loop_exit
      _
    %3805 = vsyncpa [#allocation4], 1
    %s3806 = scalar_lea.sflag [#allocation4], 1
    %3807 = vsyncpa %s3806, 1
    %3808 = vsyncpa [#allocation7], 1
    %3809 = vsyncpa [#allocation10], 1
    %3810 = vsyncpa [#allocation5], 1
    %s3811 = scalar_lea.sflag [#allocation5], 1
    %3812 = vsyncpa %s3811, 1

</llo_original>
